<compile_context>
chip_gen: v7x
topology: tpu7x:2x2x1
jax: 0.10.0
libtpu: 0.0.40
codegen_flags: <defaults>
</compile_context>

<pallas_src>
import functools

import jax
import jax.numpy as jnp
from jax import lax
from jax.experimental import pallas as pl
from jax.experimental.pallas import tpu as pltpu

# Full-f32 matmul accuracy for BOTH the kernel dots and the pure-JAX reference,
# so the parity check below is meaningful and generation-independent.
jax.config.update("jax_default_matmul_precision", "highest")

# ---------------- model hyperparameters (from the PyTorch module) ------------
INPUT_DIM = 6      # vehicle-state feature dim (fixed in build_encoder)
D_MODEL   = 32     # d_model / GRU hidden size
NLAYERS   = 2      # GRU layers
LN_EPS    = 1e-5   # torch.nn.LayerNorm default eps


# Packed lane layout used everywhere below (8 blocks of H lanes, 8H = 256 total):
#   [ r0 | r1 | z0 | z1 | nA0 | nA1 | nB0 | nB1 ]
#     r/z : full gate pre-activations (all biases folded in)
#     nA  : additive part of the n gate          (gi_n + b_in)
#     nB  : part multiplied by the reset gate r  (gh_n + b_hn)
#     suffix 0 = GRU layer 0, suffix 1 = GRU layer 1
def _residual_gru_kernel(
    x_ref,                         # [T*B, F] VMEM, time-major flattening of [T, B, F]
    wih0p_ref,                     # [F, 8H]  hoisted layer-0 input weights (packed lanes)
    b0p_ref,                       # [1, 8H]  packed biases (both layers)
    wbig_ref,                      # [2H, 8H] fused recurrent weights (rows 0:H->h0, H:2H->h1)
    w1ep_ref,                      # [2H, 4H] layer-1-only weights for the last-step epilogue
    b1ep_ref,                      # [1, 4H]
    gamma_ref, beta_ref,           # [1, H]   LayerNorm affine
    wreg_ref,                      # [1, H]   regressor weight row
    scal_ref,                      # SMEM (3,) = (reg_bias, y_std, y_mean)
    out_ref,                       # [B, 1]
    *, batch, seq_len,
):
    B, T, H = batch, seq_len, D_MODEL
    H2, H3, H4, H6, H8 = 2 * H, 3 * H, 4 * H, 6 * H, 8 * H

    # ---- hoisted layer-0 input projection: ONE [T*B, F] @ [F, 8H] matmul -------
    x = x_ref[...]
    gi0 = (jnp.dot(x, wih0p_ref[...], preferred_element_type=jnp.float32)
           + b0p_ref[...])                                            # [T*B, 8H]

    def packed_step(g, h01):
        """One staggered GRU step for BOTH layers from packed pre-activations g."""
        rz = jax.nn.sigmoid(g[:, :H4])              # one EUP batch over 128 lanes
        r01 = rz[:, :H2]
        z01 = rz[:, H2:H4]
        n01 = jnp.tanh(g[:, H4:H6] + r01 * g[:, H6:H8])
        return (1.0 - z01) * n01 + z01 * h01        # packed [h0 | h1] update

    # ---- t = 0 prologue: carries are zero, so the recurrent matmul is skipped --
    h01 = packed_step(gi0[0:B, :], jnp.zeros((B, H2), jnp.float32))
    lane = lax.broadcasted_iota(jnp.int32, (B, H2), 1)
    h01 = jnp.where(lane < H, h01, 0.0)   # keep h0_0, reset layer-1 half to h1_init=0

    # ---- staggered recurrence: iteration t yields (h0_t, h1_{t-1}) -------------
    # Single fused MXU push per timestep; weight ref indexed at each use so no
    # vregs stay pinned across the fully unrolled (static, small T) loop.
    for t in range(1, T):
        g = gi0[t * B:(t + 1) * B, :] + jnp.dot(
            h01, wbig_ref[...], preferred_element_type=jnp.float32)   # [B, 8H]
        h01 = packed_step(g, h01)

    # ---- epilogue: layer-1 step for the last timestep -> h1_{T-1} --------------
    g = (jnp.dot(h01, w1ep_ref[...], preferred_element_type=jnp.float32)
         + b1ep_ref[...])                                             # [B, 4H]
    rz = jax.nn.sigmoid(g[:, :H2])
    r1 = rz[:, :H]
    z1 = rz[:, H:H2]
    n1 = jnp.tanh(g[:, H2:H3] + r1 * g[:, H3:H4])
    h1 = (1.0 - z1) * n1 + z1 * h01[:, H:H2]                          # [B, H]

    # ---- final LayerNorm (biased variance, torch.nn.LayerNorm defaults) --------
    mean = jnp.mean(h1, axis=-1, keepdims=True)
    cen = h1 - mean
    var = jnp.mean(cen * cen, axis=-1, keepdims=True)
    zed = cen * lax.rsqrt(var + LN_EPS) * gamma_ref[...] + beta_ref[...]   # [B, H]

    # ---- regressor Linear(H, 1) on VPU + lane reduce, then un-normalization ----
    reg_b = scal_ref[0]
    y_std = scal_ref[1]
    y_mean = scal_ref[2]
    pred_norm = jnp.sum(zed * wreg_ref[...], axis=-1, keepdims=True) + reg_b
    out_ref[...] = pred_norm * y_std + y_mean


@jax.jit
def residual_model_linear_forward(x, kp):
    """x: [B, T, INPUT_DIM] float32, kp: kernel-layout params -> [B, 1] float32."""
    B, T, F = x.shape
    # Time-major so each timestep is a contiguous static row slice inside the kernel.
    x_tm = jnp.transpose(x, (1, 0, 2)).reshape(T * B, F)

    vmem = pl.BlockSpec(memory_space=pltpu.MemorySpace.VMEM)
    smem = pl.BlockSpec(memory_space=pltpu.MemorySpace.SMEM)

    inputs = (
        x_tm,
        kp["wih0p"], kp["b0p"], kp["wbig"], kp["w1ep"], kp["b1ep"],
        kp["ln_gamma"], kp["ln_beta"], kp["wreg_row"],
        kp["scal"],
    )
    in_specs = [vmem] * (len(inputs) - 1) + [smem]

    return pl.pallas_call(
        functools.partial(_residual_gru_kernel, batch=B, seq_len=T),
        out_shape=jax.ShapeDtypeStruct((B, 1), jnp.float32),
        in_specs=in_specs,
        out_specs=vmem,
    )(*inputs)


# ---------------- deterministic parameter construction -----------------------
def make_params(key, y_mean=0.5, y_std=2.0):
    """PyTorch-convention GRU / LayerNorm / Linear parameters."""
    H, F = D_MODEL, INPUT_DIM
    k = 1.0 / jnp.sqrt(jnp.float32(H))
    keys = jax.random.split(key, 10)

    def u(k_, shape):
        return jax.random.uniform(k_, shape, jnp.float32, minval=-k, maxval=k)

    # PyTorch GRU shapes: weight_ih_l0 [3H, F], weight_hh_l0 [3H, H], biases [3H]
    wih0 = u(keys[0], (3 * H, F))
    whh0 = u(keys[1], (3 * H, H))
    bih0 = u(keys[2], (3 * H,))
    bhh0 = u(keys[3], (3 * H,))
    wih1 = u(keys[4], (3 * H, H))
    whh1 = u(keys[5], (3 * H, H))
    bih1 = u(keys[6], (3 * H,))
    bhh1 = u(keys[7], (3 * H,))
    ln_gamma = jnp.ones((1, H), jnp.float32)
    ln_beta = jnp.zeros((1, H), jnp.float32)
    wreg = jax.random.uniform(keys[8], (1, H), jnp.float32, minval=-k, maxval=k)
    breg = jax.random.uniform(keys[9], (), jnp.float32, minval=-k, maxval=k)

    return dict(wih0=wih0, whh0=whh0, bih0=bih0, bhh0=bhh0,
                wih1=wih1, whh1=whh1, bih1=bih1, bhh1=bhh1,
                ln_gamma=ln_gamma, ln_beta=ln_beta,
                wreg=wreg, reg_b=breg,
                y_mean=jnp.float32(y_mean), y_std=jnp.float32(y_std))


def prepare_kernel_params(p):
    """One-time conversion to the kernel's packed, fused, pre-transposed layout."""
    H, F = D_MODEL, INPUT_DIM

    def gate_w(w):                      # [3H, K] -> (wr, wz, wn) each [K, H]
        return w[0:H].T, w[H:2 * H].T, w[2 * H:3 * H].T

    def gate_b(b):                      # [3H] -> (br, bz, bn) each [H]
        return b[0:H], b[H:2 * H], b[2 * H:3 * H]

    wih0_r, wih0_z, wih0_n = gate_w(p["wih0"])   # [F, H] each
    whh0_r, whh0_z, whh0_n = gate_w(p["whh0"])   # [H, H] each
    wih1_r, wih1_z, wih1_n = gate_w(p["wih1"])
    whh1_r, whh1_z, whh1_n = gate_w(p["whh1"])
    bir0, biz0, bin0 = gate_b(p["bih0"])
    bhr0, bhz0, bhn0 = gate_b(p["bhh0"])
    bir1, biz1, bin1 = gate_b(p["bih1"])
    bhr1, bhz1, bhn1 = gate_b(p["bhh1"])

    zF = jnp.zeros((F, H), jnp.float32)
    zH = jnp.zeros((H, H), jnp.float32)

    # Hoisted input projection, packed lanes [ r0 | r1 | z0 | z1 | nA0 | nA1 | nB0 | nB1 ]
    wih0p = jnp.concatenate(
        [wih0_r, zF, wih0_z, zF, wih0_n, zF, zF, zF], axis=1)            # [F, 8H]
    b0p = jnp.concatenate(
        [bir0 + bhr0, bir1 + bhr1, biz0 + bhz0, biz1 + bhz1,
         bin0, bin1, bhn0, bhn1], axis=0)[None, :]                        # [1, 8H]

    # Fused recurrent weights: rows 0:H multiply h0, rows H:2H multiply h1.
    wbig_top = jnp.concatenate(
        [whh0_r, wih1_r, whh0_z, wih1_z, zH, wih1_n, whh0_n, zH], axis=1)  # [H, 8H]
    wbig_bot = jnp.concatenate(
        [zH, whh1_r, zH, whh1_z, zH, zH, zH, whh1_n], axis=1)              # [H, 8H]
    wbig = jnp.concatenate([wbig_top, wbig_bot], axis=0)                   # [2H, 8H]

    # Epilogue (layer-1 only) weights, lanes [ r1 | z1 | nA1 | nB1 ]
    w1ep_top = jnp.concatenate([wih1_r, wih1_z, wih1_n, zH], axis=1)       # [H, 4H]
    w1ep_bot = jnp.concatenate([whh1_r, whh1_z, zH, whh1_n], axis=1)       # [H, 4H]
    w1ep = jnp.concatenate([w1ep_top, w1ep_bot], axis=0)                   # [2H, 4H]
    b1ep = jnp.concatenate(
        [bir1 + bhr1, biz1 + bhz1, bin1, bhn1], axis=0)[None, :]           # [1, 4H]

    return dict(
        wih0p=wih0p, b0p=b0p, wbig=wbig, w1ep=w1ep, b1ep=b1ep,
        ln_gamma=p["ln_gamma"], ln_beta=p["ln_beta"],
        wreg_row=p["wreg"],
        scal=jnp.stack([p["reg_b"], p["y_std"], p["y_mean"]]).astype(jnp.float32),  # (3,)
    )


# ---------------- pure-JAX reference (PyTorch semantics) ----------------------
def reference_forward(x, p):
    B, T, F = x.shape
    H = D_MODEL

    def cell(x_t, h, wih, whh, bih, bhh):
        gi = x_t @ wih.T + bih
        gh = h @ whh.T + bhh
        i_r, i_z, i_n = gi[:, :H], gi[:, H:2 * H], gi[:, 2 * H:]
        h_r, h_z, h_n = gh[:, :H], gh[:, H:2 * H], gh[:, 2 * H:]
        r = jax.nn.sigmoid(i_r + h_r)
        z = jax.nn.sigmoid(i_z + h_z)
        n = jnp.tanh(i_n + r * h_n)
        return (1 - z) * n + z * h

    h0 = jnp.zeros((B, H), jnp.float32)
    h1 = jnp.zeros((B, H), jnp.float32)
    for t in range(T):
        h0 = cell(x[:, t, :], h0, p["wih0"], p["whh0"], p["bih0"], p["bhh0"])
        h1 = cell(h0, h1, p["wih1"], p["whh1"], p["bih1"], p["bhh1"])
    mean = h1.mean(-1, keepdims=True)
    var = ((h1 - mean) ** 2).mean(-1, keepdims=True)
    z = (h1 - mean) / jnp.sqrt(var + LN_EPS) * p["ln_gamma"] + p["ln_beta"]
    pred_norm = z @ p["wreg"].T + p["reg_b"]
    return pred_norm * p["y_std"] + p["y_mean"]


if __name__ == "__main__":
    key = jax.random.PRNGKey(0)
    kx, kpk = jax.random.split(key)

    B, T = 2, 8                                   # batch=2, seq=8
    x = jax.random.normal(kx, (B, T, INPUT_DIM), jnp.float32)
    params = make_params(kpk, y_mean=0.5, y_std=2.0)
    kparams = prepare_kernel_params(params)

    out = residual_model_linear_forward(x, kparams)
    out = jax.block_until_ready(out)

    ref = reference_forward(x, params)
    assert out.shape == (B, 1)
    assert jnp.allclose(out, ref, rtol=1e-3, atol=1e-3), (out, ref)

    print("KERNEL_OK")
</pallas_src>

<mosaic_0001>
module attributes {stable_mosaic.version = 11 : i64} {
  func.func @_residual_gru_kernel(%arg0: memref<16x6xf32, #tpu.memory_space<vmem>>, %arg1: memref<6x256xf32, #tpu.memory_space<vmem>>, %arg2: memref<1x256xf32, #tpu.memory_space<vmem>>, %arg3: memref<64x256xf32, #tpu.memory_space<vmem>>, %arg4: memref<64x128xf32, #tpu.memory_space<vmem>>, %arg5: memref<1x128xf32, #tpu.memory_space<vmem>>, %arg6: memref<1x32xf32, #tpu.memory_space<vmem>>, %arg7: memref<1x32xf32, #tpu.memory_space<vmem>>, %arg8: memref<1x32xf32, #tpu.memory_space<vmem>>, %arg9: memref<3xf32, #tpu.memory_space<smem>>, %arg10: memref<2x1xf32, #tpu.memory_space<vmem>>) attributes {dimension_semantics = [], scalar_prefetch = 0 : i64, scratch_operands = 0 : i64, tpu.core_type = #tpu.core_type<tc>} {
    %c0 = arith.constant 0 : index
    %c0_0 = arith.constant 0 : index
    %0 = vector.load %arg0[%c0, %c0_0] : memref<16x6xf32, #tpu.memory_space<vmem>>, vector<16x6xf32>
    %c0_1 = arith.constant 0 : index
    %c0_2 = arith.constant 0 : index
    %1 = vector.load %arg1[%c0_1, %c0_2] : memref<6x256xf32, #tpu.memory_space<vmem>>, vector<6x256xf32>
    %cst = arith.constant dense<0.000000e+00> : vector<16x256xf32>
    %2 = tpu.matmul %0, %1, %cst {dimension_numbers = #tpu.dot_dimension_numbers<[1], [0], [0], [1], [0, 0, 1, 1], [], []>, precision = #tpu.contract_precision<fp32>} : vector<16x6xf32>, vector<6x256xf32>, vector<16x256xf32> -> vector<16x256xf32>
    %c0_3 = arith.constant 0 : index
    %c0_4 = arith.constant 0 : index
    %3 = vector.load %arg2[%c0_3, %c0_4] : memref<1x256xf32, #tpu.memory_space<vmem>>, vector<1x256xf32>
    %4 = vector.broadcast %3 : vector<1x256xf32> to vector<16x256xf32>
    %5 = arith.addf %2, %4 : vector<16x256xf32>
    %6 = vector.extract_strided_slice %5 {offsets = [0, 0], sizes = [2, 256], strides = [1, 1]} : vector<16x256xf32> to vector<2x256xf32>
    %cst_5 = arith.constant 0.000000e+00 : f32
    %7 = vector.broadcast %cst_5 : f32 to vector<2x64xf32>
    %8 = vector.extract_strided_slice %6 {offsets = [0, 0], sizes = [2, 128], strides = [1, 1]} : vector<2x256xf32> to vector<2x128xf32>
    %9 = arith.negf %8 : vector<2x128xf32>
    %10 = math.exp %9 : vector<2x128xf32>
    %cst_6 = arith.constant 1.000000e+00 : f32
    %11 = vector.broadcast %cst_6 : f32 to vector<2x128xf32>
    %12 = arith.addf %11, %10 : vector<2x128xf32>
    %13 = arith.divf %11, %12 : vector<2x128xf32>
    %14 = vector.extract_strided_slice %13 {offsets = [0, 0], sizes = [2, 64], strides = [1, 1]} : vector<2x128xf32> to vector<2x64xf32>
    %15 = vector.extract_strided_slice %13 {offsets = [0, 64], sizes = [2, 64], strides = [1, 1]} : vector<2x128xf32> to vector<2x64xf32>
    %16 = vector.extract_strided_slice %6 {offsets = [0, 128], sizes = [2, 64], strides = [1, 1]} : vector<2x256xf32> to vector<2x64xf32>
    %17 = vector.extract_strided_slice %6 {offsets = [0, 192], sizes = [2, 64], strides = [1, 1]} : vector<2x256xf32> to vector<2x64xf32>
    %18 = arith.mulf %14, %17 : vector<2x64xf32>
    %19 = arith.addf %16, %18 : vector<2x64xf32>
    %20 = math.tanh %19 : vector<2x64xf32>
    %cst_7 = arith.constant 1.000000e+00 : f32
    %21 = vector.broadcast %cst_7 : f32 to vector<2x64xf32>
    %22 = arith.subf %21, %15 : vector<2x64xf32>
    %23 = arith.mulf %22, %20 : vector<2x64xf32>
    %24 = arith.mulf %15, %7 : vector<2x64xf32>
    %25 = arith.addf %23, %24 : vector<2x64xf32>
    %26 = tpu.iota {dimensions = array<i32: 1>} : vector<2x64xi32>
    %c32_i32 = arith.constant 32 : i32
    %27 = vector.broadcast %c32_i32 : i32 to vector<2x64xi32>
    %28 = arith.cmpi slt, %26, %27 : vector<2x64xi32>
    %cst_8 = arith.constant 0.000000e+00 : f32
    %29 = vector.broadcast %cst_8 : f32 to vector<2x64xf32>
    %30 = arith.select %28, %25, %29 : vector<2x64xi1>, vector<2x64xf32>
    %31 = vector.extract_strided_slice %5 {offsets = [2, 0], sizes = [2, 256], strides = [1, 1]} : vector<16x256xf32> to vector<2x256xf32>
    %c0_9 = arith.constant 0 : index
    %c0_10 = arith.constant 0 : index
    %32 = vector.load %arg3[%c0_9, %c0_10] : memref<64x256xf32, #tpu.memory_space<vmem>>, vector<64x256xf32>
    %cst_11 = arith.constant dense<0.000000e+00> : vector<2x256xf32>
    %33 = tpu.matmul %30, %32, %cst_11 {dimension_numbers = #tpu.dot_dimension_numbers<[1], [0], [0], [1], [0, 0, 1, 1], [], []>, precision = #tpu.contract_precision<fp32>} : vector<2x64xf32>, vector<64x256xf32>, vector<2x256xf32> -> vector<2x256xf32>
    %34 = arith.addf %31, %33 : vector<2x256xf32>
    %35 = vector.extract_strided_slice %34 {offsets = [0, 0], sizes = [2, 128], strides = [1, 1]} : vector<2x256xf32> to vector<2x128xf32>
    %36 = arith.negf %35 : vector<2x128xf32>
    %37 = math.exp %36 : vector<2x128xf32>
    %cst_12 = arith.constant 1.000000e+00 : f32
    %38 = vector.broadcast %cst_12 : f32 to vector<2x128xf32>
    %39 = arith.addf %38, %37 : vector<2x128xf32>
    %40 = arith.divf %38, %39 : vector<2x128xf32>
    %41 = vector.extract_strided_slice %40 {offsets = [0, 0], sizes = [2, 64], strides = [1, 1]} : vector<2x128xf32> to vector<2x64xf32>
    %42 = vector.extract_strided_slice %40 {offsets = [0, 64], sizes = [2, 64], strides = [1, 1]} : vector<2x128xf32> to vector<2x64xf32>
    %43 = vector.extract_strided_slice %34 {offsets = [0, 128], sizes = [2, 64], strides = [1, 1]} : vector<2x256xf32> to vector<2x64xf32>
    %44 = vector.extract_strided_slice %34 {offsets = [0, 192], sizes = [2, 64], strides = [1, 1]} : vector<2x256xf32> to vector<2x64xf32>
    %45 = arith.mulf %41, %44 : vector<2x64xf32>
    %46 = arith.addf %43, %45 : vector<2x64xf32>
    %47 = math.tanh %46 : vector<2x64xf32>
    %cst_13 = arith.constant 1.000000e+00 : f32
    %48 = vector.broadcast %cst_13 : f32 to vector<2x64xf32>
    %49 = arith.subf %48, %42 : vector<2x64xf32>
    %50 = arith.mulf %49, %47 : vector<2x64xf32>
    %51 = arith.mulf %42, %30 : vector<2x64xf32>
    %52 = arith.addf %50, %51 : vector<2x64xf32>
    %53 = vector.extract_strided_slice %5 {offsets = [4, 0], sizes = [2, 256], strides = [1, 1]} : vector<16x256xf32> to vector<2x256xf32>
    %c0_14 = arith.constant 0 : index
    %c0_15 = arith.constant 0 : index
    %54 = vector.load %arg3[%c0_14, %c0_15] : memref<64x256xf32, #tpu.memory_space<vmem>>, vector<64x256xf32>
    %cst_16 = arith.constant dense<0.000000e+00> : vector<2x256xf32>
    %55 = tpu.matmul %52, %54, %cst_16 {dimension_numbers = #tpu.dot_dimension_numbers<[1], [0], [0], [1], [0, 0, 1, 1], [], []>, precision = #tpu.contract_precision<fp32>} : vector<2x64xf32>, vector<64x256xf32>, vector<2x256xf32> -> vector<2x256xf32>
    %56 = arith.addf %53, %55 : vector<2x256xf32>
    %57 = vector.extract_strided_slice %56 {offsets = [0, 0], sizes = [2, 128], strides = [1, 1]} : vector<2x256xf32> to vector<2x128xf32>
    %58 = arith.negf %57 : vector<2x128xf32>
    %59 = math.exp %58 : vector<2x128xf32>
    %cst_17 = arith.constant 1.000000e+00 : f32
    %60 = vector.broadcast %cst_17 : f32 to vector<2x128xf32>
    %61 = arith.addf %60, %59 : vector<2x128xf32>
    %62 = arith.divf %60, %61 : vector<2x128xf32>
    %63 = vector.extract_strided_slice %62 {offsets = [0, 0], sizes = [2, 64], strides = [1, 1]} : vector<2x128xf32> to vector<2x64xf32>
    %64 = vector.extract_strided_slice %62 {offsets = [0, 64], sizes = [2, 64], strides = [1, 1]} : vector<2x128xf32> to vector<2x64xf32>
    %65 = vector.extract_strided_slice %56 {offsets = [0, 128], sizes = [2, 64], strides = [1, 1]} : vector<2x256xf32> to vector<2x64xf32>
    %66 = vector.extract_strided_slice %56 {offsets = [0, 192], sizes = [2, 64], strides = [1, 1]} : vector<2x256xf32> to vector<2x64xf32>
    %67 = arith.mulf %63, %66 : vector<2x64xf32>
    %68 = arith.addf %65, %67 : vector<2x64xf32>
    %69 = math.tanh %68 : vector<2x64xf32>
    %cst_18 = arith.constant 1.000000e+00 : f32
    %70 = vector.broadcast %cst_18 : f32 to vector<2x64xf32>
    %71 = arith.subf %70, %64 : vector<2x64xf32>
    %72 = arith.mulf %71, %69 : vector<2x64xf32>
    %73 = arith.mulf %64, %52 : vector<2x64xf32>
    %74 = arith.addf %72, %73 : vector<2x64xf32>
    %75 = vector.extract_strided_slice %5 {offsets = [6, 0], sizes = [2, 256], strides = [1, 1]} : vector<16x256xf32> to vector<2x256xf32>
    %c0_19 = arith.constant 0 : index
    %c0_20 = arith.constant 0 : index
    %76 = vector.load %arg3[%c0_19, %c0_20] : memref<64x256xf32, #tpu.memory_space<vmem>>, vector<64x256xf32>
    %cst_21 = arith.constant dense<0.000000e+00> : vector<2x256xf32>
    %77 = tpu.matmul %74, %76, %cst_21 {dimension_numbers = #tpu.dot_dimension_numbers<[1], [0], [0], [1], [0, 0, 1, 1], [], []>, precision = #tpu.contract_precision<fp32>} : vector<2x64xf32>, vector<64x256xf32>, vector<2x256xf32> -> vector<2x256xf32>
    %78 = arith.addf %75, %77 : vector<2x256xf32>
    %79 = vector.extract_strided_slice %78 {offsets = [0, 0], sizes = [2, 128], strides = [1, 1]} : vector<2x256xf32> to vector<2x128xf32>
    %80 = arith.negf %79 : vector<2x128xf32>
    %81 = math.exp %80 : vector<2x128xf32>
    %cst_22 = arith.constant 1.000000e+00 : f32
    %82 = vector.broadcast %cst_22 : f32 to vector<2x128xf32>
    %83 = arith.addf %82, %81 : vector<2x128xf32>
    %84 = arith.divf %82, %83 : vector<2x128xf32>
    %85 = vector.extract_strided_slice %84 {offsets = [0, 0], sizes = [2, 64], strides = [1, 1]} : vector<2x128xf32> to vector<2x64xf32>
    %86 = vector.extract_strided_slice %84 {offsets = [0, 64], sizes = [2, 64], strides = [1, 1]} : vector<2x128xf32> to vector<2x64xf32>
    %87 = vector.extract_strided_slice %78 {offsets = [0, 128], sizes = [2, 64], strides = [1, 1]} : vector<2x256xf32> to vector<2x64xf32>
    %88 = vector.extract_strided_slice %78 {offsets = [0, 192], sizes = [2, 64], strides = [1, 1]} : vector<2x256xf32> to vector<2x64xf32>
    %89 = arith.mulf %85, %88 : vector<2x64xf32>
    %90 = arith.addf %87, %89 : vector<2x64xf32>
    %91 = math.tanh %90 : vector<2x64xf32>
    %cst_23 = arith.constant 1.000000e+00 : f32
    %92 = vector.broadcast %cst_23 : f32 to vector<2x64xf32>
    %93 = arith.subf %92, %86 : vector<2x64xf32>
    %94 = arith.mulf %93, %91 : vector<2x64xf32>
    %95 = arith.mulf %86, %74 : vector<2x64xf32>
    %96 = arith.addf %94, %95 : vector<2x64xf32>
    %97 = vector.extract_strided_slice %5 {offsets = [8, 0], sizes = [2, 256], strides = [1, 1]} : vector<16x256xf32> to vector<2x256xf32>
    %c0_24 = arith.constant 0 : index
    %c0_25 = arith.constant 0 : index
    %98 = vector.load %arg3[%c0_24, %c0_25] : memref<64x256xf32, #tpu.memory_space<vmem>>, vector<64x256xf32>
    %cst_26 = arith.constant dense<0.000000e+00> : vector<2x256xf32>
    %99 = tpu.matmul %96, %98, %cst_26 {dimension_numbers = #tpu.dot_dimension_numbers<[1], [0], [0], [1], [0, 0, 1, 1], [], []>, precision = #tpu.contract_precision<fp32>} : vector<2x64xf32>, vector<64x256xf32>, vector<2x256xf32> -> vector<2x256xf32>
    %100 = arith.addf %97, %99 : vector<2x256xf32>
    %101 = vector.extract_strided_slice %100 {offsets = [0, 0], sizes = [2, 128], strides = [1, 1]} : vector<2x256xf32> to vector<2x128xf32>
    %102 = arith.negf %101 : vector<2x128xf32>
    %103 = math.exp %102 : vector<2x128xf32>
    %cst_27 = arith.constant 1.000000e+00 : f32
    %104 = vector.broadcast %cst_27 : f32 to vector<2x128xf32>
    %105 = arith.addf %104, %103 : vector<2x128xf32>
    %106 = arith.divf %104, %105 : vector<2x128xf32>
    %107 = vector.extract_strided_slice %106 {offsets = [0, 0], sizes = [2, 64], strides = [1, 1]} : vector<2x128xf32> to vector<2x64xf32>
    %108 = vector.extract_strided_slice %106 {offsets = [0, 64], sizes = [2, 64], strides = [1, 1]} : vector<2x128xf32> to vector<2x64xf32>
    %109 = vector.extract_strided_slice %100 {offsets = [0, 128], sizes = [2, 64], strides = [1, 1]} : vector<2x256xf32> to vector<2x64xf32>
    %110 = vector.extract_strided_slice %100 {offsets = [0, 192], sizes = [2, 64], strides = [1, 1]} : vector<2x256xf32> to vector<2x64xf32>
    %111 = arith.mulf %107, %110 : vector<2x64xf32>
    %112 = arith.addf %109, %111 : vector<2x64xf32>
    %113 = math.tanh %112 : vector<2x64xf32>
    %cst_28 = arith.constant 1.000000e+00 : f32
    %114 = vector.broadcast %cst_28 : f32 to vector<2x64xf32>
    %115 = arith.subf %114, %108 : vector<2x64xf32>
    %116 = arith.mulf %115, %113 : vector<2x64xf32>
    %117 = arith.mulf %108, %96 : vector<2x64xf32>
    %118 = arith.addf %116, %117 : vector<2x64xf32>
    %119 = vector.extract_strided_slice %5 {offsets = [10, 0], sizes = [2, 256], strides = [1, 1]} : vector<16x256xf32> to vector<2x256xf32>
    %c0_29 = arith.constant 0 : index
    %c0_30 = arith.constant 0 : index
    %120 = vector.load %arg3[%c0_29, %c0_30] : memref<64x256xf32, #tpu.memory_space<vmem>>, vector<64x256xf32>
    %cst_31 = arith.constant dense<0.000000e+00> : vector<2x256xf32>
    %121 = tpu.matmul %118, %120, %cst_31 {dimension_numbers = #tpu.dot_dimension_numbers<[1], [0], [0], [1], [0, 0, 1, 1], [], []>, precision = #tpu.contract_precision<fp32>} : vector<2x64xf32>, vector<64x256xf32>, vector<2x256xf32> -> vector<2x256xf32>
    %122 = arith.addf %119, %121 : vector<2x256xf32>
    %123 = vector.extract_strided_slice %122 {offsets = [0, 0], sizes = [2, 128], strides = [1, 1]} : vector<2x256xf32> to vector<2x128xf32>
    %124 = arith.negf %123 : vector<2x128xf32>
    %125 = math.exp %124 : vector<2x128xf32>
    %cst_32 = arith.constant 1.000000e+00 : f32
    %126 = vector.broadcast %cst_32 : f32 to vector<2x128xf32>
    %127 = arith.addf %126, %125 : vector<2x128xf32>
    %128 = arith.divf %126, %127 : vector<2x128xf32>
    %129 = vector.extract_strided_slice %128 {offsets = [0, 0], sizes = [2, 64], strides = [1, 1]} : vector<2x128xf32> to vector<2x64xf32>
    %130 = vector.extract_strided_slice %128 {offsets = [0, 64], sizes = [2, 64], strides = [1, 1]} : vector<2x128xf32> to vector<2x64xf32>
    %131 = vector.extract_strided_slice %122 {offsets = [0, 128], sizes = [2, 64], strides = [1, 1]} : vector<2x256xf32> to vector<2x64xf32>
    %132 = vector.extract_strided_slice %122 {offsets = [0, 192], sizes = [2, 64], strides = [1, 1]} : vector<2x256xf32> to vector<2x64xf32>
    %133 = arith.mulf %129, %132 : vector<2x64xf32>
    %134 = arith.addf %131, %133 : vector<2x64xf32>
    %135 = math.tanh %134 : vector<2x64xf32>
    %cst_33 = arith.constant 1.000000e+00 : f32
    %136 = vector.broadcast %cst_33 : f32 to vector<2x64xf32>
    %137 = arith.subf %136, %130 : vector<2x64xf32>
    %138 = arith.mulf %137, %135 : vector<2x64xf32>
    %139 = arith.mulf %130, %118 : vector<2x64xf32>
    %140 = arith.addf %138, %139 : vector<2x64xf32>
    %141 = vector.extract_strided_slice %5 {offsets = [12, 0], sizes = [2, 256], strides = [1, 1]} : vector<16x256xf32> to vector<2x256xf32>
    %c0_34 = arith.constant 0 : index
    %c0_35 = arith.constant 0 : index
    %142 = vector.load %arg3[%c0_34, %c0_35] : memref<64x256xf32, #tpu.memory_space<vmem>>, vector<64x256xf32>
    %cst_36 = arith.constant dense<0.000000e+00> : vector<2x256xf32>
    %143 = tpu.matmul %140, %142, %cst_36 {dimension_numbers = #tpu.dot_dimension_numbers<[1], [0], [0], [1], [0, 0, 1, 1], [], []>, precision = #tpu.contract_precision<fp32>} : vector<2x64xf32>, vector<64x256xf32>, vector<2x256xf32> -> vector<2x256xf32>
    %144 = arith.addf %141, %143 : vector<2x256xf32>
    %145 = vector.extract_strided_slice %144 {offsets = [0, 0], sizes = [2, 128], strides = [1, 1]} : vector<2x256xf32> to vector<2x128xf32>
    %146 = arith.negf %145 : vector<2x128xf32>
    %147 = math.exp %146 : vector<2x128xf32>
    %cst_37 = arith.constant 1.000000e+00 : f32
    %148 = vector.broadcast %cst_37 : f32 to vector<2x128xf32>
    %149 = arith.addf %148, %147 : vector<2x128xf32>
    %150 = arith.divf %148, %149 : vector<2x128xf32>
    %151 = vector.extract_strided_slice %150 {offsets = [0, 0], sizes = [2, 64], strides = [1, 1]} : vector<2x128xf32> to vector<2x64xf32>
    %152 = vector.extract_strided_slice %150 {offsets = [0, 64], sizes = [2, 64], strides = [1, 1]} : vector<2x128xf32> to vector<2x64xf32>
    %153 = vector.extract_strided_slice %144 {offsets = [0, 128], sizes = [2, 64], strides = [1, 1]} : vector<2x256xf32> to vector<2x64xf32>
    %154 = vector.extract_strided_slice %144 {offsets = [0, 192], sizes = [2, 64], strides = [1, 1]} : vector<2x256xf32> to vector<2x64xf32>
    %155 = arith.mulf %151, %154 : vector<2x64xf32>
    %156 = arith.addf %153, %155 : vector<2x64xf32>
    %157 = math.tanh %156 : vector<2x64xf32>
    %cst_38 = arith.constant 1.000000e+00 : f32
    %158 = vector.broadcast %cst_38 : f32 to vector<2x64xf32>
    %159 = arith.subf %158, %152 : vector<2x64xf32>
    %160 = arith.mulf %159, %157 : vector<2x64xf32>
    %161 = arith.mulf %152, %140 : vector<2x64xf32>
    %162 = arith.addf %160, %161 : vector<2x64xf32>
    %163 = vector.extract_strided_slice %5 {offsets = [14, 0], sizes = [2, 256], strides = [1, 1]} : vector<16x256xf32> to vector<2x256xf32>
    %c0_39 = arith.constant 0 : index
    %c0_40 = arith.constant 0 : index
    %164 = vector.load %arg3[%c0_39, %c0_40] : memref<64x256xf32, #tpu.memory_space<vmem>>, vector<64x256xf32>
    %cst_41 = arith.constant dense<0.000000e+00> : vector<2x256xf32>
    %165 = tpu.matmul %162, %164, %cst_41 {dimension_numbers = #tpu.dot_dimension_numbers<[1], [0], [0], [1], [0, 0, 1, 1], [], []>, precision = #tpu.contract_precision<fp32>} : vector<2x64xf32>, vector<64x256xf32>, vector<2x256xf32> -> vector<2x256xf32>
    %166 = arith.addf %163, %165 : vector<2x256xf32>
    %167 = vector.extract_strided_slice %166 {offsets = [0, 0], sizes = [2, 128], strides = [1, 1]} : vector<2x256xf32> to vector<2x128xf32>
    %168 = arith.negf %167 : vector<2x128xf32>
    %169 = math.exp %168 : vector<2x128xf32>
    %cst_42 = arith.constant 1.000000e+00 : f32
    %170 = vector.broadcast %cst_42 : f32 to vector<2x128xf32>
    %171 = arith.addf %170, %169 : vector<2x128xf32>
    %172 = arith.divf %170, %171 : vector<2x128xf32>
    %173 = vector.extract_strided_slice %172 {offsets = [0, 0], sizes = [2, 64], strides = [1, 1]} : vector<2x128xf32> to vector<2x64xf32>
    %174 = vector.extract_strided_slice %172 {offsets = [0, 64], sizes = [2, 64], strides = [1, 1]} : vector<2x128xf32> to vector<2x64xf32>
    %175 = vector.extract_strided_slice %166 {offsets = [0, 128], sizes = [2, 64], strides = [1, 1]} : vector<2x256xf32> to vector<2x64xf32>
    %176 = vector.extract_strided_slice %166 {offsets = [0, 192], sizes = [2, 64], strides = [1, 1]} : vector<2x256xf32> to vector<2x64xf32>
    %177 = arith.mulf %173, %176 : vector<2x64xf32>
    %178 = arith.addf %175, %177 : vector<2x64xf32>
    %179 = math.tanh %178 : vector<2x64xf32>
    %cst_43 = arith.constant 1.000000e+00 : f32
    %180 = vector.broadcast %cst_43 : f32 to vector<2x64xf32>
    %181 = arith.subf %180, %174 : vector<2x64xf32>
    %182 = arith.mulf %181, %179 : vector<2x64xf32>
    %183 = arith.mulf %174, %162 : vector<2x64xf32>
    %184 = arith.addf %182, %183 : vector<2x64xf32>
    %c0_44 = arith.constant 0 : index
    %c0_45 = arith.constant 0 : index
    %185 = vector.load %arg4[%c0_44, %c0_45] : memref<64x128xf32, #tpu.memory_space<vmem>>, vector<64x128xf32>
    %cst_46 = arith.constant dense<0.000000e+00> : vector<2x128xf32>
    %186 = tpu.matmul %184, %185, %cst_46 {dimension_numbers = #tpu.dot_dimension_numbers<[1], [0], [0], [1], [0, 0, 1, 1], [], []>, precision = #tpu.contract_precision<fp32>} : vector<2x64xf32>, vector<64x128xf32>, vector<2x128xf32> -> vector<2x128xf32>
    %c0_47 = arith.constant 0 : index
    %c0_48 = arith.constant 0 : index
    %187 = vector.load %arg5[%c0_47, %c0_48] : memref<1x128xf32, #tpu.memory_space<vmem>>, vector<1x128xf32>
    %188 = vector.broadcast %187 : vector<1x128xf32> to vector<2x128xf32>
    %189 = arith.addf %186, %188 : vector<2x128xf32>
    %190 = vector.extract_strided_slice %189 {offsets = [0, 0], sizes = [2, 64], strides = [1, 1]} : vector<2x128xf32> to vector<2x64xf32>
    %191 = arith.negf %190 : vector<2x64xf32>
    %192 = math.exp %191 : vector<2x64xf32>
    %cst_49 = arith.constant 1.000000e+00 : f32
    %193 = vector.broadcast %cst_49 : f32 to vector<2x64xf32>
    %194 = arith.addf %193, %192 : vector<2x64xf32>
    %195 = arith.divf %193, %194 : vector<2x64xf32>
    %196 = vector.extract_strided_slice %195 {offsets = [0, 0], sizes = [2, 32], strides = [1, 1]} : vector<2x64xf32> to vector<2x32xf32>
    %197 = vector.extract_strided_slice %195 {offsets = [0, 32], sizes = [2, 32], strides = [1, 1]} : vector<2x64xf32> to vector<2x32xf32>
    %198 = vector.extract_strided_slice %189 {offsets = [0, 64], sizes = [2, 32], strides = [1, 1]} : vector<2x128xf32> to vector<2x32xf32>
    %199 = vector.extract_strided_slice %189 {offsets = [0, 96], sizes = [2, 32], strides = [1, 1]} : vector<2x128xf32> to vector<2x32xf32>
    %200 = arith.mulf %196, %199 : vector<2x32xf32>
    %201 = arith.addf %198, %200 : vector<2x32xf32>
    %202 = math.tanh %201 : vector<2x32xf32>
    %cst_50 = arith.constant 1.000000e+00 : f32
    %203 = vector.broadcast %cst_50 : f32 to vector<2x32xf32>
    %204 = arith.subf %203, %197 : vector<2x32xf32>
    %205 = arith.mulf %204, %202 : vector<2x32xf32>
    %206 = vector.extract_strided_slice %184 {offsets = [0, 32], sizes = [2, 32], strides = [1, 1]} : vector<2x64xf32> to vector<2x32xf32>
    %207 = arith.mulf %197, %206 : vector<2x32xf32>
    %208 = arith.addf %205, %207 : vector<2x32xf32>
    %cst_51 = arith.constant dense<0.000000e+00> : vector<2xf32>
    %209 = vector.multi_reduction <add>, %208, %cst_51 [1] : vector<2x32xf32> to vector<2xf32>
    %210 = vector.shape_cast %209 : vector<2xf32> to vector<2x1xf32>
    %cst_52 = arith.constant 3.200000e+01 : f32
    %211 = vector.broadcast %cst_52 : f32 to vector<2x1xf32>
    %212 = arith.divf %210, %211 : vector<2x1xf32>
    %213 = vector.broadcast %212 : vector<2x1xf32> to vector<2x32xf32>
    %214 = arith.subf %208, %213 : vector<2x32xf32>
    %215 = arith.mulf %214, %214 : vector<2x32xf32>
    %cst_53 = arith.constant dense<0.000000e+00> : vector<2xf32>
    %216 = vector.multi_reduction <add>, %215, %cst_53 [1] : vector<2x32xf32> to vector<2xf32>
    %217 = vector.shape_cast %216 : vector<2xf32> to vector<2x1xf32>
    %cst_54 = arith.constant 3.200000e+01 : f32
    %218 = vector.broadcast %cst_54 : f32 to vector<2x1xf32>
    %219 = arith.divf %217, %218 : vector<2x1xf32>
    %cst_55 = arith.constant 9.99999974E-6 : f32
    %220 = vector.broadcast %cst_55 : f32 to vector<2x1xf32>
    %221 = arith.addf %219, %220 : vector<2x1xf32>
    %222 = math.rsqrt %221 : vector<2x1xf32>
    %223 = vector.broadcast %222 : vector<2x1xf32> to vector<2x32xf32>
    %224 = arith.mulf %214, %223 : vector<2x32xf32>
    %c0_56 = arith.constant 0 : index
    %c0_57 = arith.constant 0 : index
    %225 = vector.load %arg6[%c0_56, %c0_57] : memref<1x32xf32, #tpu.memory_space<vmem>>, vector<1x32xf32>
    %226 = vector.broadcast %225 : vector<1x32xf32> to vector<2x32xf32>
    %227 = arith.mulf %224, %226 : vector<2x32xf32>
    %c0_58 = arith.constant 0 : index
    %c0_59 = arith.constant 0 : index
    %228 = vector.load %arg7[%c0_58, %c0_59] : memref<1x32xf32, #tpu.memory_space<vmem>>, vector<1x32xf32>
    %229 = vector.broadcast %228 : vector<1x32xf32> to vector<2x32xf32>
    %230 = arith.addf %227, %229 : vector<2x32xf32>
    %c0_60 = arith.constant 0 : index
    %231 = memref.load %arg9[%c0_60] : memref<3xf32, #tpu.memory_space<smem>>
    %c1 = arith.constant 1 : index
    %232 = memref.load %arg9[%c1] : memref<3xf32, #tpu.memory_space<smem>>
    %c2 = arith.constant 2 : index
    %233 = memref.load %arg9[%c2] : memref<3xf32, #tpu.memory_space<smem>>
    %c0_61 = arith.constant 0 : index
    %c0_62 = arith.constant 0 : index
    %234 = vector.load %arg8[%c0_61, %c0_62] : memref<1x32xf32, #tpu.memory_space<vmem>>, vector<1x32xf32>
    %235 = vector.broadcast %234 : vector<1x32xf32> to vector<2x32xf32>
    %236 = arith.mulf %230, %235 : vector<2x32xf32>
    %cst_63 = arith.constant dense<0.000000e+00> : vector<2xf32>
    %237 = vector.multi_reduction <add>, %236, %cst_63 [1] : vector<2x32xf32> to vector<2xf32>
    %238 = vector.shape_cast %237 : vector<2xf32> to vector<2x1xf32>
    %239 = vector.broadcast %231 : f32 to vector<2x1xf32>
    %240 = arith.addf %238, %239 : vector<2x1xf32>
    %241 = vector.broadcast %232 : f32 to vector<2x1xf32>
    %242 = arith.mulf %240, %241 : vector<2x1xf32>
    %243 = vector.broadcast %233 : f32 to vector<2x1xf32>
    %244 = arith.addf %242, %243 : vector<2x1xf32>
    %c0_64 = arith.constant 0 : index
    %c0_65 = arith.constant 0 : index
    %245 = vector.load %arg10[%c0_64, %c0_65] : memref<2x1xf32, #tpu.memory_space<vmem>>, vector<2x1xf32>
    tpu.vector_store %arg10[%c0_64, %c0_65], %244 {strides = array<i32>} : memref<2x1xf32, #tpu.memory_space<vmem>>, vector<2x1xf32>,
    return
  }
}

</mosaic_0001>

<llo_original>
// kernel: residual_model_linear_forward.1
$region0: #{residual_model_linear_forward.1}
  #allocation0 [shape = 'u32[]', space=smem, size = 0x4, offset = 0x4, fixed_abs, tag = 'smem constant byte address 0x4 - core index']
  #allocation1 [shape = 'u32[144,128]{1,0:T(1,128)}', space=vmem, size = 0x12000, scoped, tag = 'internal scratch']
  %s0 = inlined_call_operand.vmem [shape: f32[16,6], index: 0, kind: input, shape index: {}]
  %s1 = inlined_call_operand.vmem [shape: f32[6,256], index: 1, kind: input, shape index: {}]
  %s2 = inlined_call_operand.vmem [shape: f32[1,256], index: 2, kind: input, shape index: {}]
  %s3 = inlined_call_operand.hbm [shape: f32[64,256], index: 3, kind: input, shape index: {}]
  %s4 = inlined_call_operand.hbm [shape: f32[64,128], index: 4, kind: input, shape index: {}]
  %s5 = inlined_call_operand.vmem [shape: f32[1,128], index: 5, kind: input, shape index: {}]
  %s6 = inlined_call_operand.vmem [shape: f32[1,32], index: 6, kind: input, shape index: {}]
  %s7 = inlined_call_operand.vmem [shape: f32[1,32], index: 7, kind: input, shape index: {}]
  %s8 = inlined_call_operand.vmem [shape: f32[1,32], index: 8, kind: input, shape index: {}]
  %s9 = inlined_call_operand.vmem [shape: f32[3], index: 9, kind: input, shape index: {}]
  %s10 = inlined_call_operand.vmem [shape: f32[2,1], index: 10, kind: output, shape index: {}]
  %s11 = sld [smem:[#allocation0]]
  $region62: #{residual_model_linear_forward.1} parent=0
    _
  %s13 = ssub.s32 1, %s11
  %s14 = scalar_select 0, %s13, %s11
  $region1: #{residual_model_linear_forward.1} parent=0
    #allocation2 [shape = 'u8[65536]{0}', space=vmem, size = 0x10000, scoped, tag = 'input window, operand 3, single buffered']
    #allocation3 [shape = 's32[1]{0}', space=sflag, size = 0x4, scoped, tag = 'scoped memory for residual_model_linear_forward.1']
    #allocation4 [shape = 's32[1]{0}', space=sflag, size = 0x4, scoped, tag = 'scoped memory for residual_model_linear_forward.1']
    #allocation5 [shape = 'u8[32768]{0}', space=vmem, size = 0x8000, scoped, tag = 'input window, operand 4, single buffered']
    #allocation6 [shape = 's32[1]{0}', space=sflag, size = 0x4, scoped, tag = 'scoped memory for residual_model_linear_forward.1']
    #allocation7 [shape = 'u8[512]{0}', space=smem, size = 0x200, scoped, tag = 'input window, operand 9, single buffered']
    %15 = vsyncpa [#allocation3], 0
    %16 = vsyncpa [#allocation6], 0
    %17 = vsyncpa [#allocation4], 0
    // Predicated region
    $region2: #{residual_model_linear_forward.1} parent=1 // pred_check
      _
    $region3: #{residual_model_linear_forward.1} parent=1 // pred_check_branch
      %19 = sbr.rel (0) target = $region5
    $region4: #{residual_model_linear_forward.1} parent=1 // pred_region
      _
    $region5: #{residual_model_linear_forward.1} parent=1 // pred_fallthru
      _
    // Predicated region
    $region6: #{residual_model_linear_forward.1} parent=1 // pred_check
      _
    $region7: #{residual_model_linear_forward.1} parent=1 // pred_check_branch
      %21 = sbr.rel (0) target = $region9
    $region8: #{residual_model_linear_forward.1} parent=1 // pred_region
      _
    $region9: #{residual_model_linear_forward.1} parent=1 // pred_fallthru
      _
    // Predicated region
    $region10: #{residual_model_linear_forward.1} parent=1 // pred_check
      _
    $region11: #{residual_model_linear_forward.1} parent=1 // pred_check_branch
      %23 = sbr.rel (0) target = $region13
    $region12: #{residual_model_linear_forward.1} parent=1 // pred_region
      _
    $region13: #{residual_model_linear_forward.1} parent=1 // pred_fallthru
      _
    // Predicated region
    $region14: #{residual_model_linear_forward.1} parent=1 // pred_check
      _
    $region15: #{residual_model_linear_forward.1} parent=1 // pred_check_branch
      %25 = sbr.rel (0) target = $region17
    $region16: #{residual_model_linear_forward.1} parent=1 // pred_region
      %s27 = ssub.s32 2048, 2048
      %28 = vsyncadd [#allocation3], %s27
      %s29 = sshll.u32 [#allocation2], 4
      %s30 = int_to_ptr.vmem [resolvable:$true] %s29
      %35 = dma.hbm_to_vmem [thread:$0]  %s3, 2048, %s30, [#allocation3], 256, 256, 16
    $region17: #{residual_model_linear_forward.1} parent=1 // pred_fallthru
      _
    // Predicated region
    $region18: #{residual_model_linear_forward.1} parent=1 // pred_check
      _
    $region19: #{residual_model_linear_forward.1} parent=1 // pred_check_branch
      %37 = sbr.rel (0) target = $region21
    $region20: #{residual_model_linear_forward.1} parent=1 // pred_region
      %s39 = ssub.s32 1024, 1024
      %40 = vsyncadd [#allocation6], %s39
      %s41 = sshll.u32 [#allocation5], 4
      %s42 = int_to_ptr.vmem [resolvable:$true] %s41
      %47 = dma.hbm_to_vmem [thread:$0]  %s4, 1024, %s42, [#allocation6], 128, 128, 8
    $region21: #{residual_model_linear_forward.1} parent=1 // pred_fallthru
      _
    // Predicated region
    $region22: #{residual_model_linear_forward.1} parent=1 // pred_check
      _
    $region23: #{residual_model_linear_forward.1} parent=1 // pred_check_branch
      %49 = sbr.rel (0) target = $region25
    $region24: #{residual_model_linear_forward.1} parent=1 // pred_region
      _
    $region25: #{residual_model_linear_forward.1} parent=1 // pred_fallthru
      _
    // Predicated region
    $region26: #{residual_model_linear_forward.1} parent=1 // pred_check
      _
    $region27: #{residual_model_linear_forward.1} parent=1 // pred_check_branch
      %51 = sbr.rel (0) target = $region29
    $region28: #{residual_model_linear_forward.1} parent=1 // pred_region
      _
    $region29: #{residual_model_linear_forward.1} parent=1 // pred_fallthru
      _
    // Predicated region
    $region30: #{residual_model_linear_forward.1} parent=1 // pred_check
      _
    $region31: #{residual_model_linear_forward.1} parent=1 // pred_check_branch
      %53 = sbr.rel (0) target = $region33
    $region32: #{residual_model_linear_forward.1} parent=1 // pred_region
      _
    $region33: #{residual_model_linear_forward.1} parent=1 // pred_fallthru
      _
    // Predicated region
    $region34: #{residual_model_linear_forward.1} parent=1 // pred_check
      _
    $region35: #{residual_model_linear_forward.1} parent=1 // pred_check_branch
      %55 = sbr.rel (0) target = $region37
    $region36: #{residual_model_linear_forward.1} parent=1 // pred_region
      _
    $region37: #{residual_model_linear_forward.1} parent=1 // pred_fallthru
      _
    // Predicated region
    $region38: #{residual_model_linear_forward.1} parent=1 // pred_check
      _
    $region39: #{residual_model_linear_forward.1} parent=1 // pred_check_branch
      %57 = sbr.rel (0) target = $region41
    $region40: #{residual_model_linear_forward.1} parent=1 // pred_region
      %s59 = ssub.s32 16, 16
      %60 = vsyncadd [#allocation4], %s59
      %s62 = sshll.u32 %s9, 4
      %s63 = int_to_ptr.vmem [resolvable:$true] %s62
      %65 = dma.vmem_to_smem %s63, 16, [#allocation7], [#allocation4]
    $region41: #{residual_model_linear_forward.1} parent=1 // pred_fallthru
      _
    // Predicated region
    $region42: #{residual_model_linear_forward.1} parent=1 // pred_check
      _
    $region43: #{residual_model_linear_forward.1} parent=1 // pred_check_branch
      %67 = sbr.rel (0) target = $region45
    $region44: #{residual_model_linear_forward.1} parent=1 // pred_region
      %68 = dma.done [#allocation3], 2048
    $region45: #{residual_model_linear_forward.1} parent=1 // pred_fallthru
      _
    // Predicated region
    $region46: #{residual_model_linear_forward.1} parent=1 // pred_check
      _
    $region47: #{residual_model_linear_forward.1} parent=1 // pred_check_branch
      %70 = sbr.rel (0) target = $region49
    $region48: #{residual_model_linear_forward.1} parent=1 // pred_region
      %71 = dma.done [#allocation6], 1024
    $region49: #{residual_model_linear_forward.1} parent=1 // pred_fallthru
      _
    // Predicated region
    $region50: #{residual_model_linear_forward.1} parent=1 // pred_check
      _
    $region51: #{residual_model_linear_forward.1} parent=1 // pred_check_branch
      %73 = sbr.rel (0) target = $region53
    $region52: #{residual_model_linear_forward.1} parent=1 // pred_region
      %74 = dma.done [#allocation4], 16
    $region53: #{residual_model_linear_forward.1} parent=1 // pred_fallthru
      _
    %75 = sfence
    %v76 = vld [vmem:[%s0] sm:$0xff]
    %v77 = vld [vmem:[%s0 + $0x8] sm:$0xff]
    %v78 = vld [vmem:[%s1] sm:$0x3f]
    %v79 = vld [vmem:[%s1 + $0x8] sm:$0x3f]
    %v80 = vld [vmem:[%s2] sm:$0x3]
    %v82 = vlaneseq
    %v83 = vshrl.u32 %v82, 7
    %v84 = vsub.s32 0, %v83
    %v85 = vrot.slane %v80, %v84
    %v86 = vlaneseq
    %v87 = vshrl.u32 %v86, 7
    %v88 = vsub.s32 1, %v87
    %v89 = vrot.slane %v80, %v88
    %vm92 = vcmask 48128
    %v94 = vsel %vm92, %v76, 0
    %v97 = vsel %vm92, %v77, 0
    %vm99 = vcmask 1045504
    %v101 = vsel %vm99, %v78, 0
    %v104 = vsel %vm99, %v79, 0
    %v106 = vand.u32 %v104, 4294901760
    %107 = vmatprep.subr.mxu0 %v106
    %v108 = vand.u32 %v101, 4294901760
    %109 = vmatpush1.msra.mxu0 %v108
    %110 = vmatprep.subr.mxu0 0.0
    %111 = vmatpush1.msra.mxu0 0.0
    %112 = vmatprep.subr.mxu0 0.0
    %113 = vmatpush1.msra.mxu0 0.0
    %114 = vmatprep.subr.mxu0 0.0
    %115 = vmatpush1.msra.mxu0 0.0
    %116 = vmatprep.subr.mxu0 0.0
    %117 = vmatpush1.msra.mxu0 0.0
    %118 = vmatprep.subr.mxu0 0.0
    %119 = vmatpush1.msra.mxu0 0.0
    %120 = vmatprep.subr.mxu0 0.0
    %121 = vmatpush1.msra.mxu0 0.0
    %122 = vmatprep.subr.mxu0 0.0
    %123 = vmatpush1.msra.mxu0 0.0
    %124 = vmatprep.subr.mxu0 0.0
    %125 = vmatpush1.msra.mxu0 0.0
    %126 = vmatprep.subr.mxu0 0.0
    %127 = vmatpush1.msra.mxu0 0.0
    %128 = vmatprep.subr.mxu0 0.0
    %129 = vmatpush1.msra.mxu0 0.0
    %130 = vmatprep.subr.mxu0 0.0
    %131 = vmatpush1.msra.mxu0 0.0
    %132 = vmatprep.subr.mxu0 0.0
    %133 = vmatpush1.msra.mxu0 0.0
    %134 = vmatprep.subr.mxu0 0.0
    %135 = vmatpush1.msra.mxu0 0.0
    %136 = vmatprep.subr.mxu0 0.0
    %137 = vmatpush1.msra.mxu0 0.0
    %138 = vmatprep.subr.mxu0 0.0
    %139 = vmatpush1.msra.mxu0 0.0
    %140 = vmatprep.subr.mxu0 0.0
    %141 = vmatpush1.msra.mxu0 0.0
    %142 = vmatprep.subr.mxu0 0.0
    %143 = vmatpush1.msra.mxu0 0.0
    %144 = vmatprep.subr.mxu0 0.0
    %145 = vmatpush1.msra.mxu0 0.0
    %146 = vmatprep.subr.mxu0 0.0
    %147 = vmatpush1.msra.mxu0 0.0
    %148 = vmatprep.subr.mxu0 0.0
    %149 = vmatpush1.msra.mxu0 0.0
    %150 = vmatprep.subr.mxu0 0.0
    %151 = vmatpush1.msra.mxu0 0.0
    %152 = vmatprep.subr.mxu0 0.0
    %153 = vmatpush1.msra.mxu0 0.0
    %154 = vmatprep.subr.mxu0 0.0
    %155 = vmatpush1.msra.mxu0 0.0
    %156 = vmatprep.subr.mxu0 0.0
    %157 = vmatpush1.msra.mxu0 0.0
    %158 = vmatprep.subr.mxu0 0.0
    %159 = vmatpush1.msra.mxu0 0.0
    %160 = vmatprep.subr.mxu0 0.0
    %161 = vmatpush1.msra.mxu0 0.0
    %162 = vmatprep.subr.mxu0 0.0
    %163 = vmatpush1.msra.mxu0 0.0
    %164 = vmatprep.subr.mxu0 0.0
    %165 = vmatpush1.msra.mxu0 0.0
    %166 = vmatprep.subr.mxu0 0.0
    %167 = vmatpush1.msra.mxu0 0.0
    %168 = vmatprep.subr.mxu0 0.0
    %169 = vmatpush1.msra.mxu0 0.0
    %170 = vmatprep.subr.mxu0 0.0
    %171 = vmatpush1.msra.mxu0 0.0
    %172 = vmatprep.mubr.f32.mxu0 0.0
    %v173 = vand.u32 %v94, 4294901760
    %v174 = vsub.f32 %v94, %v173
    %v175 = vand.u32 %v174, 4294901760
    %v176 = vsub.f32 %v174, %v175
    %v177 = vand.u32 %v176, 4294901760
    %178 = vmatmul.mubr.f32.gmra.mrb[0].mxu0 %v177
    %v179 = vpop.f32.mrb[0].mxu0
    %v180 = vadd.f32 %v85, %v179
    %v181 = vpop.f32.mrb[0].mxu0
    %v182 = vadd.f32 %v89, %v181
    %183 = vmatprep.mubr.f32.mxu0 0.0
    %v184 = vand.u32 %v97, 4294901760
    %v185 = vsub.f32 %v97, %v184
    %v186 = vand.u32 %v185, 4294901760
    %v187 = vsub.f32 %v185, %v186
    %v188 = vand.u32 %v187, 4294901760
    %189 = vmatmul.mubr.f32.gmra.mrb[0].mxu0 %v188
    %v190 = vpop.f32.mrb[0].mxu0
    %v191 = vadd.f32 %v85, %v190
    %v192 = vpop.f32.mrb[0].mxu0
    %v193 = vadd.f32 %v89, %v192
    %194 = vdwg.mxu0
    %v195 = vand.u32 %v104, 4294901760
    %v196 = vsub.f32 %v104, %v195
    %v197 = vand.u32 %v196, 4294901760
    %v198 = vsub.f32 %v196, %v197
    %v199 = vand.u32 %v198, 4294901760
    %200 = vmatprep.subr.mxu0 %v199
    %v201 = vand.u32 %v101, 4294901760
    %v202 = vsub.f32 %v101, %v201
    %v203 = vand.u32 %v202, 4294901760
    %v204 = vsub.f32 %v202, %v203
    %v205 = vand.u32 %v204, 4294901760
    %206 = vmatpush1.msra.mxu0 %v205
    %207 = vmatprep.subr.mxu0 0.0
    %208 = vmatpush1.msra.mxu0 0.0
    %209 = vmatprep.subr.mxu0 0.0
    %210 = vmatpush1.msra.mxu0 0.0
    %211 = vmatprep.subr.mxu0 0.0
    %212 = vmatpush1.msra.mxu0 0.0
    %213 = vmatprep.subr.mxu0 0.0
    %214 = vmatpush1.msra.mxu0 0.0
    %215 = vmatprep.subr.mxu0 0.0
    %216 = vmatpush1.msra.mxu0 0.0
    %217 = vmatprep.subr.mxu0 0.0
    %218 = vmatpush1.msra.mxu0 0.0
    %219 = vmatprep.subr.mxu0 0.0
    %220 = vmatpush1.msra.mxu0 0.0
    %221 = vmatprep.subr.mxu0 0.0
    %222 = vmatpush1.msra.mxu0 0.0
    %223 = vmatprep.subr.mxu0 0.0
    %224 = vmatpush1.msra.mxu0 0.0
    %225 = vmatprep.subr.mxu0 0.0
    %226 = vmatpush1.msra.mxu0 0.0
    %227 = vmatprep.subr.mxu0 0.0
    %228 = vmatpush1.msra.mxu0 0.0
    %229 = vmatprep.subr.mxu0 0.0
    %230 = vmatpush1.msra.mxu0 0.0
    %231 = vmatprep.subr.mxu0 0.0
    %232 = vmatpush1.msra.mxu0 0.0
    %233 = vmatprep.subr.mxu0 0.0
    %234 = vmatpush1.msra.mxu0 0.0
    %235 = vmatprep.subr.mxu0 0.0
    %236 = vmatpush1.msra.mxu0 0.0
    %237 = vmatprep.subr.mxu0 0.0
    %238 = vmatpush1.msra.mxu0 0.0
    %239 = vmatprep.subr.mxu0 0.0
    %240 = vmatpush1.msra.mxu0 0.0
    %241 = vmatprep.subr.mxu0 0.0
    %242 = vmatpush1.msra.mxu0 0.0
    %243 = vmatprep.subr.mxu0 0.0
    %244 = vmatpush1.msra.mxu0 0.0
    %245 = vmatprep.subr.mxu0 0.0
    %246 = vmatpush1.msra.mxu0 0.0
    %247 = vmatprep.subr.mxu0 0.0
    %248 = vmatpush1.msra.mxu0 0.0
    %249 = vmatprep.subr.mxu0 0.0
    %250 = vmatpush1.msra.mxu0 0.0
    %251 = vmatprep.subr.mxu0 0.0
    %252 = vmatpush1.msra.mxu0 0.0
    %253 = vmatprep.subr.mxu0 0.0
    %254 = vmatpush1.msra.mxu0 0.0
    %255 = vmatprep.subr.mxu0 0.0
    %256 = vmatpush1.msra.mxu0 0.0
    %257 = vmatprep.subr.mxu0 0.0
    %258 = vmatpush1.msra.mxu0 0.0
    %259 = vmatprep.subr.mxu0 0.0
    %260 = vmatpush1.msra.mxu0 0.0
    %261 = vmatprep.subr.mxu0 0.0
    %262 = vmatpush1.msra.mxu0 0.0
    %263 = vmatprep.subr.mxu0 0.0
    %264 = vmatpush1.msra.mxu0 0.0
    %265 = vmatprep.subr.mxu0 0.0
    %266 = vmatpush1.msra.mxu0 0.0
    %267 = vmatprep.subr.mxu0 0.0
    %268 = vmatpush1.msra.mxu0 0.0
    %269 = vmatprep.mubr.f32.mxu0 0.0
    %v270 = vand.u32 %v94, 4294901760
    %271 = vmatmul.mubr.f32.gmra.mrb[0].mxu0 %v270
    %v272 = vpop.f32.mrb[0].mxu0
    %v273 = vadd.f32 %v180, %v272
    %v274 = vpop.f32.mrb[0].mxu0
    %v275 = vadd.f32 %v182, %v274
    %276 = vmatprep.mubr.f32.mxu0 0.0
    %v277 = vand.u32 %v97, 4294901760
    %278 = vmatmul.mubr.f32.gmra.mrb[0].mxu0 %v277
    %v279 = vpop.f32.mrb[0].mxu0
    %v280 = vadd.f32 %v191, %v279
    %v281 = vpop.f32.mrb[0].mxu0
    %v282 = vadd.f32 %v193, %v281
    %283 = vdwg.mxu0
    %v284 = vand.u32 %v104, 4294901760
    %v285 = vsub.f32 %v104, %v284
    %286 = vmatprep.subr.mxu0 %v285
    %v287 = vand.u32 %v101, 4294901760
    %v288 = vsub.f32 %v101, %v287
    %289 = vmatpush1.msra.mxu0 %v288
    %290 = vmatprep.subr.mxu0 0.0
    %291 = vmatpush1.msra.mxu0 0.0
    %292 = vmatprep.subr.mxu0 0.0
    %293 = vmatpush1.msra.mxu0 0.0
    %294 = vmatprep.subr.mxu0 0.0
    %295 = vmatpush1.msra.mxu0 0.0
    %296 = vmatprep.subr.mxu0 0.0
    %297 = vmatpush1.msra.mxu0 0.0
    %298 = vmatprep.subr.mxu0 0.0
    %299 = vmatpush1.msra.mxu0 0.0
    %300 = vmatprep.subr.mxu0 0.0
    %301 = vmatpush1.msra.mxu0 0.0
    %302 = vmatprep.subr.mxu0 0.0
    %303 = vmatpush1.msra.mxu0 0.0
    %304 = vmatprep.subr.mxu0 0.0
    %305 = vmatpush1.msra.mxu0 0.0
    %306 = vmatprep.subr.mxu0 0.0
    %307 = vmatpush1.msra.mxu0 0.0
    %308 = vmatprep.subr.mxu0 0.0
    %309 = vmatpush1.msra.mxu0 0.0
    %310 = vmatprep.subr.mxu0 0.0
    %311 = vmatpush1.msra.mxu0 0.0
    %312 = vmatprep.subr.mxu0 0.0
    %313 = vmatpush1.msra.mxu0 0.0
    %314 = vmatprep.subr.mxu0 0.0
    %315 = vmatpush1.msra.mxu0 0.0
    %316 = vmatprep.subr.mxu0 0.0
    %317 = vmatpush1.msra.mxu0 0.0
    %318 = vmatprep.subr.mxu0 0.0
    %319 = vmatpush1.msra.mxu0 0.0
    %320 = vmatprep.subr.mxu0 0.0
    %321 = vmatpush1.msra.mxu0 0.0
    %322 = vmatprep.subr.mxu0 0.0
    %323 = vmatpush1.msra.mxu0 0.0
    %324 = vmatprep.subr.mxu0 0.0
    %325 = vmatpush1.msra.mxu0 0.0
    %326 = vmatprep.subr.mxu0 0.0
    %327 = vmatpush1.msra.mxu0 0.0
    %328 = vmatprep.subr.mxu0 0.0
    %329 = vmatpush1.msra.mxu0 0.0
    %330 = vmatprep.subr.mxu0 0.0
    %331 = vmatpush1.msra.mxu0 0.0
    %332 = vmatprep.subr.mxu0 0.0
    %333 = vmatpush1.msra.mxu0 0.0
    %334 = vmatprep.subr.mxu0 0.0
    %335 = vmatpush1.msra.mxu0 0.0
    %336 = vmatprep.subr.mxu0 0.0
    %337 = vmatpush1.msra.mxu0 0.0
    %338 = vmatprep.subr.mxu0 0.0
    %339 = vmatpush1.msra.mxu0 0.0
    %340 = vmatprep.subr.mxu0 0.0
    %341 = vmatpush1.msra.mxu0 0.0
    %342 = vmatprep.subr.mxu0 0.0
    %343 = vmatpush1.msra.mxu0 0.0
    %344 = vmatprep.subr.mxu0 0.0
    %345 = vmatpush1.msra.mxu0 0.0
    %346 = vmatprep.subr.mxu0 0.0
    %347 = vmatpush1.msra.mxu0 0.0
    %348 = vmatprep.subr.mxu0 0.0
    %349 = vmatpush1.msra.mxu0 0.0
    %350 = vmatprep.subr.mxu0 0.0
    %351 = vmatpush1.msra.mxu0 0.0
    %352 = vmatprep.mubr.f32.mxu0 0.0
    %v353 = vand.u32 %v94, 4294901760
    %v354 = vsub.f32 %v94, %v353
    %355 = vmatmul.mubr.f32.gmra.mrb[0].mxu0 %v354
    %v356 = vpop.f32.mrb[0].mxu0
    %v357 = vadd.f32 %v273, %v356
    %v358 = vpop.f32.mrb[0].mxu0
    %v359 = vadd.f32 %v275, %v358
    %360 = vmatprep.mubr.f32.mxu0 0.0
    %v361 = vand.u32 %v97, 4294901760
    %v362 = vsub.f32 %v97, %v361
    %363 = vmatmul.mubr.f32.gmra.mrb[0].mxu0 %v362
    %v364 = vpop.f32.mrb[0].mxu0
    %v365 = vadd.f32 %v280, %v364
    %v366 = vpop.f32.mrb[0].mxu0
    %v367 = vadd.f32 %v282, %v366
    %368 = vdwg.mxu0
    %v369 = vand.u32 %v104, 4294901760
    %370 = vmatprep.subr.mxu0 %v369
    %v371 = vand.u32 %v101, 4294901760
    %372 = vmatpush1.msra.mxu0 %v371
    %373 = vmatprep.subr.mxu0 0.0
    %374 = vmatpush1.msra.mxu0 0.0
    %375 = vmatprep.subr.mxu0 0.0
    %376 = vmatpush1.msra.mxu0 0.0
    %377 = vmatprep.subr.mxu0 0.0
    %378 = vmatpush1.msra.mxu0 0.0
    %379 = vmatprep.subr.mxu0 0.0
    %380 = vmatpush1.msra.mxu0 0.0
    %381 = vmatprep.subr.mxu0 0.0
    %382 = vmatpush1.msra.mxu0 0.0
    %383 = vmatprep.subr.mxu0 0.0
    %384 = vmatpush1.msra.mxu0 0.0
    %385 = vmatprep.subr.mxu0 0.0
    %386 = vmatpush1.msra.mxu0 0.0
    %387 = vmatprep.subr.mxu0 0.0
    %388 = vmatpush1.msra.mxu0 0.0
    %389 = vmatprep.subr.mxu0 0.0
    %390 = vmatpush1.msra.mxu0 0.0
    %391 = vmatprep.subr.mxu0 0.0
    %392 = vmatpush1.msra.mxu0 0.0
    %393 = vmatprep.subr.mxu0 0.0
    %394 = vmatpush1.msra.mxu0 0.0
    %395 = vmatprep.subr.mxu0 0.0
    %396 = vmatpush1.msra.mxu0 0.0
    %397 = vmatprep.subr.mxu0 0.0
    %398 = vmatpush1.msra.mxu0 0.0
    %399 = vmatprep.subr.mxu0 0.0
    %400 = vmatpush1.msra.mxu0 0.0
    %401 = vmatprep.subr.mxu0 0.0
    %402 = vmatpush1.msra.mxu0 0.0
    %403 = vmatprep.subr.mxu0 0.0
    %404 = vmatpush1.msra.mxu0 0.0
    %405 = vmatprep.subr.mxu0 0.0
    %406 = vmatpush1.msra.mxu0 0.0
    %407 = vmatprep.subr.mxu0 0.0
    %408 = vmatpush1.msra.mxu0 0.0
    %409 = vmatprep.subr.mxu0 0.0
    %410 = vmatpush1.msra.mxu0 0.0
    %411 = vmatprep.subr.mxu0 0.0
    %412 = vmatpush1.msra.mxu0 0.0
    %413 = vmatprep.subr.mxu0 0.0
    %414 = vmatpush1.msra.mxu0 0.0
    %415 = vmatprep.subr.mxu0 0.0
    %416 = vmatpush1.msra.mxu0 0.0
    %417 = vmatprep.subr.mxu0 0.0
    %418 = vmatpush1.msra.mxu0 0.0
    %419 = vmatprep.subr.mxu0 0.0
    %420 = vmatpush1.msra.mxu0 0.0
    %421 = vmatprep.subr.mxu0 0.0
    %422 = vmatpush1.msra.mxu0 0.0
    %423 = vmatprep.subr.mxu0 0.0
    %424 = vmatpush1.msra.mxu0 0.0
    %425 = vmatprep.subr.mxu0 0.0
    %426 = vmatpush1.msra.mxu0 0.0
    %427 = vmatprep.subr.mxu0 0.0
    %428 = vmatpush1.msra.mxu0 0.0
    %429 = vmatprep.subr.mxu0 0.0
    %430 = vmatpush1.msra.mxu0 0.0
    %431 = vmatprep.subr.mxu0 0.0
    %432 = vmatpush1.msra.mxu0 0.0
    %433 = vmatprep.subr.mxu0 0.0
    %434 = vmatpush1.msra.mxu0 0.0
    %435 = vmatprep.mubr.f32.mxu0 0.0
    %v436 = vand.u32 %v94, 4294901760
    %v437 = vsub.f32 %v94, %v436
    %v438 = vand.u32 %v437, 4294901760
    %439 = vmatmul.mubr.f32.gmra.mrb[0].mxu0 %v438
    %v440 = vpop.f32.mrb[0].mxu0
    %v441 = vadd.f32 %v357, %v440
    %v442 = vpop.f32.mrb[0].mxu0
    %v443 = vadd.f32 %v359, %v442
    %444 = vmatprep.mubr.f32.mxu0 0.0
    %v445 = vand.u32 %v97, 4294901760
    %v446 = vsub.f32 %v97, %v445
    %v447 = vand.u32 %v446, 4294901760
    %448 = vmatmul.mubr.f32.gmra.mrb[0].mxu0 %v447
    %v449 = vpop.f32.mrb[0].mxu0
    %v450 = vadd.f32 %v365, %v449
    %v451 = vpop.f32.mrb[0].mxu0
    %v452 = vadd.f32 %v367, %v451
    %453 = vdwg.mxu0
    %v454 = vand.u32 %v104, 4294901760
    %v455 = vsub.f32 %v104, %v454
    %v456 = vand.u32 %v455, 4294901760
    %457 = vmatprep.subr.mxu0 %v456
    %v458 = vand.u32 %v101, 4294901760
    %v459 = vsub.f32 %v101, %v458
    %v460 = vand.u32 %v459, 4294901760
    %461 = vmatpush1.msra.mxu0 %v460
    %462 = vmatprep.subr.mxu0 0.0
    %463 = vmatpush1.msra.mxu0 0.0
    %464 = vmatprep.subr.mxu0 0.0
    %465 = vmatpush1.msra.mxu0 0.0
    %466 = vmatprep.subr.mxu0 0.0
    %467 = vmatpush1.msra.mxu0 0.0
    %468 = vmatprep.subr.mxu0 0.0
    %469 = vmatpush1.msra.mxu0 0.0
    %470 = vmatprep.subr.mxu0 0.0
    %471 = vmatpush1.msra.mxu0 0.0
    %472 = vmatprep.subr.mxu0 0.0
    %473 = vmatpush1.msra.mxu0 0.0
    %474 = vmatprep.subr.mxu0 0.0
    %475 = vmatpush1.msra.mxu0 0.0
    %476 = vmatprep.subr.mxu0 0.0
    %477 = vmatpush1.msra.mxu0 0.0
    %478 = vmatprep.subr.mxu0 0.0
    %479 = vmatpush1.msra.mxu0 0.0
    %480 = vmatprep.subr.mxu0 0.0
    %481 = vmatpush1.msra.mxu0 0.0
    %482 = vmatprep.subr.mxu0 0.0
    %483 = vmatpush1.msra.mxu0 0.0
    %484 = vmatprep.subr.mxu0 0.0
    %485 = vmatpush1.msra.mxu0 0.0
    %486 = vmatprep.subr.mxu0 0.0
    %487 = vmatpush1.msra.mxu0 0.0
    %488 = vmatprep.subr.mxu0 0.0
    %489 = vmatpush1.msra.mxu0 0.0
    %490 = vmatprep.subr.mxu0 0.0
    %491 = vmatpush1.msra.mxu0 0.0
    %492 = vmatprep.subr.mxu0 0.0
    %493 = vmatpush1.msra.mxu0 0.0
    %494 = vmatprep.subr.mxu0 0.0
    %495 = vmatpush1.msra.mxu0 0.0
    %496 = vmatprep.subr.mxu0 0.0
    %497 = vmatpush1.msra.mxu0 0.0
    %498 = vmatprep.subr.mxu0 0.0
    %499 = vmatpush1.msra.mxu0 0.0
    %500 = vmatprep.subr.mxu0 0.0
    %501 = vmatpush1.msra.mxu0 0.0
    %502 = vmatprep.subr.mxu0 0.0
    %503 = vmatpush1.msra.mxu0 0.0
    %504 = vmatprep.subr.mxu0 0.0
    %505 = vmatpush1.msra.mxu0 0.0
    %506 = vmatprep.subr.mxu0 0.0
    %507 = vmatpush1.msra.mxu0 0.0
    %508 = vmatprep.subr.mxu0 0.0
    %509 = vmatpush1.msra.mxu0 0.0
    %510 = vmatprep.subr.mxu0 0.0
    %511 = vmatpush1.msra.mxu0 0.0
    %512 = vmatprep.subr.mxu0 0.0
    %513 = vmatpush1.msra.mxu0 0.0
    %514 = vmatprep.subr.mxu0 0.0
    %515 = vmatpush1.msra.mxu0 0.0
    %516 = vmatprep.subr.mxu0 0.0
    %517 = vmatpush1.msra.mxu0 0.0
    %518 = vmatprep.subr.mxu0 0.0
    %519 = vmatpush1.msra.mxu0 0.0
    %520 = vmatprep.subr.mxu0 0.0
    %521 = vmatpush1.msra.mxu0 0.0
    %522 = vmatprep.subr.mxu0 0.0
    %523 = vmatpush1.msra.mxu0 0.0
    %524 = vmatprep.mubr.f32.mxu0 0.0
    %v525 = vand.u32 %v94, 4294901760
    %526 = vmatmul.mubr.f32.gmra.mrb[0].mxu0 %v525
    %v527 = vpop.f32.mrb[0].mxu0
    %v528 = vadd.f32 %v441, %v527
    %v529 = vpop.f32.mrb[0].mxu0
    %v530 = vadd.f32 %v443, %v529
    %531 = vmatprep.mubr.f32.mxu0 0.0
    %v532 = vand.u32 %v97, 4294901760
    %533 = vmatmul.mubr.f32.gmra.mrb[0].mxu0 %v532
    %v534 = vpop.f32.mrb[0].mxu0
    %v535 = vadd.f32 %v450, %v534
    %v536 = vpop.f32.mrb[0].mxu0
    %v537 = vadd.f32 %v452, %v536
    %538 = vdwg.mxu0
    %v539 = vand.u32 %v104, 4294901760
    %540 = vmatprep.subr.mxu0 %v539
    %v541 = vand.u32 %v101, 4294901760
    %542 = vmatpush1.msra.mxu0 %v541
    %543 = vmatprep.subr.mxu0 0.0
    %544 = vmatpush1.msra.mxu0 0.0
    %545 = vmatprep.subr.mxu0 0.0
    %546 = vmatpush1.msra.mxu0 0.0
    %547 = vmatprep.subr.mxu0 0.0
    %548 = vmatpush1.msra.mxu0 0.0
    %549 = vmatprep.subr.mxu0 0.0
    %550 = vmatpush1.msra.mxu0 0.0
    %551 = vmatprep.subr.mxu0 0.0
    %552 = vmatpush1.msra.mxu0 0.0
    %553 = vmatprep.subr.mxu0 0.0
    %554 = vmatpush1.msra.mxu0 0.0
    %555 = vmatprep.subr.mxu0 0.0
    %556 = vmatpush1.msra.mxu0 0.0
    %557 = vmatprep.subr.mxu0 0.0
    %558 = vmatpush1.msra.mxu0 0.0
    %559 = vmatprep.subr.mxu0 0.0
    %560 = vmatpush1.msra.mxu0 0.0
    %561 = vmatprep.subr.mxu0 0.0
    %562 = vmatpush1.msra.mxu0 0.0
    %563 = vmatprep.subr.mxu0 0.0
    %564 = vmatpush1.msra.mxu0 0.0
    %565 = vmatprep.subr.mxu0 0.0
    %566 = vmatpush1.msra.mxu0 0.0
    %567 = vmatprep.subr.mxu0 0.0
    %568 = vmatpush1.msra.mxu0 0.0
    %569 = vmatprep.subr.mxu0 0.0
    %570 = vmatpush1.msra.mxu0 0.0
    %571 = vmatprep.subr.mxu0 0.0
    %572 = vmatpush1.msra.mxu0 0.0
    %573 = vmatprep.subr.mxu0 0.0
    %574 = vmatpush1.msra.mxu0 0.0
    %575 = vmatprep.subr.mxu0 0.0
    %576 = vmatpush1.msra.mxu0 0.0
    %577 = vmatprep.subr.mxu0 0.0
    %578 = vmatpush1.msra.mxu0 0.0
    %579 = vmatprep.subr.mxu0 0.0
    %580 = vmatpush1.msra.mxu0 0.0
    %581 = vmatprep.subr.mxu0 0.0
    %582 = vmatpush1.msra.mxu0 0.0
    %583 = vmatprep.subr.mxu0 0.0
    %584 = vmatpush1.msra.mxu0 0.0
    %585 = vmatprep.subr.mxu0 0.0
    %586 = vmatpush1.msra.mxu0 0.0
    %587 = vmatprep.subr.mxu0 0.0
    %588 = vmatpush1.msra.mxu0 0.0
    %589 = vmatprep.subr.mxu0 0.0
    %590 = vmatpush1.msra.mxu0 0.0
    %591 = vmatprep.subr.mxu0 0.0
    %592 = vmatpush1.msra.mxu0 0.0
    %593 = vmatprep.subr.mxu0 0.0
    %594 = vmatpush1.msra.mxu0 0.0
    %595 = vmatprep.subr.mxu0 0.0
    %596 = vmatpush1.msra.mxu0 0.0
    %597 = vmatprep.subr.mxu0 0.0
    %598 = vmatpush1.msra.mxu0 0.0
    %599 = vmatprep.subr.mxu0 0.0
    %600 = vmatpush1.msra.mxu0 0.0
    %601 = vmatprep.subr.mxu0 0.0
    %602 = vmatpush1.msra.mxu0 0.0
    %603 = vmatprep.subr.mxu0 0.0
    %604 = vmatpush1.msra.mxu0 0.0
    %605 = vmatprep.mubr.f32.mxu0 0.0
    %v606 = vand.u32 %v94, 4294901760
    %607 = vmatmul.mubr.f32.gmra.mrb[0].mxu0 %v606
    %v608 = vpop.f32.mrb[0].mxu0
    %v609 = vadd.f32 %v528, %v608
    %v610 = vpop.f32.mrb[0].mxu0
    %v611 = vadd.f32 %v530, %v610
    %612 = vmatprep.mubr.f32.mxu0 0.0
    %v613 = vand.u32 %v97, 4294901760
    %614 = vmatmul.mubr.f32.gmra.mrb[0].mxu0 %v613
    %v615 = vpop.f32.mrb[0].mxu0
    %v616 = vadd.f32 %v535, %v615
    %v617 = vpop.f32.mrb[0].mxu0
    %v618 = vadd.f32 %v537, %v617
    %619 = vdwg.mxu0
    %v620 = vxor.u32 %v609, 2147483648
    %v621 = vmul.f32 %v620, 1.442695
    %v622 = vpow.pop %v621
    %v623 = vadd.f32 %v622, 1.0
    %v624 = vrcp.pop %v623
    %v625 = vmul.f32 1.0, %v624
    %627 = vrot.lane.b32.xlu0 %v611, 64
    %v628 = vpop.permute.xlu0 %627
    %v630 = vmul.f32 %v625, %v628
    %v631 = vadd.f32 %v611, %v630
    %v632 = vtanh.pop %v631
    %v633 = vsub.f32 1.0, %v625
    %635 = vrot.lane.b32.xlu0 %v632, 64
    %v636 = vpop.permute.xlu0 %635
    %v638 = vmul.f32 %v633, %v636
    %v639 = vmul.f32 %v625, 0.0
    %v640 = vadd.f32 %v638, %v639
    %v641 = vlaneseq
    %v642 = vand.u32 %v641, 127
    %vm643 = vcmp.lt.s32.totalorder %v642, 32
    %645 = vrot.lane.b32.xlu0 %v640, 64
    %v646 = vpop.permute.xlu0 %645
    %v648 = vsel %vm643, %v646, 0.0
    %v649 = vld [vmem:[#allocation2] sm:$0xff]
    %v650 = vld [vmem:[#allocation2 + $0x8] sm:$0xff]
    %v651 = vld [vmem:[#allocation2 + $0x10] sm:$0xff]
    %v652 = vld [vmem:[#allocation2 + $0x18] sm:$0xff]
    %v653 = vld [vmem:[#allocation2 + $0x20] sm:$0xff]
    %v654 = vld [vmem:[#allocation2 + $0x28] sm:$0xff]
    %v655 = vld [vmem:[#allocation2 + $0x30] sm:$0xff]
    %v656 = vld [vmem:[#allocation2 + $0x38] sm:$0xff]
    %v657 = vld [vmem:[#allocation2 + $0x40] sm:$0xff]
    %v658 = vld [vmem:[#allocation2 + $0x48] sm:$0xff]
    %v659 = vld [vmem:[#allocation2 + $0x50] sm:$0xff]
    %v660 = vld [vmem:[#allocation2 + $0x58] sm:$0xff]
    %v661 = vld [vmem:[#allocation2 + $0x60] sm:$0xff]
    %v662 = vld [vmem:[#allocation2 + $0x68] sm:$0xff]
    %v663 = vld [vmem:[#allocation2 + $0x70] sm:$0xff]
    %v664 = vld [vmem:[#allocation2 + $0x78] sm:$0xff]
    %vm665 = vcmask 523264
    %v667 = vsel %vm665, %v648, 0
    %v669 = vand.u32 %v650, 4294901760
    %670 = vmatprep.subr.mxu0 %v669
    %v671 = vand.u32 %v649, 4294901760
    %672 = vmatpush1.msra.mxu0 %v671
    %v673 = vand.u32 %v652, 4294901760
    %674 = vmatprep.subr.mxu0 %v673
    %v675 = vand.u32 %v651, 4294901760
    %676 = vmatpush1.msra.mxu0 %v675
    %v677 = vand.u32 %v654, 4294901760
    %678 = vmatprep.subr.mxu0 %v677
    %v679 = vand.u32 %v653, 4294901760
    %680 = vmatpush1.msra.mxu0 %v679
    %v681 = vand.u32 %v656, 4294901760
    %682 = vmatprep.subr.mxu0 %v681
    %v683 = vand.u32 %v655, 4294901760
    %684 = vmatpush1.msra.mxu0 %v683
    %v685 = vand.u32 %v658, 4294901760
    %686 = vmatprep.subr.mxu0 %v685
    %v687 = vand.u32 %v657, 4294901760
    %688 = vmatpush1.msra.mxu0 %v687
    %v689 = vand.u32 %v660, 4294901760
    %690 = vmatprep.subr.mxu0 %v689
    %v691 = vand.u32 %v659, 4294901760
    %692 = vmatpush1.msra.mxu0 %v691
    %v693 = vand.u32 %v662, 4294901760
    %694 = vmatprep.subr.mxu0 %v693
    %v695 = vand.u32 %v661, 4294901760
    %696 = vmatpush1.msra.mxu0 %v695
    %v697 = vand.u32 %v664, 4294901760
    %698 = vmatprep.subr.mxu0 %v697
    %v699 = vand.u32 %v663, 4294901760
    %700 = vmatpush1.msra.mxu0 %v699
    %701 = vmatprep.subr.mxu0 0.0
    %702 = vmatpush1.msra.mxu0 0.0
    %703 = vmatprep.subr.mxu0 0.0
    %704 = vmatpush1.msra.mxu0 0.0
    %705 = vmatprep.subr.mxu0 0.0
    %706 = vmatpush1.msra.mxu0 0.0
    %707 = vmatprep.subr.mxu0 0.0
    %708 = vmatpush1.msra.mxu0 0.0
    %709 = vmatprep.subr.mxu0 0.0
    %710 = vmatpush1.msra.mxu0 0.0
    %711 = vmatprep.subr.mxu0 0.0
    %712 = vmatpush1.msra.mxu0 0.0
    %713 = vmatprep.subr.mxu0 0.0
    %714 = vmatpush1.msra.mxu0 0.0
    %715 = vmatprep.subr.mxu0 0.0
    %716 = vmatpush1.msra.mxu0 0.0
    %717 = vmatprep.subr.mxu0 0.0
    %718 = vmatpush1.msra.mxu0 0.0
    %719 = vmatprep.subr.mxu0 0.0
    %720 = vmatpush1.msra.mxu0 0.0
    %721 = vmatprep.subr.mxu0 0.0
    %722 = vmatpush1.msra.mxu0 0.0
    %723 = vmatprep.subr.mxu0 0.0
    %724 = vmatpush1.msra.mxu0 0.0
    %725 = vmatprep.subr.mxu0 0.0
    %726 = vmatpush1.msra.mxu0 0.0
    %727 = vmatprep.subr.mxu0 0.0
    %728 = vmatpush1.msra.mxu0 0.0
    %729 = vmatprep.subr.mxu0 0.0
    %730 = vmatpush1.msra.mxu0 0.0
    %731 = vmatprep.subr.mxu0 0.0
    %732 = vmatpush1.msra.mxu0 0.0
    %733 = vmatprep.subr.mxu0 0.0
    %734 = vmatpush1.msra.mxu0 0.0
    %735 = vmatprep.subr.mxu0 0.0
    %736 = vmatpush1.msra.mxu0 0.0
    %737 = vmatprep.subr.mxu0 0.0
    %738 = vmatpush1.msra.mxu0 0.0
    %739 = vmatprep.subr.mxu0 0.0
    %740 = vmatpush1.msra.mxu0 0.0
    %741 = vmatprep.subr.mxu0 0.0
    %742 = vmatpush1.msra.mxu0 0.0
    %743 = vmatprep.subr.mxu0 0.0
    %744 = vmatpush1.msra.mxu0 0.0
    %745 = vmatprep.subr.mxu0 0.0
    %746 = vmatpush1.msra.mxu0 0.0
    %747 = vmatprep.subr.mxu0 0.0
    %748 = vmatpush1.msra.mxu0 0.0
    %749 = vmatprep.mubr.f32.mxu0 0.0
    %v750 = vand.u32 %v667, 4294901760
    %v751 = vsub.f32 %v667, %v750
    %v752 = vand.u32 %v751, 4294901760
    %v753 = vsub.f32 %v751, %v752
    %v754 = vand.u32 %v753, 4294901760
    %755 = vmatmul.mubr.f32.gmra.mrb[0].mxu0 %v754
    %v756 = vpop.f32.mrb[0].mxu0
    %v757 = vadd.f32 0.0, %v756
    %v758 = vpop.f32.mrb[0].mxu0
    %v759 = vadd.f32 0.0, %v758
    %760 = vdwg.mxu0
    %v761 = vand.u32 %v650, 4294901760
    %v762 = vsub.f32 %v650, %v761
    %v763 = vand.u32 %v762, 4294901760
    %v764 = vsub.f32 %v762, %v763
    %v765 = vand.u32 %v764, 4294901760
    %766 = vmatprep.subr.mxu0 %v765
    %v767 = vand.u32 %v649, 4294901760
    %v768 = vsub.f32 %v649, %v767
    %v769 = vand.u32 %v768, 4294901760
    %v770 = vsub.f32 %v768, %v769
    %v771 = vand.u32 %v770, 4294901760
    %772 = vmatpush1.msra.mxu0 %v771
    %v773 = vand.u32 %v652, 4294901760
    %v774 = vsub.f32 %v652, %v773
    %v775 = vand.u32 %v774, 4294901760
    %v776 = vsub.f32 %v774, %v775
    %v777 = vand.u32 %v776, 4294901760
    %778 = vmatprep.subr.mxu0 %v777
    %v779 = vand.u32 %v651, 4294901760
    %v780 = vsub.f32 %v651, %v779
    %v781 = vand.u32 %v780, 4294901760
    %v782 = vsub.f32 %v780, %v781
    %v783 = vand.u32 %v782, 4294901760
    %784 = vmatpush1.msra.mxu0 %v783
    %v785 = vand.u32 %v654, 4294901760
    %v786 = vsub.f32 %v654, %v785
    %v787 = vand.u32 %v786, 4294901760
    %v788 = vsub.f32 %v786, %v787
    %v789 = vand.u32 %v788, 4294901760
    %790 = vmatprep.subr.mxu0 %v789
    %v791 = vand.u32 %v653, 4294901760
    %v792 = vsub.f32 %v653, %v791
    %v793 = vand.u32 %v792, 4294901760
    %v794 = vsub.f32 %v792, %v793
    %v795 = vand.u32 %v794, 4294901760
    %796 = vmatpush1.msra.mxu0 %v795
    %v797 = vand.u32 %v656, 4294901760
    %v798 = vsub.f32 %v656, %v797
    %v799 = vand.u32 %v798, 4294901760
    %v800 = vsub.f32 %v798, %v799
    %v801 = vand.u32 %v800, 4294901760
    %802 = vmatprep.subr.mxu0 %v801
    %v803 = vand.u32 %v655, 4294901760
    %v804 = vsub.f32 %v655, %v803
    %v805 = vand.u32 %v804, 4294901760
    %v806 = vsub.f32 %v804, %v805
    %v807 = vand.u32 %v806, 4294901760
    %808 = vmatpush1.msra.mxu0 %v807
    %v809 = vand.u32 %v658, 4294901760
    %v810 = vsub.f32 %v658, %v809
    %v811 = vand.u32 %v810, 4294901760
    %v812 = vsub.f32 %v810, %v811
    %v813 = vand.u32 %v812, 4294901760
    %814 = vmatprep.subr.mxu0 %v813
    %v815 = vand.u32 %v657, 4294901760
    %v816 = vsub.f32 %v657, %v815
    %v817 = vand.u32 %v816, 4294901760
    %v818 = vsub.f32 %v816, %v817
    %v819 = vand.u32 %v818, 4294901760
    %820 = vmatpush1.msra.mxu0 %v819
    %v821 = vand.u32 %v660, 4294901760
    %v822 = vsub.f32 %v660, %v821
    %v823 = vand.u32 %v822, 4294901760
    %v824 = vsub.f32 %v822, %v823
    %v825 = vand.u32 %v824, 4294901760
    %826 = vmatprep.subr.mxu0 %v825
    %v827 = vand.u32 %v659, 4294901760
    %v828 = vsub.f32 %v659, %v827
    %v829 = vand.u32 %v828, 4294901760
    %v830 = vsub.f32 %v828, %v829
    %v831 = vand.u32 %v830, 4294901760
    %832 = vmatpush1.msra.mxu0 %v831
    %v833 = vand.u32 %v662, 4294901760
    %v834 = vsub.f32 %v662, %v833
    %v835 = vand.u32 %v834, 4294901760
    %v836 = vsub.f32 %v834, %v835
    %v837 = vand.u32 %v836, 4294901760
    %838 = vmatprep.subr.mxu0 %v837
    %v839 = vand.u32 %v661, 4294901760
    %v840 = vsub.f32 %v661, %v839
    %v841 = vand.u32 %v840, 4294901760
    %v842 = vsub.f32 %v840, %v841
    %v843 = vand.u32 %v842, 4294901760
    %844 = vmatpush1.msra.mxu0 %v843
    %v845 = vand.u32 %v664, 4294901760
    %v846 = vsub.f32 %v664, %v845
    %v847 = vand.u32 %v846, 4294901760
    %v848 = vsub.f32 %v846, %v847
    %v849 = vand.u32 %v848, 4294901760
    %850 = vmatprep.subr.mxu0 %v849
    %v851 = vand.u32 %v663, 4294901760
    %v852 = vsub.f32 %v663, %v851
    %v853 = vand.u32 %v852, 4294901760
    %v854 = vsub.f32 %v852, %v853
    %v855 = vand.u32 %v854, 4294901760
    %856 = vmatpush1.msra.mxu0 %v855
    %857 = vmatprep.subr.mxu0 0.0
    %858 = vmatpush1.msra.mxu0 0.0
    %859 = vmatprep.subr.mxu0 0.0
    %860 = vmatpush1.msra.mxu0 0.0
    %861 = vmatprep.subr.mxu0 0.0
    %862 = vmatpush1.msra.mxu0 0.0
    %863 = vmatprep.subr.mxu0 0.0
    %864 = vmatpush1.msra.mxu0 0.0
    %865 = vmatprep.subr.mxu0 0.0
    %866 = vmatpush1.msra.mxu0 0.0
    %867 = vmatprep.subr.mxu0 0.0
    %868 = vmatpush1.msra.mxu0 0.0
    %869 = vmatprep.subr.mxu0 0.0
    %870 = vmatpush1.msra.mxu0 0.0
    %871 = vmatprep.subr.mxu0 0.0
    %872 = vmatpush1.msra.mxu0 0.0
    %873 = vmatprep.subr.mxu0 0.0
    %874 = vmatpush1.msra.mxu0 0.0
    %875 = vmatprep.subr.mxu0 0.0
    %876 = vmatpush1.msra.mxu0 0.0
    %877 = vmatprep.subr.mxu0 0.0
    %878 = vmatpush1.msra.mxu0 0.0
    %879 = vmatprep.subr.mxu0 0.0
    %880 = vmatpush1.msra.mxu0 0.0
    %881 = vmatprep.subr.mxu0 0.0
    %882 = vmatpush1.msra.mxu0 0.0
    %883 = vmatprep.subr.mxu0 0.0
    %884 = vmatpush1.msra.mxu0 0.0
    %885 = vmatprep.subr.mxu0 0.0
    %886 = vmatpush1.msra.mxu0 0.0
    %887 = vmatprep.subr.mxu0 0.0
    %888 = vmatpush1.msra.mxu0 0.0
    %889 = vmatprep.subr.mxu0 0.0
    %890 = vmatpush1.msra.mxu0 0.0
    %891 = vmatprep.subr.mxu0 0.0
    %892 = vmatpush1.msra.mxu0 0.0
    %893 = vmatprep.subr.mxu0 0.0
    %894 = vmatpush1.msra.mxu0 0.0
    %895 = vmatprep.subr.mxu0 0.0
    %896 = vmatpush1.msra.mxu0 0.0
    %897 = vmatprep.subr.mxu0 0.0
    %898 = vmatpush1.msra.mxu0 0.0
    %899 = vmatprep.subr.mxu0 0.0
    %900 = vmatpush1.msra.mxu0 0.0
    %901 = vmatprep.subr.mxu0 0.0
    %902 = vmatpush1.msra.mxu0 0.0
    %903 = vmatprep.subr.mxu0 0.0
    %904 = vmatpush1.msra.mxu0 0.0
    %905 = vmatprep.mubr.f32.mxu0 0.0
    %v906 = vand.u32 %v667, 4294901760
    %907 = vmatmul.mubr.f32.gmra.mrb[0].mxu0 %v906
    %v908 = vpop.f32.mrb[0].mxu0
    %v909 = vadd.f32 %v757, %v908
    %v910 = vpop.f32.mrb[0].mxu0
    %v911 = vadd.f32 %v759, %v910
    %912 = vdwg.mxu0
    %v913 = vand.u32 %v650, 4294901760
    %v914 = vsub.f32 %v650, %v913
    %915 = vmatprep.subr.mxu0 %v914
    %v916 = vand.u32 %v649, 4294901760
    %v917 = vsub.f32 %v649, %v916
    %918 = vmatpush1.msra.mxu0 %v917
    %v919 = vand.u32 %v652, 4294901760
    %v920 = vsub.f32 %v652, %v919
    %921 = vmatprep.subr.mxu0 %v920
    %v922 = vand.u32 %v651, 4294901760
    %v923 = vsub.f32 %v651, %v922
    %924 = vmatpush1.msra.mxu0 %v923
    %v925 = vand.u32 %v654, 4294901760
    %v926 = vsub.f32 %v654, %v925
    %927 = vmatprep.subr.mxu0 %v926
    %v928 = vand.u32 %v653, 4294901760
    %v929 = vsub.f32 %v653, %v928
    %930 = vmatpush1.msra.mxu0 %v929
    %v931 = vand.u32 %v656, 4294901760
    %v932 = vsub.f32 %v656, %v931
    %933 = vmatprep.subr.mxu0 %v932
    %v934 = vand.u32 %v655, 4294901760
    %v935 = vsub.f32 %v655, %v934
    %936 = vmatpush1.msra.mxu0 %v935
    %v937 = vand.u32 %v658, 4294901760
    %v938 = vsub.f32 %v658, %v937
    %939 = vmatprep.subr.mxu0 %v938
    %v940 = vand.u32 %v657, 4294901760
    %v941 = vsub.f32 %v657, %v940
    %942 = vmatpush1.msra.mxu0 %v941
    %v943 = vand.u32 %v660, 4294901760
    %v944 = vsub.f32 %v660, %v943
    %945 = vmatprep.subr.mxu0 %v944
    %v946 = vand.u32 %v659, 4294901760
    %v947 = vsub.f32 %v659, %v946
    %948 = vmatpush1.msra.mxu0 %v947
    %v949 = vand.u32 %v662, 4294901760
    %v950 = vsub.f32 %v662, %v949
    %951 = vmatprep.subr.mxu0 %v950
    %v952 = vand.u32 %v661, 4294901760
    %v953 = vsub.f32 %v661, %v952
    %954 = vmatpush1.msra.mxu0 %v953
    %v955 = vand.u32 %v664, 4294901760
    %v956 = vsub.f32 %v664, %v955
    %957 = vmatprep.subr.mxu0 %v956
    %v958 = vand.u32 %v663, 4294901760
    %v959 = vsub.f32 %v663, %v958
    %960 = vmatpush1.msra.mxu0 %v959
    %961 = vmatprep.subr.mxu0 0.0
    %962 = vmatpush1.msra.mxu0 0.0
    %963 = vmatprep.subr.mxu0 0.0
    %964 = vmatpush1.msra.mxu0 0.0
    %965 = vmatprep.subr.mxu0 0.0
    %966 = vmatpush1.msra.mxu0 0.0
    %967 = vmatprep.subr.mxu0 0.0
    %968 = vmatpush1.msra.mxu0 0.0
    %969 = vmatprep.subr.mxu0 0.0
    %970 = vmatpush1.msra.mxu0 0.0
    %971 = vmatprep.subr.mxu0 0.0
    %972 = vmatpush1.msra.mxu0 0.0
    %973 = vmatprep.subr.mxu0 0.0
    %974 = vmatpush1.msra.mxu0 0.0
    %975 = vmatprep.subr.mxu0 0.0
    %976 = vmatpush1.msra.mxu0 0.0
    %977 = vmatprep.subr.mxu0 0.0
    %978 = vmatpush1.msra.mxu0 0.0
    %979 = vmatprep.subr.mxu0 0.0
    %980 = vmatpush1.msra.mxu0 0.0
    %981 = vmatprep.subr.mxu0 0.0
    %982 = vmatpush1.msra.mxu0 0.0
    %983 = vmatprep.subr.mxu0 0.0
    %984 = vmatpush1.msra.mxu0 0.0
    %985 = vmatprep.subr.mxu0 0.0
    %986 = vmatpush1.msra.mxu0 0.0
    %987 = vmatprep.subr.mxu0 0.0
    %988 = vmatpush1.msra.mxu0 0.0
    %989 = vmatprep.subr.mxu0 0.0
    %990 = vmatpush1.msra.mxu0 0.0
    %991 = vmatprep.subr.mxu0 0.0
    %992 = vmatpush1.msra.mxu0 0.0
    %993 = vmatprep.subr.mxu0 0.0
    %994 = vmatpush1.msra.mxu0 0.0
    %995 = vmatprep.subr.mxu0 0.0
    %996 = vmatpush1.msra.mxu0 0.0
    %997 = vmatprep.subr.mxu0 0.0
    %998 = vmatpush1.msra.mxu0 0.0
    %999 = vmatprep.subr.mxu0 0.0
    %1000 = vmatpush1.msra.mxu0 0.0
    %1001 = vmatprep.subr.mxu0 0.0
    %1002 = vmatpush1.msra.mxu0 0.0
    %1003 = vmatprep.subr.mxu0 0.0
    %1004 = vmatpush1.msra.mxu0 0.0
    %1005 = vmatprep.subr.mxu0 0.0
    %1006 = vmatpush1.msra.mxu0 0.0
    %1007 = vmatprep.subr.mxu0 0.0
    %1008 = vmatpush1.msra.mxu0 0.0
    %1009 = vmatprep.mubr.f32.mxu0 0.0
    %v1010 = vand.u32 %v667, 4294901760
    %v1011 = vsub.f32 %v667, %v1010
    %1012 = vmatmul.mubr.f32.gmra.mrb[0].mxu0 %v1011
    %v1013 = vpop.f32.mrb[0].mxu0
    %v1014 = vadd.f32 %v909, %v1013
    %v1015 = vpop.f32.mrb[0].mxu0
    %v1016 = vadd.f32 %v911, %v1015
    %1017 = vdwg.mxu0
    %v1018 = vand.u32 %v650, 4294901760
    %1019 = vmatprep.subr.mxu0 %v1018
    %v1020 = vand.u32 %v649, 4294901760
    %1021 = vmatpush1.msra.mxu0 %v1020
    %v1022 = vand.u32 %v652, 4294901760
    %1023 = vmatprep.subr.mxu0 %v1022
    %v1024 = vand.u32 %v651, 4294901760
    %1025 = vmatpush1.msra.mxu0 %v1024
    %v1026 = vand.u32 %v654, 4294901760
    %1027 = vmatprep.subr.mxu0 %v1026
    %v1028 = vand.u32 %v653, 4294901760
    %1029 = vmatpush1.msra.mxu0 %v1028
    %v1030 = vand.u32 %v656, 4294901760
    %1031 = vmatprep.subr.mxu0 %v1030
    %v1032 = vand.u32 %v655, 4294901760
    %1033 = vmatpush1.msra.mxu0 %v1032
    %v1034 = vand.u32 %v658, 4294901760
    %1035 = vmatprep.subr.mxu0 %v1034
    %v1036 = vand.u32 %v657, 4294901760
    %1037 = vmatpush1.msra.mxu0 %v1036
    %v1038 = vand.u32 %v660, 4294901760
    %1039 = vmatprep.subr.mxu0 %v1038
    %v1040 = vand.u32 %v659, 4294901760
    %1041 = vmatpush1.msra.mxu0 %v1040
    %v1042 = vand.u32 %v662, 4294901760
    %1043 = vmatprep.subr.mxu0 %v1042
    %v1044 = vand.u32 %v661, 4294901760
    %1045 = vmatpush1.msra.mxu0 %v1044
    %v1046 = vand.u32 %v664, 4294901760
    %1047 = vmatprep.subr.mxu0 %v1046
    %v1048 = vand.u32 %v663, 4294901760
    %1049 = vmatpush1.msra.mxu0 %v1048
    %1050 = vmatprep.subr.mxu0 0.0
    %1051 = vmatpush1.msra.mxu0 0.0
    %1052 = vmatprep.subr.mxu0 0.0
    %1053 = vmatpush1.msra.mxu0 0.0
    %1054 = vmatprep.subr.mxu0 0.0
    %1055 = vmatpush1.msra.mxu0 0.0
    %1056 = vmatprep.subr.mxu0 0.0
    %1057 = vmatpush1.msra.mxu0 0.0
    %1058 = vmatprep.subr.mxu0 0.0
    %1059 = vmatpush1.msra.mxu0 0.0
    %1060 = vmatprep.subr.mxu0 0.0
    %1061 = vmatpush1.msra.mxu0 0.0
    %1062 = vmatprep.subr.mxu0 0.0
    %1063 = vmatpush1.msra.mxu0 0.0
    %1064 = vmatprep.subr.mxu0 0.0
    %1065 = vmatpush1.msra.mxu0 0.0
    %1066 = vmatprep.subr.mxu0 0.0
    %1067 = vmatpush1.msra.mxu0 0.0
    %1068 = vmatprep.subr.mxu0 0.0
    %1069 = vmatpush1.msra.mxu0 0.0
    %1070 = vmatprep.subr.mxu0 0.0
    %1071 = vmatpush1.msra.mxu0 0.0
    %1072 = vmatprep.subr.mxu0 0.0
    %1073 = vmatpush1.msra.mxu0 0.0
    %1074 = vmatprep.subr.mxu0 0.0
    %1075 = vmatpush1.msra.mxu0 0.0
    %1076 = vmatprep.subr.mxu0 0.0
    %1077 = vmatpush1.msra.mxu0 0.0
    %1078 = vmatprep.subr.mxu0 0.0
    %1079 = vmatpush1.msra.mxu0 0.0
    %1080 = vmatprep.subr.mxu0 0.0
    %1081 = vmatpush1.msra.mxu0 0.0
    %1082 = vmatprep.subr.mxu0 0.0
    %1083 = vmatpush1.msra.mxu0 0.0
    %1084 = vmatprep.subr.mxu0 0.0
    %1085 = vmatpush1.msra.mxu0 0.0
    %1086 = vmatprep.subr.mxu0 0.0
    %1087 = vmatpush1.msra.mxu0 0.0
    %1088 = vmatprep.subr.mxu0 0.0
    %1089 = vmatpush1.msra.mxu0 0.0
    %1090 = vmatprep.subr.mxu0 0.0
    %1091 = vmatpush1.msra.mxu0 0.0
    %1092 = vmatprep.subr.mxu0 0.0
    %1093 = vmatpush1.msra.mxu0 0.0
    %1094 = vmatprep.subr.mxu0 0.0
    %1095 = vmatpush1.msra.mxu0 0.0
    %1096 = vmatprep.subr.mxu0 0.0
    %1097 = vmatpush1.msra.mxu0 0.0
    %1098 = vmatprep.mubr.f32.mxu0 0.0
    %v1099 = vand.u32 %v667, 4294901760
    %v1100 = vsub.f32 %v667, %v1099
    %v1101 = vand.u32 %v1100, 4294901760
    %1102 = vmatmul.mubr.f32.gmra.mrb[0].mxu0 %v1101
    %v1103 = vpop.f32.mrb[0].mxu0
    %v1104 = vadd.f32 %v1014, %v1103
    %v1105 = vpop.f32.mrb[0].mxu0
    %v1106 = vadd.f32 %v1016, %v1105
    %1107 = vdwg.mxu0
    %v1108 = vand.u32 %v650, 4294901760
    %v1109 = vsub.f32 %v650, %v1108
    %v1110 = vand.u32 %v1109, 4294901760
    %1111 = vmatprep.subr.mxu0 %v1110
    %v1112 = vand.u32 %v649, 4294901760
    %v1113 = vsub.f32 %v649, %v1112
    %v1114 = vand.u32 %v1113, 4294901760
    %1115 = vmatpush1.msra.mxu0 %v1114
    %v1116 = vand.u32 %v652, 4294901760
    %v1117 = vsub.f32 %v652, %v1116
    %v1118 = vand.u32 %v1117, 4294901760
    %1119 = vmatprep.subr.mxu0 %v1118
    %v1120 = vand.u32 %v651, 4294901760
    %v1121 = vsub.f32 %v651, %v1120
    %v1122 = vand.u32 %v1121, 4294901760
    %1123 = vmatpush1.msra.mxu0 %v1122
    %v1124 = vand.u32 %v654, 4294901760
    %v1125 = vsub.f32 %v654, %v1124
    %v1126 = vand.u32 %v1125, 4294901760
    %1127 = vmatprep.subr.mxu0 %v1126
    %v1128 = vand.u32 %v653, 4294901760
    %v1129 = vsub.f32 %v653, %v1128
    %v1130 = vand.u32 %v1129, 4294901760
    %1131 = vmatpush1.msra.mxu0 %v1130
    %v1132 = vand.u32 %v656, 4294901760
    %v1133 = vsub.f32 %v656, %v1132
    %v1134 = vand.u32 %v1133, 4294901760
    %1135 = vmatprep.subr.mxu0 %v1134
    %v1136 = vand.u32 %v655, 4294901760
    %v1137 = vsub.f32 %v655, %v1136
    %v1138 = vand.u32 %v1137, 4294901760
    %1139 = vmatpush1.msra.mxu0 %v1138
    %v1140 = vand.u32 %v658, 4294901760
    %v1141 = vsub.f32 %v658, %v1140
    %v1142 = vand.u32 %v1141, 4294901760
    %1143 = vmatprep.subr.mxu0 %v1142
    %v1144 = vand.u32 %v657, 4294901760
    %v1145 = vsub.f32 %v657, %v1144
    %v1146 = vand.u32 %v1145, 4294901760
    %1147 = vmatpush1.msra.mxu0 %v1146
    %v1148 = vand.u32 %v660, 4294901760
    %v1149 = vsub.f32 %v660, %v1148
    %v1150 = vand.u32 %v1149, 4294901760
    %1151 = vmatprep.subr.mxu0 %v1150
    %v1152 = vand.u32 %v659, 4294901760
    %v1153 = vsub.f32 %v659, %v1152
    %v1154 = vand.u32 %v1153, 4294901760
    %1155 = vmatpush1.msra.mxu0 %v1154
    %v1156 = vand.u32 %v662, 4294901760
    %v1157 = vsub.f32 %v662, %v1156
    %v1158 = vand.u32 %v1157, 4294901760
    %1159 = vmatprep.subr.mxu0 %v1158
    %v1160 = vand.u32 %v661, 4294901760
    %v1161 = vsub.f32 %v661, %v1160
    %v1162 = vand.u32 %v1161, 4294901760
    %1163 = vmatpush1.msra.mxu0 %v1162
    %v1164 = vand.u32 %v664, 4294901760
    %v1165 = vsub.f32 %v664, %v1164
    %v1166 = vand.u32 %v1165, 4294901760
    %1167 = vmatprep.subr.mxu0 %v1166
    %v1168 = vand.u32 %v663, 4294901760
    %v1169 = vsub.f32 %v663, %v1168
    %v1170 = vand.u32 %v1169, 4294901760
    %1171 = vmatpush1.msra.mxu0 %v1170
    %1172 = vmatprep.subr.mxu0 0.0
    %1173 = vmatpush1.msra.mxu0 0.0
    %1174 = vmatprep.subr.mxu0 0.0
    %1175 = vmatpush1.msra.mxu0 0.0
    %1176 = vmatprep.subr.mxu0 0.0
    %1177 = vmatpush1.msra.mxu0 0.0
    %1178 = vmatprep.subr.mxu0 0.0
    %1179 = vmatpush1.msra.mxu0 0.0
    %1180 = vmatprep.subr.mxu0 0.0
    %1181 = vmatpush1.msra.mxu0 0.0
    %1182 = vmatprep.subr.mxu0 0.0
    %1183 = vmatpush1.msra.mxu0 0.0
    %1184 = vmatprep.subr.mxu0 0.0
    %1185 = vmatpush1.msra.mxu0 0.0
    %1186 = vmatprep.subr.mxu0 0.0
    %1187 = vmatpush1.msra.mxu0 0.0
    %1188 = vmatprep.subr.mxu0 0.0
    %1189 = vmatpush1.msra.mxu0 0.0
    %1190 = vmatprep.subr.mxu0 0.0
    %1191 = vmatpush1.msra.mxu0 0.0
    %1192 = vmatprep.subr.mxu0 0.0
    %1193 = vmatpush1.msra.mxu0 0.0
    %1194 = vmatprep.subr.mxu0 0.0
    %1195 = vmatpush1.msra.mxu0 0.0
    %1196 = vmatprep.subr.mxu0 0.0
    %1197 = vmatpush1.msra.mxu0 0.0
    %1198 = vmatprep.subr.mxu0 0.0
    %1199 = vmatpush1.msra.mxu0 0.0
    %1200 = vmatprep.subr.mxu0 0.0
    %1201 = vmatpush1.msra.mxu0 0.0
    %1202 = vmatprep.subr.mxu0 0.0
    %1203 = vmatpush1.msra.mxu0 0.0
    %1204 = vmatprep.subr.mxu0 0.0
    %1205 = vmatpush1.msra.mxu0 0.0
    %1206 = vmatprep.subr.mxu0 0.0
    %1207 = vmatpush1.msra.mxu0 0.0
    %1208 = vmatprep.subr.mxu0 0.0
    %1209 = vmatpush1.msra.mxu0 0.0
    %1210 = vmatprep.subr.mxu0 0.0
    %1211 = vmatpush1.msra.mxu0 0.0
    %1212 = vmatprep.subr.mxu0 0.0
    %1213 = vmatpush1.msra.mxu0 0.0
    %1214 = vmatprep.subr.mxu0 0.0
    %1215 = vmatpush1.msra.mxu0 0.0
    %1216 = vmatprep.subr.mxu0 0.0
    %1217 = vmatpush1.msra.mxu0 0.0
    %1218 = vmatprep.subr.mxu0 0.0
    %1219 = vmatpush1.msra.mxu0 0.0
    %1220 = vmatprep.mubr.f32.mxu0 0.0
    %v1221 = vand.u32 %v667, 4294901760
    %1222 = vmatmul.mubr.f32.gmra.mrb[0].mxu0 %v1221
    %v1223 = vpop.f32.mrb[0].mxu0
    %v1224 = vadd.f32 %v1104, %v1223
    %v1225 = vpop.f32.mrb[0].mxu0
    %v1226 = vadd.f32 %v1106, %v1225
    %1227 = vdwg.mxu0
    %v1228 = vand.u32 %v650, 4294901760
    %1229 = vmatprep.subr.mxu0 %v1228
    %v1230 = vand.u32 %v649, 4294901760
    %1231 = vmatpush1.msra.mxu0 %v1230
    %v1232 = vand.u32 %v652, 4294901760
    %1233 = vmatprep.subr.mxu0 %v1232
    %v1234 = vand.u32 %v651, 4294901760
    %1235 = vmatpush1.msra.mxu0 %v1234
    %v1236 = vand.u32 %v654, 4294901760
    %1237 = vmatprep.subr.mxu0 %v1236
    %v1238 = vand.u32 %v653, 4294901760
    %1239 = vmatpush1.msra.mxu0 %v1238
    %v1240 = vand.u32 %v656, 4294901760
    %1241 = vmatprep.subr.mxu0 %v1240
    %v1242 = vand.u32 %v655, 4294901760
    %1243 = vmatpush1.msra.mxu0 %v1242
    %v1244 = vand.u32 %v658, 4294901760
    %1245 = vmatprep.subr.mxu0 %v1244
    %v1246 = vand.u32 %v657, 4294901760
    %1247 = vmatpush1.msra.mxu0 %v1246
    %v1248 = vand.u32 %v660, 4294901760
    %1249 = vmatprep.subr.mxu0 %v1248
    %v1250 = vand.u32 %v659, 4294901760
    %1251 = vmatpush1.msra.mxu0 %v1250
    %v1252 = vand.u32 %v662, 4294901760
    %1253 = vmatprep.subr.mxu0 %v1252
    %v1254 = vand.u32 %v661, 4294901760
    %1255 = vmatpush1.msra.mxu0 %v1254
    %v1256 = vand.u32 %v664, 4294901760
    %1257 = vmatprep.subr.mxu0 %v1256
    %v1258 = vand.u32 %v663, 4294901760
    %1259 = vmatpush1.msra.mxu0 %v1258
    %1260 = vmatprep.subr.mxu0 0.0
    %1261 = vmatpush1.msra.mxu0 0.0
    %1262 = vmatprep.subr.mxu0 0.0
    %1263 = vmatpush1.msra.mxu0 0.0
    %1264 = vmatprep.subr.mxu0 0.0
    %1265 = vmatpush1.msra.mxu0 0.0
    %1266 = vmatprep.subr.mxu0 0.0
    %1267 = vmatpush1.msra.mxu0 0.0
    %1268 = vmatprep.subr.mxu0 0.0
    %1269 = vmatpush1.msra.mxu0 0.0
    %1270 = vmatprep.subr.mxu0 0.0
    %1271 = vmatpush1.msra.mxu0 0.0
    %1272 = vmatprep.subr.mxu0 0.0
    %1273 = vmatpush1.msra.mxu0 0.0
    %1274 = vmatprep.subr.mxu0 0.0
    %1275 = vmatpush1.msra.mxu0 0.0
    %1276 = vmatprep.subr.mxu0 0.0
    %1277 = vmatpush1.msra.mxu0 0.0
    %1278 = vmatprep.subr.mxu0 0.0
    %1279 = vmatpush1.msra.mxu0 0.0
    %1280 = vmatprep.subr.mxu0 0.0
    %1281 = vmatpush1.msra.mxu0 0.0
    %1282 = vmatprep.subr.mxu0 0.0
    %1283 = vmatpush1.msra.mxu0 0.0
    %1284 = vmatprep.subr.mxu0 0.0
    %1285 = vmatpush1.msra.mxu0 0.0
    %1286 = vmatprep.subr.mxu0 0.0
    %1287 = vmatpush1.msra.mxu0 0.0
    %1288 = vmatprep.subr.mxu0 0.0
    %1289 = vmatpush1.msra.mxu0 0.0
    %1290 = vmatprep.subr.mxu0 0.0
    %1291 = vmatpush1.msra.mxu0 0.0
    %1292 = vmatprep.subr.mxu0 0.0
    %1293 = vmatpush1.msra.mxu0 0.0
    %1294 = vmatprep.subr.mxu0 0.0
    %1295 = vmatpush1.msra.mxu0 0.0
    %1296 = vmatprep.subr.mxu0 0.0
    %1297 = vmatpush1.msra.mxu0 0.0
    %1298 = vmatprep.subr.mxu0 0.0
    %1299 = vmatpush1.msra.mxu0 0.0
    %1300 = vmatprep.subr.mxu0 0.0
    %1301 = vmatpush1.msra.mxu0 0.0
    %1302 = vmatprep.subr.mxu0 0.0
    %1303 = vmatpush1.msra.mxu0 0.0
    %1304 = vmatprep.subr.mxu0 0.0
    %1305 = vmatpush1.msra.mxu0 0.0
    %1306 = vmatprep.subr.mxu0 0.0
    %1307 = vmatpush1.msra.mxu0 0.0
    %1308 = vmatprep.mubr.f32.mxu0 0.0
    %v1309 = vand.u32 %v667, 4294901760
    %1310 = vmatmul.mubr.f32.gmra.mrb[0].mxu0 %v1309
    %v1311 = vpop.f32.mrb[0].mxu0
    %v1312 = vadd.f32 %v1224, %v1311
    %v1313 = vpop.f32.mrb[0].mxu0
    %v1314 = vadd.f32 %v1226, %v1313
    %1315 = vdwg.mxu0
    %v1318 = vrot.slane %v1312, 6
    %v1319 = vrot.slane %v1314, 6
    %v1322 = vadd.f32 %v609, %v1318
    %v1323 = vadd.f32 %v611, %v1319
    %v1324 = vxor.u32 %v1322, 2147483648
    %v1325 = vmul.f32 %v1324, 1.442695
    %v1326 = vpow.pop %v1325
    %v1327 = vadd.f32 %v1326, 1.0
    %v1328 = vrcp.pop %v1327
    %v1329 = vmul.f32 1.0, %v1328
    %1331 = vrot.lane.b32.xlu0 %v1323, 64
    %v1332 = vpop.permute.xlu0 %1331
    %v1334 = vmul.f32 %v1329, %v1332
    %v1335 = vadd.f32 %v1323, %v1334
    %v1336 = vtanh.pop %v1335
    %v1337 = vsub.f32 1.0, %v1329
    %1339 = vrot.lane.b32.xlu0 %v1336, 64
    %v1340 = vpop.permute.xlu0 %1339
    %v1342 = vmul.f32 %v1337, %v1340
    %v1343 = vrot.slane %v648, 6
    %1344 = vrot.lane.b32.xlu0 %v1343, 64
    %v1345 = vpop.permute.xlu0 %1344
    %v1347 = vmul.f32 %v1329, %v1345
    %v1348 = vadd.f32 %v1342, %v1347
    %v1350 = vrot.slane %v1348, 2
    %1351 = vrot.lane.b32.xlu0 %v1350, 64
    %v1352 = vpop.permute.xlu0 %1351
    %v1353 = vsel %vm665, %v1352, 0
    %v1355 = vand.u32 %v650, 4294901760
    %1356 = vmatprep.subr.mxu0 %v1355
    %v1357 = vand.u32 %v649, 4294901760
    %1358 = vmatpush1.msra.mxu0 %v1357
    %v1359 = vand.u32 %v652, 4294901760
    %1360 = vmatprep.subr.mxu0 %v1359
    %v1361 = vand.u32 %v651, 4294901760
    %1362 = vmatpush1.msra.mxu0 %v1361
    %v1363 = vand.u32 %v654, 4294901760
    %1364 = vmatprep.subr.mxu0 %v1363
    %v1365 = vand.u32 %v653, 4294901760
    %1366 = vmatpush1.msra.mxu0 %v1365
    %v1367 = vand.u32 %v656, 4294901760
    %1368 = vmatprep.subr.mxu0 %v1367
    %v1369 = vand.u32 %v655, 4294901760
    %1370 = vmatpush1.msra.mxu0 %v1369
    %v1371 = vand.u32 %v658, 4294901760
    %1372 = vmatprep.subr.mxu0 %v1371
    %v1373 = vand.u32 %v657, 4294901760
    %1374 = vmatpush1.msra.mxu0 %v1373
    %v1375 = vand.u32 %v660, 4294901760
    %1376 = vmatprep.subr.mxu0 %v1375
    %v1377 = vand.u32 %v659, 4294901760
    %1378 = vmatpush1.msra.mxu0 %v1377
    %v1379 = vand.u32 %v662, 4294901760
    %1380 = vmatprep.subr.mxu0 %v1379
    %v1381 = vand.u32 %v661, 4294901760
    %1382 = vmatpush1.msra.mxu0 %v1381
    %v1383 = vand.u32 %v664, 4294901760
    %1384 = vmatprep.subr.mxu0 %v1383
    %v1385 = vand.u32 %v663, 4294901760
    %1386 = vmatpush1.msra.mxu0 %v1385
    %1387 = vmatprep.subr.mxu0 0.0
    %1388 = vmatpush1.msra.mxu0 0.0
    %1389 = vmatprep.subr.mxu0 0.0
    %1390 = vmatpush1.msra.mxu0 0.0
    %1391 = vmatprep.subr.mxu0 0.0
    %1392 = vmatpush1.msra.mxu0 0.0
    %1393 = vmatprep.subr.mxu0 0.0
    %1394 = vmatpush1.msra.mxu0 0.0
    %1395 = vmatprep.subr.mxu0 0.0
    %1396 = vmatpush1.msra.mxu0 0.0
    %1397 = vmatprep.subr.mxu0 0.0
    %1398 = vmatpush1.msra.mxu0 0.0
    %1399 = vmatprep.subr.mxu0 0.0
    %1400 = vmatpush1.msra.mxu0 0.0
    %1401 = vmatprep.subr.mxu0 0.0
    %1402 = vmatpush1.msra.mxu0 0.0
    %1403 = vmatprep.subr.mxu0 0.0
    %1404 = vmatpush1.msra.mxu0 0.0
    %1405 = vmatprep.subr.mxu0 0.0
    %1406 = vmatpush1.msra.mxu0 0.0
    %1407 = vmatprep.subr.mxu0 0.0
    %1408 = vmatpush1.msra.mxu0 0.0
    %1409 = vmatprep.subr.mxu0 0.0
    %1410 = vmatpush1.msra.mxu0 0.0
    %1411 = vmatprep.subr.mxu0 0.0
    %1412 = vmatpush1.msra.mxu0 0.0
    %1413 = vmatprep.subr.mxu0 0.0
    %1414 = vmatpush1.msra.mxu0 0.0
    %1415 = vmatprep.subr.mxu0 0.0
    %1416 = vmatpush1.msra.mxu0 0.0
    %1417 = vmatprep.subr.mxu0 0.0
    %1418 = vmatpush1.msra.mxu0 0.0
    %1419 = vmatprep.subr.mxu0 0.0
    %1420 = vmatpush1.msra.mxu0 0.0
    %1421 = vmatprep.subr.mxu0 0.0
    %1422 = vmatpush1.msra.mxu0 0.0
    %1423 = vmatprep.subr.mxu0 0.0
    %1424 = vmatpush1.msra.mxu0 0.0
    %1425 = vmatprep.subr.mxu0 0.0
    %1426 = vmatpush1.msra.mxu0 0.0
    %1427 = vmatprep.subr.mxu0 0.0
    %1428 = vmatpush1.msra.mxu0 0.0
    %1429 = vmatprep.subr.mxu0 0.0
    %1430 = vmatpush1.msra.mxu0 0.0
    %1431 = vmatprep.subr.mxu0 0.0
    %1432 = vmatpush1.msra.mxu0 0.0
    %1433 = vmatprep.subr.mxu0 0.0
    %1434 = vmatpush1.msra.mxu0 0.0
    %1435 = vmatprep.mubr.f32.mxu0 0.0
    %v1436 = vand.u32 %v1353, 4294901760
    %v1437 = vsub.f32 %v1353, %v1436
    %v1438 = vand.u32 %v1437, 4294901760
    %v1439 = vsub.f32 %v1437, %v1438
    %v1440 = vand.u32 %v1439, 4294901760
    %1441 = vmatmul.mubr.f32.gmra.mrb[0].mxu0 %v1440
    %v1442 = vpop.f32.mrb[0].mxu0
    %v1443 = vadd.f32 0.0, %v1442
    %v1444 = vpop.f32.mrb[0].mxu0
    %v1445 = vadd.f32 0.0, %v1444
    %1446 = vdwg.mxu0
    %v1447 = vand.u32 %v650, 4294901760
    %v1448 = vsub.f32 %v650, %v1447
    %v1449 = vand.u32 %v1448, 4294901760
    %v1450 = vsub.f32 %v1448, %v1449
    %v1451 = vand.u32 %v1450, 4294901760
    %1452 = vmatprep.subr.mxu0 %v1451
    %v1453 = vand.u32 %v649, 4294901760
    %v1454 = vsub.f32 %v649, %v1453
    %v1455 = vand.u32 %v1454, 4294901760
    %v1456 = vsub.f32 %v1454, %v1455
    %v1457 = vand.u32 %v1456, 4294901760
    %1458 = vmatpush1.msra.mxu0 %v1457
    %v1459 = vand.u32 %v652, 4294901760
    %v1460 = vsub.f32 %v652, %v1459
    %v1461 = vand.u32 %v1460, 4294901760
    %v1462 = vsub.f32 %v1460, %v1461
    %v1463 = vand.u32 %v1462, 4294901760
    %1464 = vmatprep.subr.mxu0 %v1463
    %v1465 = vand.u32 %v651, 4294901760
    %v1466 = vsub.f32 %v651, %v1465
    %v1467 = vand.u32 %v1466, 4294901760
    %v1468 = vsub.f32 %v1466, %v1467
    %v1469 = vand.u32 %v1468, 4294901760
    %1470 = vmatpush1.msra.mxu0 %v1469
    %v1471 = vand.u32 %v654, 4294901760
    %v1472 = vsub.f32 %v654, %v1471
    %v1473 = vand.u32 %v1472, 4294901760
    %v1474 = vsub.f32 %v1472, %v1473
    %v1475 = vand.u32 %v1474, 4294901760
    %1476 = vmatprep.subr.mxu0 %v1475
    %v1477 = vand.u32 %v653, 4294901760
    %v1478 = vsub.f32 %v653, %v1477
    %v1479 = vand.u32 %v1478, 4294901760
    %v1480 = vsub.f32 %v1478, %v1479
    %v1481 = vand.u32 %v1480, 4294901760
    %1482 = vmatpush1.msra.mxu0 %v1481
    %v1483 = vand.u32 %v656, 4294901760
    %v1484 = vsub.f32 %v656, %v1483
    %v1485 = vand.u32 %v1484, 4294901760
    %v1486 = vsub.f32 %v1484, %v1485
    %v1487 = vand.u32 %v1486, 4294901760
    %1488 = vmatprep.subr.mxu0 %v1487
    %v1489 = vand.u32 %v655, 4294901760
    %v1490 = vsub.f32 %v655, %v1489
    %v1491 = vand.u32 %v1490, 4294901760
    %v1492 = vsub.f32 %v1490, %v1491
    %v1493 = vand.u32 %v1492, 4294901760
    %1494 = vmatpush1.msra.mxu0 %v1493
    %v1495 = vand.u32 %v658, 4294901760
    %v1496 = vsub.f32 %v658, %v1495
    %v1497 = vand.u32 %v1496, 4294901760
    %v1498 = vsub.f32 %v1496, %v1497
    %v1499 = vand.u32 %v1498, 4294901760
    %1500 = vmatprep.subr.mxu0 %v1499
    %v1501 = vand.u32 %v657, 4294901760
    %v1502 = vsub.f32 %v657, %v1501
    %v1503 = vand.u32 %v1502, 4294901760
    %v1504 = vsub.f32 %v1502, %v1503
    %v1505 = vand.u32 %v1504, 4294901760
    %1506 = vmatpush1.msra.mxu0 %v1505
    %v1507 = vand.u32 %v660, 4294901760
    %v1508 = vsub.f32 %v660, %v1507
    %v1509 = vand.u32 %v1508, 4294901760
    %v1510 = vsub.f32 %v1508, %v1509
    %v1511 = vand.u32 %v1510, 4294901760
    %1512 = vmatprep.subr.mxu0 %v1511
    %v1513 = vand.u32 %v659, 4294901760
    %v1514 = vsub.f32 %v659, %v1513
    %v1515 = vand.u32 %v1514, 4294901760
    %v1516 = vsub.f32 %v1514, %v1515
    %v1517 = vand.u32 %v1516, 4294901760
    %1518 = vmatpush1.msra.mxu0 %v1517
    %v1519 = vand.u32 %v662, 4294901760
    %v1520 = vsub.f32 %v662, %v1519
    %v1521 = vand.u32 %v1520, 4294901760
    %v1522 = vsub.f32 %v1520, %v1521
    %v1523 = vand.u32 %v1522, 4294901760
    %1524 = vmatprep.subr.mxu0 %v1523
    %v1525 = vand.u32 %v661, 4294901760
    %v1526 = vsub.f32 %v661, %v1525
    %v1527 = vand.u32 %v1526, 4294901760
    %v1528 = vsub.f32 %v1526, %v1527
    %v1529 = vand.u32 %v1528, 4294901760
    %1530 = vmatpush1.msra.mxu0 %v1529
    %v1531 = vand.u32 %v664, 4294901760
    %v1532 = vsub.f32 %v664, %v1531
    %v1533 = vand.u32 %v1532, 4294901760
    %v1534 = vsub.f32 %v1532, %v1533
    %v1535 = vand.u32 %v1534, 4294901760
    %1536 = vmatprep.subr.mxu0 %v1535
    %v1537 = vand.u32 %v663, 4294901760
    %v1538 = vsub.f32 %v663, %v1537
    %v1539 = vand.u32 %v1538, 4294901760
    %v1540 = vsub.f32 %v1538, %v1539
    %v1541 = vand.u32 %v1540, 4294901760
    %1542 = vmatpush1.msra.mxu0 %v1541
    %1543 = vmatprep.subr.mxu0 0.0
    %1544 = vmatpush1.msra.mxu0 0.0
    %1545 = vmatprep.subr.mxu0 0.0
    %1546 = vmatpush1.msra.mxu0 0.0
    %1547 = vmatprep.subr.mxu0 0.0
    %1548 = vmatpush1.msra.mxu0 0.0
    %1549 = vmatprep.subr.mxu0 0.0
    %1550 = vmatpush1.msra.mxu0 0.0
    %1551 = vmatprep.subr.mxu0 0.0
    %1552 = vmatpush1.msra.mxu0 0.0
    %1553 = vmatprep.subr.mxu0 0.0
    %1554 = vmatpush1.msra.mxu0 0.0
    %1555 = vmatprep.subr.mxu0 0.0
    %1556 = vmatpush1.msra.mxu0 0.0
    %1557 = vmatprep.subr.mxu0 0.0
    %1558 = vmatpush1.msra.mxu0 0.0
    %1559 = vmatprep.subr.mxu0 0.0
    %1560 = vmatpush1.msra.mxu0 0.0
    %1561 = vmatprep.subr.mxu0 0.0
    %1562 = vmatpush1.msra.mxu0 0.0
    %1563 = vmatprep.subr.mxu0 0.0
    %1564 = vmatpush1.msra.mxu0 0.0
    %1565 = vmatprep.subr.mxu0 0.0
    %1566 = vmatpush1.msra.mxu0 0.0
    %1567 = vmatprep.subr.mxu0 0.0
    %1568 = vmatpush1.msra.mxu0 0.0
    %1569 = vmatprep.subr.mxu0 0.0
    %1570 = vmatpush1.msra.mxu0 0.0
    %1571 = vmatprep.subr.mxu0 0.0
    %1572 = vmatpush1.msra.mxu0 0.0
    %1573 = vmatprep.subr.mxu0 0.0
    %1574 = vmatpush1.msra.mxu0 0.0
    %1575 = vmatprep.subr.mxu0 0.0
    %1576 = vmatpush1.msra.mxu0 0.0
    %1577 = vmatprep.subr.mxu0 0.0
    %1578 = vmatpush1.msra.mxu0 0.0
    %1579 = vmatprep.subr.mxu0 0.0
    %1580 = vmatpush1.msra.mxu0 0.0
    %1581 = vmatprep.subr.mxu0 0.0
    %1582 = vmatpush1.msra.mxu0 0.0
    %1583 = vmatprep.subr.mxu0 0.0
    %1584 = vmatpush1.msra.mxu0 0.0
    %1585 = vmatprep.subr.mxu0 0.0
    %1586 = vmatpush1.msra.mxu0 0.0
    %1587 = vmatprep.subr.mxu0 0.0
    %1588 = vmatpush1.msra.mxu0 0.0
    %1589 = vmatprep.subr.mxu0 0.0
    %1590 = vmatpush1.msra.mxu0 0.0
    %1591 = vmatprep.mubr.f32.mxu0 0.0
    %v1592 = vand.u32 %v1353, 4294901760
    %1593 = vmatmul.mubr.f32.gmra.mrb[0].mxu0 %v1592
    %v1594 = vpop.f32.mrb[0].mxu0
    %v1595 = vadd.f32 %v1443, %v1594
    %v1596 = vpop.f32.mrb[0].mxu0
    %v1597 = vadd.f32 %v1445, %v1596
    %1598 = vdwg.mxu0
    %v1599 = vand.u32 %v650, 4294901760
    %v1600 = vsub.f32 %v650, %v1599
    %1601 = vmatprep.subr.mxu0 %v1600
    %v1602 = vand.u32 %v649, 4294901760
    %v1603 = vsub.f32 %v649, %v1602
    %1604 = vmatpush1.msra.mxu0 %v1603
    %v1605 = vand.u32 %v652, 4294901760
    %v1606 = vsub.f32 %v652, %v1605
    %1607 = vmatprep.subr.mxu0 %v1606
    %v1608 = vand.u32 %v651, 4294901760
    %v1609 = vsub.f32 %v651, %v1608
    %1610 = vmatpush1.msra.mxu0 %v1609
    %v1611 = vand.u32 %v654, 4294901760
    %v1612 = vsub.f32 %v654, %v1611
    %1613 = vmatprep.subr.mxu0 %v1612
    %v1614 = vand.u32 %v653, 4294901760
    %v1615 = vsub.f32 %v653, %v1614
    %1616 = vmatpush1.msra.mxu0 %v1615
    %v1617 = vand.u32 %v656, 4294901760
    %v1618 = vsub.f32 %v656, %v1617
    %1619 = vmatprep.subr.mxu0 %v1618
    %v1620 = vand.u32 %v655, 4294901760
    %v1621 = vsub.f32 %v655, %v1620
    %1622 = vmatpush1.msra.mxu0 %v1621
    %v1623 = vand.u32 %v658, 4294901760
    %v1624 = vsub.f32 %v658, %v1623
    %1625 = vmatprep.subr.mxu0 %v1624
    %v1626 = vand.u32 %v657, 4294901760
    %v1627 = vsub.f32 %v657, %v1626
    %1628 = vmatpush1.msra.mxu0 %v1627
    %v1629 = vand.u32 %v660, 4294901760
    %v1630 = vsub.f32 %v660, %v1629
    %1631 = vmatprep.subr.mxu0 %v1630
    %v1632 = vand.u32 %v659, 4294901760
    %v1633 = vsub.f32 %v659, %v1632
    %1634 = vmatpush1.msra.mxu0 %v1633
    %v1635 = vand.u32 %v662, 4294901760
    %v1636 = vsub.f32 %v662, %v1635
    %1637 = vmatprep.subr.mxu0 %v1636
    %v1638 = vand.u32 %v661, 4294901760
    %v1639 = vsub.f32 %v661, %v1638
    %1640 = vmatpush1.msra.mxu0 %v1639
    %v1641 = vand.u32 %v664, 4294901760
    %v1642 = vsub.f32 %v664, %v1641
    %1643 = vmatprep.subr.mxu0 %v1642
    %v1644 = vand.u32 %v663, 4294901760
    %v1645 = vsub.f32 %v663, %v1644
    %1646 = vmatpush1.msra.mxu0 %v1645
    %1647 = vmatprep.subr.mxu0 0.0
    %1648 = vmatpush1.msra.mxu0 0.0
    %1649 = vmatprep.subr.mxu0 0.0
    %1650 = vmatpush1.msra.mxu0 0.0
    %1651 = vmatprep.subr.mxu0 0.0
    %1652 = vmatpush1.msra.mxu0 0.0
    %1653 = vmatprep.subr.mxu0 0.0
    %1654 = vmatpush1.msra.mxu0 0.0
    %1655 = vmatprep.subr.mxu0 0.0
    %1656 = vmatpush1.msra.mxu0 0.0
    %1657 = vmatprep.subr.mxu0 0.0
    %1658 = vmatpush1.msra.mxu0 0.0
    %1659 = vmatprep.subr.mxu0 0.0
    %1660 = vmatpush1.msra.mxu0 0.0
    %1661 = vmatprep.subr.mxu0 0.0
    %1662 = vmatpush1.msra.mxu0 0.0
    %1663 = vmatprep.subr.mxu0 0.0
    %1664 = vmatpush1.msra.mxu0 0.0
    %1665 = vmatprep.subr.mxu0 0.0
    %1666 = vmatpush1.msra.mxu0 0.0
    %1667 = vmatprep.subr.mxu0 0.0
    %1668 = vmatpush1.msra.mxu0 0.0
    %1669 = vmatprep.subr.mxu0 0.0
    %1670 = vmatpush1.msra.mxu0 0.0
    %1671 = vmatprep.subr.mxu0 0.0
    %1672 = vmatpush1.msra.mxu0 0.0
    %1673 = vmatprep.subr.mxu0 0.0
    %1674 = vmatpush1.msra.mxu0 0.0
    %1675 = vmatprep.subr.mxu0 0.0
    %1676 = vmatpush1.msra.mxu0 0.0
    %1677 = vmatprep.subr.mxu0 0.0
    %1678 = vmatpush1.msra.mxu0 0.0
    %1679 = vmatprep.subr.mxu0 0.0
    %1680 = vmatpush1.msra.mxu0 0.0
    %1681 = vmatprep.subr.mxu0 0.0
    %1682 = vmatpush1.msra.mxu0 0.0
    %1683 = vmatprep.subr.mxu0 0.0
    %1684 = vmatpush1.msra.mxu0 0.0
    %1685 = vmatprep.subr.mxu0 0.0
    %1686 = vmatpush1.msra.mxu0 0.0
    %1687 = vmatprep.subr.mxu0 0.0
    %1688 = vmatpush1.msra.mxu0 0.0
    %1689 = vmatprep.subr.mxu0 0.0
    %1690 = vmatpush1.msra.mxu0 0.0
    %1691 = vmatprep.subr.mxu0 0.0
    %1692 = vmatpush1.msra.mxu0 0.0
    %1693 = vmatprep.subr.mxu0 0.0
    %1694 = vmatpush1.msra.mxu0 0.0
    %1695 = vmatprep.mubr.f32.mxu0 0.0
    %v1696 = vand.u32 %v1353, 4294901760
    %v1697 = vsub.f32 %v1353, %v1696
    %1698 = vmatmul.mubr.f32.gmra.mrb[0].mxu0 %v1697
    %v1699 = vpop.f32.mrb[0].mxu0
    %v1700 = vadd.f32 %v1595, %v1699
    %v1701 = vpop.f32.mrb[0].mxu0
    %v1702 = vadd.f32 %v1597, %v1701
    %1703 = vdwg.mxu0
    %v1704 = vand.u32 %v650, 4294901760
    %1705 = vmatprep.subr.mxu0 %v1704
    %v1706 = vand.u32 %v649, 4294901760
    %1707 = vmatpush1.msra.mxu0 %v1706
    %v1708 = vand.u32 %v652, 4294901760
    %1709 = vmatprep.subr.mxu0 %v1708
    %v1710 = vand.u32 %v651, 4294901760
    %1711 = vmatpush1.msra.mxu0 %v1710
    %v1712 = vand.u32 %v654, 4294901760
    %1713 = vmatprep.subr.mxu0 %v1712
    %v1714 = vand.u32 %v653, 4294901760
    %1715 = vmatpush1.msra.mxu0 %v1714
    %v1716 = vand.u32 %v656, 4294901760
    %1717 = vmatprep.subr.mxu0 %v1716
    %v1718 = vand.u32 %v655, 4294901760
    %1719 = vmatpush1.msra.mxu0 %v1718
    %v1720 = vand.u32 %v658, 4294901760
    %1721 = vmatprep.subr.mxu0 %v1720
    %v1722 = vand.u32 %v657, 4294901760
    %1723 = vmatpush1.msra.mxu0 %v1722
    %v1724 = vand.u32 %v660, 4294901760
    %1725 = vmatprep.subr.mxu0 %v1724
    %v1726 = vand.u32 %v659, 4294901760
    %1727 = vmatpush1.msra.mxu0 %v1726
    %v1728 = vand.u32 %v662, 4294901760
    %1729 = vmatprep.subr.mxu0 %v1728
    %v1730 = vand.u32 %v661, 4294901760
    %1731 = vmatpush1.msra.mxu0 %v1730
    %v1732 = vand.u32 %v664, 4294901760
    %1733 = vmatprep.subr.mxu0 %v1732
    %v1734 = vand.u32 %v663, 4294901760
    %1735 = vmatpush1.msra.mxu0 %v1734
    %1736 = vmatprep.subr.mxu0 0.0
    %1737 = vmatpush1.msra.mxu0 0.0
    %1738 = vmatprep.subr.mxu0 0.0
    %1739 = vmatpush1.msra.mxu0 0.0
    %1740 = vmatprep.subr.mxu0 0.0
    %1741 = vmatpush1.msra.mxu0 0.0
    %1742 = vmatprep.subr.mxu0 0.0
    %1743 = vmatpush1.msra.mxu0 0.0
    %1744 = vmatprep.subr.mxu0 0.0
    %1745 = vmatpush1.msra.mxu0 0.0
    %1746 = vmatprep.subr.mxu0 0.0
    %1747 = vmatpush1.msra.mxu0 0.0
    %1748 = vmatprep.subr.mxu0 0.0
    %1749 = vmatpush1.msra.mxu0 0.0
    %1750 = vmatprep.subr.mxu0 0.0
    %1751 = vmatpush1.msra.mxu0 0.0
    %1752 = vmatprep.subr.mxu0 0.0
    %1753 = vmatpush1.msra.mxu0 0.0
    %1754 = vmatprep.subr.mxu0 0.0
    %1755 = vmatpush1.msra.mxu0 0.0
    %1756 = vmatprep.subr.mxu0 0.0
    %1757 = vmatpush1.msra.mxu0 0.0
    %1758 = vmatprep.subr.mxu0 0.0
    %1759 = vmatpush1.msra.mxu0 0.0
    %1760 = vmatprep.subr.mxu0 0.0
    %1761 = vmatpush1.msra.mxu0 0.0
    %1762 = vmatprep.subr.mxu0 0.0
    %1763 = vmatpush1.msra.mxu0 0.0
    %1764 = vmatprep.subr.mxu0 0.0
    %1765 = vmatpush1.msra.mxu0 0.0
    %1766 = vmatprep.subr.mxu0 0.0
    %1767 = vmatpush1.msra.mxu0 0.0
    %1768 = vmatprep.subr.mxu0 0.0
    %1769 = vmatpush1.msra.mxu0 0.0
    %1770 = vmatprep.subr.mxu0 0.0
    %1771 = vmatpush1.msra.mxu0 0.0
    %1772 = vmatprep.subr.mxu0 0.0
    %1773 = vmatpush1.msra.mxu0 0.0
    %1774 = vmatprep.subr.mxu0 0.0
    %1775 = vmatpush1.msra.mxu0 0.0
    %1776 = vmatprep.subr.mxu0 0.0
    %1777 = vmatpush1.msra.mxu0 0.0
    %1778 = vmatprep.subr.mxu0 0.0
    %1779 = vmatpush1.msra.mxu0 0.0
    %1780 = vmatprep.subr.mxu0 0.0
    %1781 = vmatpush1.msra.mxu0 0.0
    %1782 = vmatprep.subr.mxu0 0.0
    %1783 = vmatpush1.msra.mxu0 0.0
    %1784 = vmatprep.mubr.f32.mxu0 0.0
    %v1785 = vand.u32 %v1353, 4294901760
    %v1786 = vsub.f32 %v1353, %v1785
    %v1787 = vand.u32 %v1786, 4294901760
    %1788 = vmatmul.mubr.f32.gmra.mrb[0].mxu0 %v1787
    %v1789 = vpop.f32.mrb[0].mxu0
    %v1790 = vadd.f32 %v1700, %v1789
    %v1791 = vpop.f32.mrb[0].mxu0
    %v1792 = vadd.f32 %v1702, %v1791
    %1793 = vdwg.mxu0
    %v1794 = vand.u32 %v650, 4294901760
    %v1795 = vsub.f32 %v650, %v1794
    %v1796 = vand.u32 %v1795, 4294901760
    %1797 = vmatprep.subr.mxu0 %v1796
    %v1798 = vand.u32 %v649, 4294901760
    %v1799 = vsub.f32 %v649, %v1798
    %v1800 = vand.u32 %v1799, 4294901760
    %1801 = vmatpush1.msra.mxu0 %v1800
    %v1802 = vand.u32 %v652, 4294901760
    %v1803 = vsub.f32 %v652, %v1802
    %v1804 = vand.u32 %v1803, 4294901760
    %1805 = vmatprep.subr.mxu0 %v1804
    %v1806 = vand.u32 %v651, 4294901760
    %v1807 = vsub.f32 %v651, %v1806
    %v1808 = vand.u32 %v1807, 4294901760
    %1809 = vmatpush1.msra.mxu0 %v1808
    %v1810 = vand.u32 %v654, 4294901760
    %v1811 = vsub.f32 %v654, %v1810
    %v1812 = vand.u32 %v1811, 4294901760
    %1813 = vmatprep.subr.mxu0 %v1812
    %v1814 = vand.u32 %v653, 4294901760
    %v1815 = vsub.f32 %v653, %v1814
    %v1816 = vand.u32 %v1815, 4294901760
    %1817 = vmatpush1.msra.mxu0 %v1816
    %v1818 = vand.u32 %v656, 4294901760
    %v1819 = vsub.f32 %v656, %v1818
    %v1820 = vand.u32 %v1819, 4294901760
    %1821 = vmatprep.subr.mxu0 %v1820
    %v1822 = vand.u32 %v655, 4294901760
    %v1823 = vsub.f32 %v655, %v1822
    %v1824 = vand.u32 %v1823, 4294901760
    %1825 = vmatpush1.msra.mxu0 %v1824
    %v1826 = vand.u32 %v658, 4294901760
    %v1827 = vsub.f32 %v658, %v1826
    %v1828 = vand.u32 %v1827, 4294901760
    %1829 = vmatprep.subr.mxu0 %v1828
    %v1830 = vand.u32 %v657, 4294901760
    %v1831 = vsub.f32 %v657, %v1830
    %v1832 = vand.u32 %v1831, 4294901760
    %1833 = vmatpush1.msra.mxu0 %v1832
    %v1834 = vand.u32 %v660, 4294901760
    %v1835 = vsub.f32 %v660, %v1834
    %v1836 = vand.u32 %v1835, 4294901760
    %1837 = vmatprep.subr.mxu0 %v1836
    %v1838 = vand.u32 %v659, 4294901760
    %v1839 = vsub.f32 %v659, %v1838
    %v1840 = vand.u32 %v1839, 4294901760
    %1841 = vmatpush1.msra.mxu0 %v1840
    %v1842 = vand.u32 %v662, 4294901760
    %v1843 = vsub.f32 %v662, %v1842
    %v1844 = vand.u32 %v1843, 4294901760
    %1845 = vmatprep.subr.mxu0 %v1844
    %v1846 = vand.u32 %v661, 4294901760
    %v1847 = vsub.f32 %v661, %v1846
    %v1848 = vand.u32 %v1847, 4294901760
    %1849 = vmatpush1.msra.mxu0 %v1848
    %v1850 = vand.u32 %v664, 4294901760
    %v1851 = vsub.f32 %v664, %v1850
    %v1852 = vand.u32 %v1851, 4294901760
    %1853 = vmatprep.subr.mxu0 %v1852
    %v1854 = vand.u32 %v663, 4294901760
    %v1855 = vsub.f32 %v663, %v1854
    %v1856 = vand.u32 %v1855, 4294901760
    %1857 = vmatpush1.msra.mxu0 %v1856
    %1858 = vmatprep.subr.mxu0 0.0
    %1859 = vmatpush1.msra.mxu0 0.0
    %1860 = vmatprep.subr.mxu0 0.0
    %1861 = vmatpush1.msra.mxu0 0.0
    %1862 = vmatprep.subr.mxu0 0.0
    %1863 = vmatpush1.msra.mxu0 0.0
    %1864 = vmatprep.subr.mxu0 0.0
    %1865 = vmatpush1.msra.mxu0 0.0
    %1866 = vmatprep.subr.mxu0 0.0
    %1867 = vmatpush1.msra.mxu0 0.0
    %1868 = vmatprep.subr.mxu0 0.0
    %1869 = vmatpush1.msra.mxu0 0.0
    %1870 = vmatprep.subr.mxu0 0.0
    %1871 = vmatpush1.msra.mxu0 0.0
    %1872 = vmatprep.subr.mxu0 0.0
    %1873 = vmatpush1.msra.mxu0 0.0
    %1874 = vmatprep.subr.mxu0 0.0
    %1875 = vmatpush1.msra.mxu0 0.0
    %1876 = vmatprep.subr.mxu0 0.0
    %1877 = vmatpush1.msra.mxu0 0.0
    %1878 = vmatprep.subr.mxu0 0.0
    %1879 = vmatpush1.msra.mxu0 0.0
    %1880 = vmatprep.subr.mxu0 0.0
    %1881 = vmatpush1.msra.mxu0 0.0
    %1882 = vmatprep.subr.mxu0 0.0
    %1883 = vmatpush1.msra.mxu0 0.0
    %1884 = vmatprep.subr.mxu0 0.0
    %1885 = vmatpush1.msra.mxu0 0.0
    %1886 = vmatprep.subr.mxu0 0.0
    %1887 = vmatpush1.msra.mxu0 0.0
    %1888 = vmatprep.subr.mxu0 0.0
    %1889 = vmatpush1.msra.mxu0 0.0
    %1890 = vmatprep.subr.mxu0 0.0
    %1891 = vmatpush1.msra.mxu0 0.0
    %1892 = vmatprep.subr.mxu0 0.0
    %1893 = vmatpush1.msra.mxu0 0.0
    %1894 = vmatprep.subr.mxu0 0.0
    %1895 = vmatpush1.msra.mxu0 0.0
    %1896 = vmatprep.subr.mxu0 0.0
    %1897 = vmatpush1.msra.mxu0 0.0
    %1898 = vmatprep.subr.mxu0 0.0
    %1899 = vmatpush1.msra.mxu0 0.0
    %1900 = vmatprep.subr.mxu0 0.0
    %1901 = vmatpush1.msra.mxu0 0.0
    %1902 = vmatprep.subr.mxu0 0.0
    %1903 = vmatpush1.msra.mxu0 0.0
    %1904 = vmatprep.subr.mxu0 0.0
    %1905 = vmatpush1.msra.mxu0 0.0
    %1906 = vmatprep.mubr.f32.mxu0 0.0
    %v1907 = vand.u32 %v1353, 4294901760
    %1908 = vmatmul.mubr.f32.gmra.mrb[0].mxu0 %v1907
    %v1909 = vpop.f32.mrb[0].mxu0
    %v1910 = vadd.f32 %v1790, %v1909
    %v1911 = vpop.f32.mrb[0].mxu0
    %v1912 = vadd.f32 %v1792, %v1911
    %1913 = vdwg.mxu0
    %v1914 = vand.u32 %v650, 4294901760
    %1915 = vmatprep.subr.mxu0 %v1914
    %v1916 = vand.u32 %v649, 4294901760
    %1917 = vmatpush1.msra.mxu0 %v1916
    %v1918 = vand.u32 %v652, 4294901760
    %1919 = vmatprep.subr.mxu0 %v1918
    %v1920 = vand.u32 %v651, 4294901760
    %1921 = vmatpush1.msra.mxu0 %v1920
    %v1922 = vand.u32 %v654, 4294901760
    %1923 = vmatprep.subr.mxu0 %v1922
    %v1924 = vand.u32 %v653, 4294901760
    %1925 = vmatpush1.msra.mxu0 %v1924
    %v1926 = vand.u32 %v656, 4294901760
    %1927 = vmatprep.subr.mxu0 %v1926
    %v1928 = vand.u32 %v655, 4294901760
    %1929 = vmatpush1.msra.mxu0 %v1928
    %v1930 = vand.u32 %v658, 4294901760
    %1931 = vmatprep.subr.mxu0 %v1930
    %v1932 = vand.u32 %v657, 4294901760
    %1933 = vmatpush1.msra.mxu0 %v1932
    %v1934 = vand.u32 %v660, 4294901760
    %1935 = vmatprep.subr.mxu0 %v1934
    %v1936 = vand.u32 %v659, 4294901760
    %1937 = vmatpush1.msra.mxu0 %v1936
    %v1938 = vand.u32 %v662, 4294901760
    %1939 = vmatprep.subr.mxu0 %v1938
    %v1940 = vand.u32 %v661, 4294901760
    %1941 = vmatpush1.msra.mxu0 %v1940
    %v1942 = vand.u32 %v664, 4294901760
    %1943 = vmatprep.subr.mxu0 %v1942
    %v1944 = vand.u32 %v663, 4294901760
    %1945 = vmatpush1.msra.mxu0 %v1944
    %1946 = vmatprep.subr.mxu0 0.0
    %1947 = vmatpush1.msra.mxu0 0.0
    %1948 = vmatprep.subr.mxu0 0.0
    %1949 = vmatpush1.msra.mxu0 0.0
    %1950 = vmatprep.subr.mxu0 0.0
    %1951 = vmatpush1.msra.mxu0 0.0
    %1952 = vmatprep.subr.mxu0 0.0
    %1953 = vmatpush1.msra.mxu0 0.0
    %1954 = vmatprep.subr.mxu0 0.0
    %1955 = vmatpush1.msra.mxu0 0.0
    %1956 = vmatprep.subr.mxu0 0.0
    %1957 = vmatpush1.msra.mxu0 0.0
    %1958 = vmatprep.subr.mxu0 0.0
    %1959 = vmatpush1.msra.mxu0 0.0
    %1960 = vmatprep.subr.mxu0 0.0
    %1961 = vmatpush1.msra.mxu0 0.0
    %1962 = vmatprep.subr.mxu0 0.0
    %1963 = vmatpush1.msra.mxu0 0.0
    %1964 = vmatprep.subr.mxu0 0.0
    %1965 = vmatpush1.msra.mxu0 0.0
    %1966 = vmatprep.subr.mxu0 0.0
    %1967 = vmatpush1.msra.mxu0 0.0
    %1968 = vmatprep.subr.mxu0 0.0
    %1969 = vmatpush1.msra.mxu0 0.0
    %1970 = vmatprep.subr.mxu0 0.0
    %1971 = vmatpush1.msra.mxu0 0.0
    %1972 = vmatprep.subr.mxu0 0.0
    %1973 = vmatpush1.msra.mxu0 0.0
    %1974 = vmatprep.subr.mxu0 0.0
    %1975 = vmatpush1.msra.mxu0 0.0
    %1976 = vmatprep.subr.mxu0 0.0
    %1977 = vmatpush1.msra.mxu0 0.0
    %1978 = vmatprep.subr.mxu0 0.0
    %1979 = vmatpush1.msra.mxu0 0.0
    %1980 = vmatprep.subr.mxu0 0.0
    %1981 = vmatpush1.msra.mxu0 0.0
    %1982 = vmatprep.subr.mxu0 0.0
    %1983 = vmatpush1.msra.mxu0 0.0
    %1984 = vmatprep.subr.mxu0 0.0
    %1985 = vmatpush1.msra.mxu0 0.0
    %1986 = vmatprep.subr.mxu0 0.0
    %1987 = vmatpush1.msra.mxu0 0.0
    %1988 = vmatprep.subr.mxu0 0.0
    %1989 = vmatpush1.msra.mxu0 0.0
    %1990 = vmatprep.subr.mxu0 0.0
    %1991 = vmatpush1.msra.mxu0 0.0
    %1992 = vmatprep.subr.mxu0 0.0
    %1993 = vmatpush1.msra.mxu0 0.0
    %1994 = vmatprep.mubr.f32.mxu0 0.0
    %v1995 = vand.u32 %v1353, 4294901760
    %1996 = vmatmul.mubr.f32.gmra.mrb[0].mxu0 %v1995
    %v1997 = vpop.f32.mrb[0].mxu0
    %v1998 = vadd.f32 %v1910, %v1997
    %v1999 = vpop.f32.mrb[0].mxu0
    %v2000 = vadd.f32 %v1912, %v1999
    %2001 = vdwg.mxu0
    %v2004 = vrot.slane %v1998, 4
    %v2005 = vrot.slane %v2000, 4
    %v2008 = vadd.f32 %v609, %v2004
    %v2009 = vadd.f32 %v611, %v2005
    %v2010 = vxor.u32 %v2008, 2147483648
    %v2011 = vmul.f32 %v2010, 1.442695
    %v2012 = vpow.pop %v2011
    %v2013 = vadd.f32 %v2012, 1.0
    %v2014 = vrcp.pop %v2013
    %v2015 = vmul.f32 1.0, %v2014
    %2017 = vrot.lane.b32.xlu0 %v2009, 64
    %v2018 = vpop.permute.xlu0 %2017
    %v2020 = vmul.f32 %v2015, %v2018
    %v2021 = vadd.f32 %v2009, %v2020
    %v2022 = vtanh.pop %v2021
    %v2023 = vsub.f32 1.0, %v2015
    %2025 = vrot.lane.b32.xlu0 %v2022, 64
    %v2026 = vpop.permute.xlu0 %2025
    %v2028 = vmul.f32 %v2023, %v2026
    %v2029 = vrot.slane %v1348, 6
    %v2031 = vmul.f32 %v2015, %v2029
    %v2032 = vadd.f32 %v2028, %v2031
    %v2034 = vrot.slane %v2032, 4
    %2035 = vrot.lane.b32.xlu0 %v2034, 64
    %v2036 = vpop.permute.xlu0 %2035
    %v2037 = vsel %vm665, %v2036, 0
    %v2039 = vand.u32 %v650, 4294901760
    %2040 = vmatprep.subr.mxu0 %v2039
    %v2041 = vand.u32 %v649, 4294901760
    %2042 = vmatpush1.msra.mxu0 %v2041
    %v2043 = vand.u32 %v652, 4294901760
    %2044 = vmatprep.subr.mxu0 %v2043
    %v2045 = vand.u32 %v651, 4294901760
    %2046 = vmatpush1.msra.mxu0 %v2045
    %v2047 = vand.u32 %v654, 4294901760
    %2048 = vmatprep.subr.mxu0 %v2047
    %v2049 = vand.u32 %v653, 4294901760
    %2050 = vmatpush1.msra.mxu0 %v2049
    %v2051 = vand.u32 %v656, 4294901760
    %2052 = vmatprep.subr.mxu0 %v2051
    %v2053 = vand.u32 %v655, 4294901760
    %2054 = vmatpush1.msra.mxu0 %v2053
    %v2055 = vand.u32 %v658, 4294901760
    %2056 = vmatprep.subr.mxu0 %v2055
    %v2057 = vand.u32 %v657, 4294901760
    %2058 = vmatpush1.msra.mxu0 %v2057
    %v2059 = vand.u32 %v660, 4294901760
    %2060 = vmatprep.subr.mxu0 %v2059
    %v2061 = vand.u32 %v659, 4294901760
    %2062 = vmatpush1.msra.mxu0 %v2061
    %v2063 = vand.u32 %v662, 4294901760
    %2064 = vmatprep.subr.mxu0 %v2063
    %v2065 = vand.u32 %v661, 4294901760
    %2066 = vmatpush1.msra.mxu0 %v2065
    %v2067 = vand.u32 %v664, 4294901760
    %2068 = vmatprep.subr.mxu0 %v2067
    %v2069 = vand.u32 %v663, 4294901760
    %2070 = vmatpush1.msra.mxu0 %v2069
    %2071 = vmatprep.subr.mxu0 0.0
    %2072 = vmatpush1.msra.mxu0 0.0
    %2073 = vmatprep.subr.mxu0 0.0
    %2074 = vmatpush1.msra.mxu0 0.0
    %2075 = vmatprep.subr.mxu0 0.0
    %2076 = vmatpush1.msra.mxu0 0.0
    %2077 = vmatprep.subr.mxu0 0.0
    %2078 = vmatpush1.msra.mxu0 0.0
    %2079 = vmatprep.subr.mxu0 0.0
    %2080 = vmatpush1.msra.mxu0 0.0
    %2081 = vmatprep.subr.mxu0 0.0
    %2082 = vmatpush1.msra.mxu0 0.0
    %2083 = vmatprep.subr.mxu0 0.0
    %2084 = vmatpush1.msra.mxu0 0.0
    %2085 = vmatprep.subr.mxu0 0.0
    %2086 = vmatpush1.msra.mxu0 0.0
    %2087 = vmatprep.subr.mxu0 0.0
    %2088 = vmatpush1.msra.mxu0 0.0
    %2089 = vmatprep.subr.mxu0 0.0
    %2090 = vmatpush1.msra.mxu0 0.0
    %2091 = vmatprep.subr.mxu0 0.0
    %2092 = vmatpush1.msra.mxu0 0.0
    %2093 = vmatprep.subr.mxu0 0.0
    %2094 = vmatpush1.msra.mxu0 0.0
    %2095 = vmatprep.subr.mxu0 0.0
    %2096 = vmatpush1.msra.mxu0 0.0
    %2097 = vmatprep.subr.mxu0 0.0
    %2098 = vmatpush1.msra.mxu0 0.0
    %2099 = vmatprep.subr.mxu0 0.0
    %2100 = vmatpush1.msra.mxu0 0.0
    %2101 = vmatprep.subr.mxu0 0.0
    %2102 = vmatpush1.msra.mxu0 0.0
    %2103 = vmatprep.subr.mxu0 0.0
    %2104 = vmatpush1.msra.mxu0 0.0
    %2105 = vmatprep.subr.mxu0 0.0
    %2106 = vmatpush1.msra.mxu0 0.0
    %2107 = vmatprep.subr.mxu0 0.0
    %2108 = vmatpush1.msra.mxu0 0.0
    %2109 = vmatprep.subr.mxu0 0.0
    %2110 = vmatpush1.msra.mxu0 0.0
    %2111 = vmatprep.subr.mxu0 0.0
    %2112 = vmatpush1.msra.mxu0 0.0
    %2113 = vmatprep.subr.mxu0 0.0
    %2114 = vmatpush1.msra.mxu0 0.0
    %2115 = vmatprep.subr.mxu0 0.0
    %2116 = vmatpush1.msra.mxu0 0.0
    %2117 = vmatprep.subr.mxu0 0.0
    %2118 = vmatpush1.msra.mxu0 0.0
    %2119 = vmatprep.mubr.f32.mxu0 0.0
    %v2120 = vand.u32 %v2037, 4294901760
    %v2121 = vsub.f32 %v2037, %v2120
    %v2122 = vand.u32 %v2121, 4294901760
    %v2123 = vsub.f32 %v2121, %v2122
    %v2124 = vand.u32 %v2123, 4294901760
    %2125 = vmatmul.mubr.f32.gmra.mrb[0].mxu0 %v2124
    %v2126 = vpop.f32.mrb[0].mxu0
    %v2127 = vadd.f32 0.0, %v2126
    %v2128 = vpop.f32.mrb[0].mxu0
    %v2129 = vadd.f32 0.0, %v2128
    %2130 = vdwg.mxu0
    %v2131 = vand.u32 %v650, 4294901760
    %v2132 = vsub.f32 %v650, %v2131
    %v2133 = vand.u32 %v2132, 4294901760
    %v2134 = vsub.f32 %v2132, %v2133
    %v2135 = vand.u32 %v2134, 4294901760
    %2136 = vmatprep.subr.mxu0 %v2135
    %v2137 = vand.u32 %v649, 4294901760
    %v2138 = vsub.f32 %v649, %v2137
    %v2139 = vand.u32 %v2138, 4294901760
    %v2140 = vsub.f32 %v2138, %v2139
    %v2141 = vand.u32 %v2140, 4294901760
    %2142 = vmatpush1.msra.mxu0 %v2141
    %v2143 = vand.u32 %v652, 4294901760
    %v2144 = vsub.f32 %v652, %v2143
    %v2145 = vand.u32 %v2144, 4294901760
    %v2146 = vsub.f32 %v2144, %v2145
    %v2147 = vand.u32 %v2146, 4294901760
    %2148 = vmatprep.subr.mxu0 %v2147
    %v2149 = vand.u32 %v651, 4294901760
    %v2150 = vsub.f32 %v651, %v2149
    %v2151 = vand.u32 %v2150, 4294901760
    %v2152 = vsub.f32 %v2150, %v2151
    %v2153 = vand.u32 %v2152, 4294901760
    %2154 = vmatpush1.msra.mxu0 %v2153
    %v2155 = vand.u32 %v654, 4294901760
    %v2156 = vsub.f32 %v654, %v2155
    %v2157 = vand.u32 %v2156, 4294901760
    %v2158 = vsub.f32 %v2156, %v2157
    %v2159 = vand.u32 %v2158, 4294901760
    %2160 = vmatprep.subr.mxu0 %v2159
    %v2161 = vand.u32 %v653, 4294901760
    %v2162 = vsub.f32 %v653, %v2161
    %v2163 = vand.u32 %v2162, 4294901760
    %v2164 = vsub.f32 %v2162, %v2163
    %v2165 = vand.u32 %v2164, 4294901760
    %2166 = vmatpush1.msra.mxu0 %v2165
    %v2167 = vand.u32 %v656, 4294901760
    %v2168 = vsub.f32 %v656, %v2167
    %v2169 = vand.u32 %v2168, 4294901760
    %v2170 = vsub.f32 %v2168, %v2169
    %v2171 = vand.u32 %v2170, 4294901760
    %2172 = vmatprep.subr.mxu0 %v2171
    %v2173 = vand.u32 %v655, 4294901760
    %v2174 = vsub.f32 %v655, %v2173
    %v2175 = vand.u32 %v2174, 4294901760
    %v2176 = vsub.f32 %v2174, %v2175
    %v2177 = vand.u32 %v2176, 4294901760
    %2178 = vmatpush1.msra.mxu0 %v2177
    %v2179 = vand.u32 %v658, 4294901760
    %v2180 = vsub.f32 %v658, %v2179
    %v2181 = vand.u32 %v2180, 4294901760
    %v2182 = vsub.f32 %v2180, %v2181
    %v2183 = vand.u32 %v2182, 4294901760
    %2184 = vmatprep.subr.mxu0 %v2183
    %v2185 = vand.u32 %v657, 4294901760
    %v2186 = vsub.f32 %v657, %v2185
    %v2187 = vand.u32 %v2186, 4294901760
    %v2188 = vsub.f32 %v2186, %v2187
    %v2189 = vand.u32 %v2188, 4294901760
    %2190 = vmatpush1.msra.mxu0 %v2189
    %v2191 = vand.u32 %v660, 4294901760
    %v2192 = vsub.f32 %v660, %v2191
    %v2193 = vand.u32 %v2192, 4294901760
    %v2194 = vsub.f32 %v2192, %v2193
    %v2195 = vand.u32 %v2194, 4294901760
    %2196 = vmatprep.subr.mxu0 %v2195
    %v2197 = vand.u32 %v659, 4294901760
    %v2198 = vsub.f32 %v659, %v2197
    %v2199 = vand.u32 %v2198, 4294901760
    %v2200 = vsub.f32 %v2198, %v2199
    %v2201 = vand.u32 %v2200, 4294901760
    %2202 = vmatpush1.msra.mxu0 %v2201
    %v2203 = vand.u32 %v662, 4294901760
    %v2204 = vsub.f32 %v662, %v2203
    %v2205 = vand.u32 %v2204, 4294901760
    %v2206 = vsub.f32 %v2204, %v2205
    %v2207 = vand.u32 %v2206, 4294901760
    %2208 = vmatprep.subr.mxu0 %v2207
    %v2209 = vand.u32 %v661, 4294901760
    %v2210 = vsub.f32 %v661, %v2209
    %v2211 = vand.u32 %v2210, 4294901760
    %v2212 = vsub.f32 %v2210, %v2211
    %v2213 = vand.u32 %v2212, 4294901760
    %2214 = vmatpush1.msra.mxu0 %v2213
    %v2215 = vand.u32 %v664, 4294901760
    %v2216 = vsub.f32 %v664, %v2215
    %v2217 = vand.u32 %v2216, 4294901760
    %v2218 = vsub.f32 %v2216, %v2217
    %v2219 = vand.u32 %v2218, 4294901760
    %2220 = vmatprep.subr.mxu0 %v2219
    %v2221 = vand.u32 %v663, 4294901760
    %v2222 = vsub.f32 %v663, %v2221
    %v2223 = vand.u32 %v2222, 4294901760
    %v2224 = vsub.f32 %v2222, %v2223
    %v2225 = vand.u32 %v2224, 4294901760
    %2226 = vmatpush1.msra.mxu0 %v2225
    %2227 = vmatprep.subr.mxu0 0.0
    %2228 = vmatpush1.msra.mxu0 0.0
    %2229 = vmatprep.subr.mxu0 0.0
    %2230 = vmatpush1.msra.mxu0 0.0
    %2231 = vmatprep.subr.mxu0 0.0
    %2232 = vmatpush1.msra.mxu0 0.0
    %2233 = vmatprep.subr.mxu0 0.0
    %2234 = vmatpush1.msra.mxu0 0.0
    %2235 = vmatprep.subr.mxu0 0.0
    %2236 = vmatpush1.msra.mxu0 0.0
    %2237 = vmatprep.subr.mxu0 0.0
    %2238 = vmatpush1.msra.mxu0 0.0
    %2239 = vmatprep.subr.mxu0 0.0
    %2240 = vmatpush1.msra.mxu0 0.0
    %2241 = vmatprep.subr.mxu0 0.0
    %2242 = vmatpush1.msra.mxu0 0.0
    %2243 = vmatprep.subr.mxu0 0.0
    %2244 = vmatpush1.msra.mxu0 0.0
    %2245 = vmatprep.subr.mxu0 0.0
    %2246 = vmatpush1.msra.mxu0 0.0
    %2247 = vmatprep.subr.mxu0 0.0
    %2248 = vmatpush1.msra.mxu0 0.0
    %2249 = vmatprep.subr.mxu0 0.0
    %2250 = vmatpush1.msra.mxu0 0.0
    %2251 = vmatprep.subr.mxu0 0.0
    %2252 = vmatpush1.msra.mxu0 0.0
    %2253 = vmatprep.subr.mxu0 0.0
    %2254 = vmatpush1.msra.mxu0 0.0
    %2255 = vmatprep.subr.mxu0 0.0
    %2256 = vmatpush1.msra.mxu0 0.0
    %2257 = vmatprep.subr.mxu0 0.0
    %2258 = vmatpush1.msra.mxu0 0.0
    %2259 = vmatprep.subr.mxu0 0.0
    %2260 = vmatpush1.msra.mxu0 0.0
    %2261 = vmatprep.subr.mxu0 0.0
    %2262 = vmatpush1.msra.mxu0 0.0
    %2263 = vmatprep.subr.mxu0 0.0
    %2264 = vmatpush1.msra.mxu0 0.0
    %2265 = vmatprep.subr.mxu0 0.0
    %2266 = vmatpush1.msra.mxu0 0.0
    %2267 = vmatprep.subr.mxu0 0.0
    %2268 = vmatpush1.msra.mxu0 0.0
    %2269 = vmatprep.subr.mxu0 0.0
    %2270 = vmatpush1.msra.mxu0 0.0
    %2271 = vmatprep.subr.mxu0 0.0
    %2272 = vmatpush1.msra.mxu0 0.0
    %2273 = vmatprep.subr.mxu0 0.0
    %2274 = vmatpush1.msra.mxu0 0.0
    %2275 = vmatprep.mubr.f32.mxu0 0.0
    %v2276 = vand.u32 %v2037, 4294901760
    %2277 = vmatmul.mubr.f32.gmra.mrb[0].mxu0 %v2276
    %v2278 = vpop.f32.mrb[0].mxu0
    %v2279 = vadd.f32 %v2127, %v2278
    %v2280 = vpop.f32.mrb[0].mxu0
    %v2281 = vadd.f32 %v2129, %v2280
    %2282 = vdwg.mxu0
    %v2283 = vand.u32 %v650, 4294901760
    %v2284 = vsub.f32 %v650, %v2283
    %2285 = vmatprep.subr.mxu0 %v2284
    %v2286 = vand.u32 %v649, 4294901760
    %v2287 = vsub.f32 %v649, %v2286
    %2288 = vmatpush1.msra.mxu0 %v2287
    %v2289 = vand.u32 %v652, 4294901760
    %v2290 = vsub.f32 %v652, %v2289
    %2291 = vmatprep.subr.mxu0 %v2290
    %v2292 = vand.u32 %v651, 4294901760
    %v2293 = vsub.f32 %v651, %v2292
    %2294 = vmatpush1.msra.mxu0 %v2293
    %v2295 = vand.u32 %v654, 4294901760
    %v2296 = vsub.f32 %v654, %v2295
    %2297 = vmatprep.subr.mxu0 %v2296
    %v2298 = vand.u32 %v653, 4294901760
    %v2299 = vsub.f32 %v653, %v2298
    %2300 = vmatpush1.msra.mxu0 %v2299
    %v2301 = vand.u32 %v656, 4294901760
    %v2302 = vsub.f32 %v656, %v2301
    %2303 = vmatprep.subr.mxu0 %v2302
    %v2304 = vand.u32 %v655, 4294901760
    %v2305 = vsub.f32 %v655, %v2304
    %2306 = vmatpush1.msra.mxu0 %v2305
    %v2307 = vand.u32 %v658, 4294901760
    %v2308 = vsub.f32 %v658, %v2307
    %2309 = vmatprep.subr.mxu0 %v2308
    %v2310 = vand.u32 %v657, 4294901760
    %v2311 = vsub.f32 %v657, %v2310
    %2312 = vmatpush1.msra.mxu0 %v2311
    %v2313 = vand.u32 %v660, 4294901760
    %v2314 = vsub.f32 %v660, %v2313
    %2315 = vmatprep.subr.mxu0 %v2314
    %v2316 = vand.u32 %v659, 4294901760
    %v2317 = vsub.f32 %v659, %v2316
    %2318 = vmatpush1.msra.mxu0 %v2317
    %v2319 = vand.u32 %v662, 4294901760
    %v2320 = vsub.f32 %v662, %v2319
    %2321 = vmatprep.subr.mxu0 %v2320
    %v2322 = vand.u32 %v661, 4294901760
    %v2323 = vsub.f32 %v661, %v2322
    %2324 = vmatpush1.msra.mxu0 %v2323
    %v2325 = vand.u32 %v664, 4294901760
    %v2326 = vsub.f32 %v664, %v2325
    %2327 = vmatprep.subr.mxu0 %v2326
    %v2328 = vand.u32 %v663, 4294901760
    %v2329 = vsub.f32 %v663, %v2328
    %2330 = vmatpush1.msra.mxu0 %v2329
    %2331 = vmatprep.subr.mxu0 0.0
    %2332 = vmatpush1.msra.mxu0 0.0
    %2333 = vmatprep.subr.mxu0 0.0
    %2334 = vmatpush1.msra.mxu0 0.0
    %2335 = vmatprep.subr.mxu0 0.0
    %2336 = vmatpush1.msra.mxu0 0.0
    %2337 = vmatprep.subr.mxu0 0.0
    %2338 = vmatpush1.msra.mxu0 0.0
    %2339 = vmatprep.subr.mxu0 0.0
    %2340 = vmatpush1.msra.mxu0 0.0
    %2341 = vmatprep.subr.mxu0 0.0
    %2342 = vmatpush1.msra.mxu0 0.0
    %2343 = vmatprep.subr.mxu0 0.0
    %2344 = vmatpush1.msra.mxu0 0.0
    %2345 = vmatprep.subr.mxu0 0.0
    %2346 = vmatpush1.msra.mxu0 0.0
    %2347 = vmatprep.subr.mxu0 0.0
    %2348 = vmatpush1.msra.mxu0 0.0
    %2349 = vmatprep.subr.mxu0 0.0
    %2350 = vmatpush1.msra.mxu0 0.0
    %2351 = vmatprep.subr.mxu0 0.0
    %2352 = vmatpush1.msra.mxu0 0.0
    %2353 = vmatprep.subr.mxu0 0.0
    %2354 = vmatpush1.msra.mxu0 0.0
    %2355 = vmatprep.subr.mxu0 0.0
    %2356 = vmatpush1.msra.mxu0 0.0
    %2357 = vmatprep.subr.mxu0 0.0
    %2358 = vmatpush1.msra.mxu0 0.0
    %2359 = vmatprep.subr.mxu0 0.0
    %2360 = vmatpush1.msra.mxu0 0.0
    %2361 = vmatprep.subr.mxu0 0.0
    %2362 = vmatpush1.msra.mxu0 0.0
    %2363 = vmatprep.subr.mxu0 0.0
    %2364 = vmatpush1.msra.mxu0 0.0
    %2365 = vmatprep.subr.mxu0 0.0
    %2366 = vmatpush1.msra.mxu0 0.0
    %2367 = vmatprep.subr.mxu0 0.0
    %2368 = vmatpush1.msra.mxu0 0.0
    %2369 = vmatprep.subr.mxu0 0.0
    %2370 = vmatpush1.msra.mxu0 0.0
    %2371 = vmatprep.subr.mxu0 0.0
    %2372 = vmatpush1.msra.mxu0 0.0
    %2373 = vmatprep.subr.mxu0 0.0
    %2374 = vmatpush1.msra.mxu0 0.0
    %2375 = vmatprep.subr.mxu0 0.0
    %2376 = vmatpush1.msra.mxu0 0.0
    %2377 = vmatprep.subr.mxu0 0.0
    %2378 = vmatpush1.msra.mxu0 0.0
    %2379 = vmatprep.mubr.f32.mxu0 0.0
    %v2380 = vand.u32 %v2037, 4294901760
    %v2381 = vsub.f32 %v2037, %v2380
    %2382 = vmatmul.mubr.f32.gmra.mrb[0].mxu0 %v2381
    %v2383 = vpop.f32.mrb[0].mxu0
    %v2384 = vadd.f32 %v2279, %v2383
    %v2385 = vpop.f32.mrb[0].mxu0
    %v2386 = vadd.f32 %v2281, %v2385
    %2387 = vdwg.mxu0
    %v2388 = vand.u32 %v650, 4294901760
    %2389 = vmatprep.subr.mxu0 %v2388
    %v2390 = vand.u32 %v649, 4294901760
    %2391 = vmatpush1.msra.mxu0 %v2390
    %v2392 = vand.u32 %v652, 4294901760
    %2393 = vmatprep.subr.mxu0 %v2392
    %v2394 = vand.u32 %v651, 4294901760
    %2395 = vmatpush1.msra.mxu0 %v2394
    %v2396 = vand.u32 %v654, 4294901760
    %2397 = vmatprep.subr.mxu0 %v2396
    %v2398 = vand.u32 %v653, 4294901760
    %2399 = vmatpush1.msra.mxu0 %v2398
    %v2400 = vand.u32 %v656, 4294901760
    %2401 = vmatprep.subr.mxu0 %v2400
    %v2402 = vand.u32 %v655, 4294901760
    %2403 = vmatpush1.msra.mxu0 %v2402
    %v2404 = vand.u32 %v658, 4294901760
    %2405 = vmatprep.subr.mxu0 %v2404
    %v2406 = vand.u32 %v657, 4294901760
    %2407 = vmatpush1.msra.mxu0 %v2406
    %v2408 = vand.u32 %v660, 4294901760
    %2409 = vmatprep.subr.mxu0 %v2408
    %v2410 = vand.u32 %v659, 4294901760
    %2411 = vmatpush1.msra.mxu0 %v2410
    %v2412 = vand.u32 %v662, 4294901760
    %2413 = vmatprep.subr.mxu0 %v2412
    %v2414 = vand.u32 %v661, 4294901760
    %2415 = vmatpush1.msra.mxu0 %v2414
    %v2416 = vand.u32 %v664, 4294901760
    %2417 = vmatprep.subr.mxu0 %v2416
    %v2418 = vand.u32 %v663, 4294901760
    %2419 = vmatpush1.msra.mxu0 %v2418
    %2420 = vmatprep.subr.mxu0 0.0
    %2421 = vmatpush1.msra.mxu0 0.0
    %2422 = vmatprep.subr.mxu0 0.0
    %2423 = vmatpush1.msra.mxu0 0.0
    %2424 = vmatprep.subr.mxu0 0.0
    %2425 = vmatpush1.msra.mxu0 0.0
    %2426 = vmatprep.subr.mxu0 0.0
    %2427 = vmatpush1.msra.mxu0 0.0
    %2428 = vmatprep.subr.mxu0 0.0
    %2429 = vmatpush1.msra.mxu0 0.0
    %2430 = vmatprep.subr.mxu0 0.0
    %2431 = vmatpush1.msra.mxu0 0.0
    %2432 = vmatprep.subr.mxu0 0.0
    %2433 = vmatpush1.msra.mxu0 0.0
    %2434 = vmatprep.subr.mxu0 0.0
    %2435 = vmatpush1.msra.mxu0 0.0
    %2436 = vmatprep.subr.mxu0 0.0
    %2437 = vmatpush1.msra.mxu0 0.0
    %2438 = vmatprep.subr.mxu0 0.0
    %2439 = vmatpush1.msra.mxu0 0.0
    %2440 = vmatprep.subr.mxu0 0.0
    %2441 = vmatpush1.msra.mxu0 0.0
    %2442 = vmatprep.subr.mxu0 0.0
    %2443 = vmatpush1.msra.mxu0 0.0
    %2444 = vmatprep.subr.mxu0 0.0
    %2445 = vmatpush1.msra.mxu0 0.0
    %2446 = vmatprep.subr.mxu0 0.0
    %2447 = vmatpush1.msra.mxu0 0.0
    %2448 = vmatprep.subr.mxu0 0.0
    %2449 = vmatpush1.msra.mxu0 0.0
    %2450 = vmatprep.subr.mxu0 0.0
    %2451 = vmatpush1.msra.mxu0 0.0
    %2452 = vmatprep.subr.mxu0 0.0
    %2453 = vmatpush1.msra.mxu0 0.0
    %2454 = vmatprep.subr.mxu0 0.0
    %2455 = vmatpush1.msra.mxu0 0.0
    %2456 = vmatprep.subr.mxu0 0.0
    %2457 = vmatpush1.msra.mxu0 0.0
    %2458 = vmatprep.subr.mxu0 0.0
    %2459 = vmatpush1.msra.mxu0 0.0
    %2460 = vmatprep.subr.mxu0 0.0
    %2461 = vmatpush1.msra.mxu0 0.0
    %2462 = vmatprep.subr.mxu0 0.0
    %2463 = vmatpush1.msra.mxu0 0.0
    %2464 = vmatprep.subr.mxu0 0.0
    %2465 = vmatpush1.msra.mxu0 0.0
    %2466 = vmatprep.subr.mxu0 0.0
    %2467 = vmatpush1.msra.mxu0 0.0
    %2468 = vmatprep.mubr.f32.mxu0 0.0
    %v2469 = vand.u32 %v2037, 4294901760
    %v2470 = vsub.f32 %v2037, %v2469
    %v2471 = vand.u32 %v2470, 4294901760
    %2472 = vmatmul.mubr.f32.gmra.mrb[0].mxu0 %v2471
    %v2473 = vpop.f32.mrb[0].mxu0
    %v2474 = vadd.f32 %v2384, %v2473
    %v2475 = vpop.f32.mrb[0].mxu0
    %v2476 = vadd.f32 %v2386, %v2475
    %2477 = vdwg.mxu0
    %v2478 = vand.u32 %v650, 4294901760
    %v2479 = vsub.f32 %v650, %v2478
    %v2480 = vand.u32 %v2479, 4294901760
    %2481 = vmatprep.subr.mxu0 %v2480
    %v2482 = vand.u32 %v649, 4294901760
    %v2483 = vsub.f32 %v649, %v2482
    %v2484 = vand.u32 %v2483, 4294901760
    %2485 = vmatpush1.msra.mxu0 %v2484
    %v2486 = vand.u32 %v652, 4294901760
    %v2487 = vsub.f32 %v652, %v2486
    %v2488 = vand.u32 %v2487, 4294901760
    %2489 = vmatprep.subr.mxu0 %v2488
    %v2490 = vand.u32 %v651, 4294901760
    %v2491 = vsub.f32 %v651, %v2490
    %v2492 = vand.u32 %v2491, 4294901760
    %2493 = vmatpush1.msra.mxu0 %v2492
    %v2494 = vand.u32 %v654, 4294901760
    %v2495 = vsub.f32 %v654, %v2494
    %v2496 = vand.u32 %v2495, 4294901760
    %2497 = vmatprep.subr.mxu0 %v2496
    %v2498 = vand.u32 %v653, 4294901760
    %v2499 = vsub.f32 %v653, %v2498
    %v2500 = vand.u32 %v2499, 4294901760
    %2501 = vmatpush1.msra.mxu0 %v2500
    %v2502 = vand.u32 %v656, 4294901760
    %v2503 = vsub.f32 %v656, %v2502
    %v2504 = vand.u32 %v2503, 4294901760
    %2505 = vmatprep.subr.mxu0 %v2504
    %v2506 = vand.u32 %v655, 4294901760
    %v2507 = vsub.f32 %v655, %v2506
    %v2508 = vand.u32 %v2507, 4294901760
    %2509 = vmatpush1.msra.mxu0 %v2508
    %v2510 = vand.u32 %v658, 4294901760
    %v2511 = vsub.f32 %v658, %v2510
    %v2512 = vand.u32 %v2511, 4294901760
    %2513 = vmatprep.subr.mxu0 %v2512
    %v2514 = vand.u32 %v657, 4294901760
    %v2515 = vsub.f32 %v657, %v2514
    %v2516 = vand.u32 %v2515, 4294901760
    %2517 = vmatpush1.msra.mxu0 %v2516
    %v2518 = vand.u32 %v660, 4294901760
    %v2519 = vsub.f32 %v660, %v2518
    %v2520 = vand.u32 %v2519, 4294901760
    %2521 = vmatprep.subr.mxu0 %v2520
    %v2522 = vand.u32 %v659, 4294901760
    %v2523 = vsub.f32 %v659, %v2522
    %v2524 = vand.u32 %v2523, 4294901760
    %2525 = vmatpush1.msra.mxu0 %v2524
    %v2526 = vand.u32 %v662, 4294901760
    %v2527 = vsub.f32 %v662, %v2526
    %v2528 = vand.u32 %v2527, 4294901760
    %2529 = vmatprep.subr.mxu0 %v2528
    %v2530 = vand.u32 %v661, 4294901760
    %v2531 = vsub.f32 %v661, %v2530
    %v2532 = vand.u32 %v2531, 4294901760
    %2533 = vmatpush1.msra.mxu0 %v2532
    %v2534 = vand.u32 %v664, 4294901760
    %v2535 = vsub.f32 %v664, %v2534
    %v2536 = vand.u32 %v2535, 4294901760
    %2537 = vmatprep.subr.mxu0 %v2536
    %v2538 = vand.u32 %v663, 4294901760
    %v2539 = vsub.f32 %v663, %v2538
    %v2540 = vand.u32 %v2539, 4294901760
    %2541 = vmatpush1.msra.mxu0 %v2540
    %2542 = vmatprep.subr.mxu0 0.0
    %2543 = vmatpush1.msra.mxu0 0.0
    %2544 = vmatprep.subr.mxu0 0.0
    %2545 = vmatpush1.msra.mxu0 0.0
    %2546 = vmatprep.subr.mxu0 0.0
    %2547 = vmatpush1.msra.mxu0 0.0
    %2548 = vmatprep.subr.mxu0 0.0
    %2549 = vmatpush1.msra.mxu0 0.0
    %2550 = vmatprep.subr.mxu0 0.0
    %2551 = vmatpush1.msra.mxu0 0.0
    %2552 = vmatprep.subr.mxu0 0.0
    %2553 = vmatpush1.msra.mxu0 0.0
    %2554 = vmatprep.subr.mxu0 0.0
    %2555 = vmatpush1.msra.mxu0 0.0
    %2556 = vmatprep.subr.mxu0 0.0
    %2557 = vmatpush1.msra.mxu0 0.0
    %2558 = vmatprep.subr.mxu0 0.0
    %2559 = vmatpush1.msra.mxu0 0.0
    %2560 = vmatprep.subr.mxu0 0.0
    %2561 = vmatpush1.msra.mxu0 0.0
    %2562 = vmatprep.subr.mxu0 0.0
    %2563 = vmatpush1.msra.mxu0 0.0
    %2564 = vmatprep.subr.mxu0 0.0
    %2565 = vmatpush1.msra.mxu0 0.0
    %2566 = vmatprep.subr.mxu0 0.0
    %2567 = vmatpush1.msra.mxu0 0.0
    %2568 = vmatprep.subr.mxu0 0.0
    %2569 = vmatpush1.msra.mxu0 0.0
    %2570 = vmatprep.subr.mxu0 0.0
    %2571 = vmatpush1.msra.mxu0 0.0
    %2572 = vmatprep.subr.mxu0 0.0
    %2573 = vmatpush1.msra.mxu0 0.0
    %2574 = vmatprep.subr.mxu0 0.0
    %2575 = vmatpush1.msra.mxu0 0.0
    %2576 = vmatprep.subr.mxu0 0.0
    %2577 = vmatpush1.msra.mxu0 0.0
    %2578 = vmatprep.subr.mxu0 0.0
    %2579 = vmatpush1.msra.mxu0 0.0
    %2580 = vmatprep.subr.mxu0 0.0
    %2581 = vmatpush1.msra.mxu0 0.0
    %2582 = vmatprep.subr.mxu0 0.0
    %2583 = vmatpush1.msra.mxu0 0.0
    %2584 = vmatprep.subr.mxu0 0.0
    %2585 = vmatpush1.msra.mxu0 0.0
    %2586 = vmatprep.subr.mxu0 0.0
    %2587 = vmatpush1.msra.mxu0 0.0
    %2588 = vmatprep.subr.mxu0 0.0
    %2589 = vmatpush1.msra.mxu0 0.0
    %2590 = vmatprep.mubr.f32.mxu0 0.0
    %v2591 = vand.u32 %v2037, 4294901760
    %2592 = vmatmul.mubr.f32.gmra.mrb[0].mxu0 %v2591
    %v2593 = vpop.f32.mrb[0].mxu0
    %v2594 = vadd.f32 %v2474, %v2593
    %v2595 = vpop.f32.mrb[0].mxu0
    %v2596 = vadd.f32 %v2476, %v2595
    %2597 = vdwg.mxu0
    %v2598 = vand.u32 %v650, 4294901760
    %2599 = vmatprep.subr.mxu0 %v2598
    %v2600 = vand.u32 %v649, 4294901760
    %2601 = vmatpush1.msra.mxu0 %v2600
    %v2602 = vand.u32 %v652, 4294901760
    %2603 = vmatprep.subr.mxu0 %v2602
    %v2604 = vand.u32 %v651, 4294901760
    %2605 = vmatpush1.msra.mxu0 %v2604
    %v2606 = vand.u32 %v654, 4294901760
    %2607 = vmatprep.subr.mxu0 %v2606
    %v2608 = vand.u32 %v653, 4294901760
    %2609 = vmatpush1.msra.mxu0 %v2608
    %v2610 = vand.u32 %v656, 4294901760
    %2611 = vmatprep.subr.mxu0 %v2610
    %v2612 = vand.u32 %v655, 4294901760
    %2613 = vmatpush1.msra.mxu0 %v2612
    %v2614 = vand.u32 %v658, 4294901760
    %2615 = vmatprep.subr.mxu0 %v2614
    %v2616 = vand.u32 %v657, 4294901760
    %2617 = vmatpush1.msra.mxu0 %v2616
    %v2618 = vand.u32 %v660, 4294901760
    %2619 = vmatprep.subr.mxu0 %v2618
    %v2620 = vand.u32 %v659, 4294901760
    %2621 = vmatpush1.msra.mxu0 %v2620
    %v2622 = vand.u32 %v662, 4294901760
    %2623 = vmatprep.subr.mxu0 %v2622
    %v2624 = vand.u32 %v661, 4294901760
    %2625 = vmatpush1.msra.mxu0 %v2624
    %v2626 = vand.u32 %v664, 4294901760
    %2627 = vmatprep.subr.mxu0 %v2626
    %v2628 = vand.u32 %v663, 4294901760
    %2629 = vmatpush1.msra.mxu0 %v2628
    %2630 = vmatprep.subr.mxu0 0.0
    %2631 = vmatpush1.msra.mxu0 0.0
    %2632 = vmatprep.subr.mxu0 0.0
    %2633 = vmatpush1.msra.mxu0 0.0
    %2634 = vmatprep.subr.mxu0 0.0
    %2635 = vmatpush1.msra.mxu0 0.0
    %2636 = vmatprep.subr.mxu0 0.0
    %2637 = vmatpush1.msra.mxu0 0.0
    %2638 = vmatprep.subr.mxu0 0.0
    %2639 = vmatpush1.msra.mxu0 0.0
    %2640 = vmatprep.subr.mxu0 0.0
    %2641 = vmatpush1.msra.mxu0 0.0
    %2642 = vmatprep.subr.mxu0 0.0
    %2643 = vmatpush1.msra.mxu0 0.0
    %2644 = vmatprep.subr.mxu0 0.0
    %2645 = vmatpush1.msra.mxu0 0.0
    %2646 = vmatprep.subr.mxu0 0.0
    %2647 = vmatpush1.msra.mxu0 0.0
    %2648 = vmatprep.subr.mxu0 0.0
    %2649 = vmatpush1.msra.mxu0 0.0
    %2650 = vmatprep.subr.mxu0 0.0
    %2651 = vmatpush1.msra.mxu0 0.0
    %2652 = vmatprep.subr.mxu0 0.0
    %2653 = vmatpush1.msra.mxu0 0.0
    %2654 = vmatprep.subr.mxu0 0.0
    %2655 = vmatpush1.msra.mxu0 0.0
    %2656 = vmatprep.subr.mxu0 0.0
    %2657 = vmatpush1.msra.mxu0 0.0
    %2658 = vmatprep.subr.mxu0 0.0
    %2659 = vmatpush1.msra.mxu0 0.0
    %2660 = vmatprep.subr.mxu0 0.0
    %2661 = vmatpush1.msra.mxu0 0.0
    %2662 = vmatprep.subr.mxu0 0.0
    %2663 = vmatpush1.msra.mxu0 0.0
    %2664 = vmatprep.subr.mxu0 0.0
    %2665 = vmatpush1.msra.mxu0 0.0
    %2666 = vmatprep.subr.mxu0 0.0
    %2667 = vmatpush1.msra.mxu0 0.0
    %2668 = vmatprep.subr.mxu0 0.0
    %2669 = vmatpush1.msra.mxu0 0.0
    %2670 = vmatprep.subr.mxu0 0.0
    %2671 = vmatpush1.msra.mxu0 0.0
    %2672 = vmatprep.subr.mxu0 0.0
    %2673 = vmatpush1.msra.mxu0 0.0
    %2674 = vmatprep.subr.mxu0 0.0
    %2675 = vmatpush1.msra.mxu0 0.0
    %2676 = vmatprep.subr.mxu0 0.0
    %2677 = vmatpush1.msra.mxu0 0.0
    %2678 = vmatprep.mubr.f32.mxu0 0.0
    %v2679 = vand.u32 %v2037, 4294901760
    %2680 = vmatmul.mubr.f32.gmra.mrb[0].mxu0 %v2679
    %v2681 = vpop.f32.mrb[0].mxu0
    %v2682 = vadd.f32 %v2594, %v2681
    %v2683 = vpop.f32.mrb[0].mxu0
    %v2684 = vadd.f32 %v2596, %v2683
    %2685 = vdwg.mxu0
    %v2688 = vrot.slane %v2682, 2
    %v2689 = vrot.slane %v2684, 2
    %v2692 = vadd.f32 %v609, %v2688
    %v2693 = vadd.f32 %v611, %v2689
    %v2694 = vxor.u32 %v2692, 2147483648
    %v2695 = vmul.f32 %v2694, 1.442695
    %v2696 = vpow.pop %v2695
    %v2697 = vadd.f32 %v2696, 1.0
    %v2698 = vrcp.pop %v2697
    %v2699 = vmul.f32 1.0, %v2698
    %2701 = vrot.lane.b32.xlu0 %v2693, 64
    %v2702 = vpop.permute.xlu0 %2701
    %v2704 = vmul.f32 %v2699, %v2702
    %v2705 = vadd.f32 %v2693, %v2704
    %v2706 = vtanh.pop %v2705
    %v2707 = vsub.f32 1.0, %v2699
    %2709 = vrot.lane.b32.xlu0 %v2706, 64
    %v2710 = vpop.permute.xlu0 %2709
    %v2712 = vmul.f32 %v2707, %v2710
    %v2713 = vrot.slane %v2032, 6
    %v2715 = vmul.f32 %v2699, %v2713
    %v2716 = vadd.f32 %v2712, %v2715
    %v2718 = vrot.slane %v2716, 6
    %2719 = vrot.lane.b32.xlu0 %v2718, 64
    %v2720 = vpop.permute.xlu0 %2719
    %v2721 = vsel %vm665, %v2720, 0
    %v2723 = vand.u32 %v650, 4294901760
    %2724 = vmatprep.subr.mxu0 %v2723
    %v2725 = vand.u32 %v649, 4294901760
    %2726 = vmatpush1.msra.mxu0 %v2725
    %v2727 = vand.u32 %v652, 4294901760
    %2728 = vmatprep.subr.mxu0 %v2727
    %v2729 = vand.u32 %v651, 4294901760
    %2730 = vmatpush1.msra.mxu0 %v2729
    %v2731 = vand.u32 %v654, 4294901760
    %2732 = vmatprep.subr.mxu0 %v2731
    %v2733 = vand.u32 %v653, 4294901760
    %2734 = vmatpush1.msra.mxu0 %v2733
    %v2735 = vand.u32 %v656, 4294901760
    %2736 = vmatprep.subr.mxu0 %v2735
    %v2737 = vand.u32 %v655, 4294901760
    %2738 = vmatpush1.msra.mxu0 %v2737
    %v2739 = vand.u32 %v658, 4294901760
    %2740 = vmatprep.subr.mxu0 %v2739
    %v2741 = vand.u32 %v657, 4294901760
    %2742 = vmatpush1.msra.mxu0 %v2741
    %v2743 = vand.u32 %v660, 4294901760
    %2744 = vmatprep.subr.mxu0 %v2743
    %v2745 = vand.u32 %v659, 4294901760
    %2746 = vmatpush1.msra.mxu0 %v2745
    %v2747 = vand.u32 %v662, 4294901760
    %2748 = vmatprep.subr.mxu0 %v2747
    %v2749 = vand.u32 %v661, 4294901760
    %2750 = vmatpush1.msra.mxu0 %v2749
    %v2751 = vand.u32 %v664, 4294901760
    %2752 = vmatprep.subr.mxu0 %v2751
    %v2753 = vand.u32 %v663, 4294901760
    %2754 = vmatpush1.msra.mxu0 %v2753
    %2755 = vmatprep.subr.mxu0 0.0
    %2756 = vmatpush1.msra.mxu0 0.0
    %2757 = vmatprep.subr.mxu0 0.0
    %2758 = vmatpush1.msra.mxu0 0.0
    %2759 = vmatprep.subr.mxu0 0.0
    %2760 = vmatpush1.msra.mxu0 0.0
    %2761 = vmatprep.subr.mxu0 0.0
    %2762 = vmatpush1.msra.mxu0 0.0
    %2763 = vmatprep.subr.mxu0 0.0
    %2764 = vmatpush1.msra.mxu0 0.0
    %2765 = vmatprep.subr.mxu0 0.0
    %2766 = vmatpush1.msra.mxu0 0.0
    %2767 = vmatprep.subr.mxu0 0.0
    %2768 = vmatpush1.msra.mxu0 0.0
    %2769 = vmatprep.subr.mxu0 0.0
    %2770 = vmatpush1.msra.mxu0 0.0
    %2771 = vmatprep.subr.mxu0 0.0
    %2772 = vmatpush1.msra.mxu0 0.0
    %2773 = vmatprep.subr.mxu0 0.0
    %2774 = vmatpush1.msra.mxu0 0.0
    %2775 = vmatprep.subr.mxu0 0.0
    %2776 = vmatpush1.msra.mxu0 0.0
    %2777 = vmatprep.subr.mxu0 0.0
    %2778 = vmatpush1.msra.mxu0 0.0
    %2779 = vmatprep.subr.mxu0 0.0
    %2780 = vmatpush1.msra.mxu0 0.0
    %2781 = vmatprep.subr.mxu0 0.0
    %2782 = vmatpush1.msra.mxu0 0.0
    %2783 = vmatprep.subr.mxu0 0.0
    %2784 = vmatpush1.msra.mxu0 0.0
    %2785 = vmatprep.subr.mxu0 0.0
    %2786 = vmatpush1.msra.mxu0 0.0
    %2787 = vmatprep.subr.mxu0 0.0
    %2788 = vmatpush1.msra.mxu0 0.0
    %2789 = vmatprep.subr.mxu0 0.0
    %2790 = vmatpush1.msra.mxu0 0.0
    %2791 = vmatprep.subr.mxu0 0.0
    %2792 = vmatpush1.msra.mxu0 0.0
    %2793 = vmatprep.subr.mxu0 0.0
    %2794 = vmatpush1.msra.mxu0 0.0
    %2795 = vmatprep.subr.mxu0 0.0
    %2796 = vmatpush1.msra.mxu0 0.0
    %2797 = vmatprep.subr.mxu0 0.0
    %2798 = vmatpush1.msra.mxu0 0.0
    %2799 = vmatprep.subr.mxu0 0.0
    %2800 = vmatpush1.msra.mxu0 0.0
    %2801 = vmatprep.subr.mxu0 0.0
    %2802 = vmatpush1.msra.mxu0 0.0
    %2803 = vmatprep.mubr.f32.mxu0 0.0
    %v2804 = vand.u32 %v2721, 4294901760
    %v2805 = vsub.f32 %v2721, %v2804
    %v2806 = vand.u32 %v2805, 4294901760
    %v2807 = vsub.f32 %v2805, %v2806
    %v2808 = vand.u32 %v2807, 4294901760
    %2809 = vmatmul.mubr.f32.gmra.mrb[0].mxu0 %v2808
    %v2810 = vpop.f32.mrb[0].mxu0
    %v2811 = vadd.f32 0.0, %v2810
    %v2812 = vpop.f32.mrb[0].mxu0
    %v2813 = vadd.f32 0.0, %v2812
    %2814 = vdwg.mxu0
    %v2815 = vand.u32 %v650, 4294901760
    %v2816 = vsub.f32 %v650, %v2815
    %v2817 = vand.u32 %v2816, 4294901760
    %v2818 = vsub.f32 %v2816, %v2817
    %v2819 = vand.u32 %v2818, 4294901760
    %2820 = vmatprep.subr.mxu0 %v2819
    %v2821 = vand.u32 %v649, 4294901760
    %v2822 = vsub.f32 %v649, %v2821
    %v2823 = vand.u32 %v2822, 4294901760
    %v2824 = vsub.f32 %v2822, %v2823
    %v2825 = vand.u32 %v2824, 4294901760
    %2826 = vmatpush1.msra.mxu0 %v2825
    %v2827 = vand.u32 %v652, 4294901760
    %v2828 = vsub.f32 %v652, %v2827
    %v2829 = vand.u32 %v2828, 4294901760
    %v2830 = vsub.f32 %v2828, %v2829
    %v2831 = vand.u32 %v2830, 4294901760
    %2832 = vmatprep.subr.mxu0 %v2831
    %v2833 = vand.u32 %v651, 4294901760
    %v2834 = vsub.f32 %v651, %v2833
    %v2835 = vand.u32 %v2834, 4294901760
    %v2836 = vsub.f32 %v2834, %v2835
    %v2837 = vand.u32 %v2836, 4294901760
    %2838 = vmatpush1.msra.mxu0 %v2837
    %v2839 = vand.u32 %v654, 4294901760
    %v2840 = vsub.f32 %v654, %v2839
    %v2841 = vand.u32 %v2840, 4294901760
    %v2842 = vsub.f32 %v2840, %v2841
    %v2843 = vand.u32 %v2842, 4294901760
    %2844 = vmatprep.subr.mxu0 %v2843
    %v2845 = vand.u32 %v653, 4294901760
    %v2846 = vsub.f32 %v653, %v2845
    %v2847 = vand.u32 %v2846, 4294901760
    %v2848 = vsub.f32 %v2846, %v2847
    %v2849 = vand.u32 %v2848, 4294901760
    %2850 = vmatpush1.msra.mxu0 %v2849
    %v2851 = vand.u32 %v656, 4294901760
    %v2852 = vsub.f32 %v656, %v2851
    %v2853 = vand.u32 %v2852, 4294901760
    %v2854 = vsub.f32 %v2852, %v2853
    %v2855 = vand.u32 %v2854, 4294901760
    %2856 = vmatprep.subr.mxu0 %v2855
    %v2857 = vand.u32 %v655, 4294901760
    %v2858 = vsub.f32 %v655, %v2857
    %v2859 = vand.u32 %v2858, 4294901760
    %v2860 = vsub.f32 %v2858, %v2859
    %v2861 = vand.u32 %v2860, 4294901760
    %2862 = vmatpush1.msra.mxu0 %v2861
    %v2863 = vand.u32 %v658, 4294901760
    %v2864 = vsub.f32 %v658, %v2863
    %v2865 = vand.u32 %v2864, 4294901760
    %v2866 = vsub.f32 %v2864, %v2865
    %v2867 = vand.u32 %v2866, 4294901760
    %2868 = vmatprep.subr.mxu0 %v2867
    %v2869 = vand.u32 %v657, 4294901760
    %v2870 = vsub.f32 %v657, %v2869
    %v2871 = vand.u32 %v2870, 4294901760
    %v2872 = vsub.f32 %v2870, %v2871
    %v2873 = vand.u32 %v2872, 4294901760
    %2874 = vmatpush1.msra.mxu0 %v2873
    %v2875 = vand.u32 %v660, 4294901760
    %v2876 = vsub.f32 %v660, %v2875
    %v2877 = vand.u32 %v2876, 4294901760
    %v2878 = vsub.f32 %v2876, %v2877
    %v2879 = vand.u32 %v2878, 4294901760
    %2880 = vmatprep.subr.mxu0 %v2879
    %v2881 = vand.u32 %v659, 4294901760
    %v2882 = vsub.f32 %v659, %v2881
    %v2883 = vand.u32 %v2882, 4294901760
    %v2884 = vsub.f32 %v2882, %v2883
    %v2885 = vand.u32 %v2884, 4294901760
    %2886 = vmatpush1.msra.mxu0 %v2885
    %v2887 = vand.u32 %v662, 4294901760
    %v2888 = vsub.f32 %v662, %v2887
    %v2889 = vand.u32 %v2888, 4294901760
    %v2890 = vsub.f32 %v2888, %v2889
    %v2891 = vand.u32 %v2890, 4294901760
    %2892 = vmatprep.subr.mxu0 %v2891
    %v2893 = vand.u32 %v661, 4294901760
    %v2894 = vsub.f32 %v661, %v2893
    %v2895 = vand.u32 %v2894, 4294901760
    %v2896 = vsub.f32 %v2894, %v2895
    %v2897 = vand.u32 %v2896, 4294901760
    %2898 = vmatpush1.msra.mxu0 %v2897
    %v2899 = vand.u32 %v664, 4294901760
    %v2900 = vsub.f32 %v664, %v2899
    %v2901 = vand.u32 %v2900, 4294901760
    %v2902 = vsub.f32 %v2900, %v2901
    %v2903 = vand.u32 %v2902, 4294901760
    %2904 = vmatprep.subr.mxu0 %v2903
    %v2905 = vand.u32 %v663, 4294901760
    %v2906 = vsub.f32 %v663, %v2905
    %v2907 = vand.u32 %v2906, 4294901760
    %v2908 = vsub.f32 %v2906, %v2907
    %v2909 = vand.u32 %v2908, 4294901760
    %2910 = vmatpush1.msra.mxu0 %v2909
    %2911 = vmatprep.subr.mxu0 0.0
    %2912 = vmatpush1.msra.mxu0 0.0
    %2913 = vmatprep.subr.mxu0 0.0
    %2914 = vmatpush1.msra.mxu0 0.0
    %2915 = vmatprep.subr.mxu0 0.0
    %2916 = vmatpush1.msra.mxu0 0.0
    %2917 = vmatprep.subr.mxu0 0.0
    %2918 = vmatpush1.msra.mxu0 0.0
    %2919 = vmatprep.subr.mxu0 0.0
    %2920 = vmatpush1.msra.mxu0 0.0
    %2921 = vmatprep.subr.mxu0 0.0
    %2922 = vmatpush1.msra.mxu0 0.0
    %2923 = vmatprep.subr.mxu0 0.0
    %2924 = vmatpush1.msra.mxu0 0.0
    %2925 = vmatprep.subr.mxu0 0.0
    %2926 = vmatpush1.msra.mxu0 0.0
    %2927 = vmatprep.subr.mxu0 0.0
    %2928 = vmatpush1.msra.mxu0 0.0
    %2929 = vmatprep.subr.mxu0 0.0
    %2930 = vmatpush1.msra.mxu0 0.0
    %2931 = vmatprep.subr.mxu0 0.0
    %2932 = vmatpush1.msra.mxu0 0.0
    %2933 = vmatprep.subr.mxu0 0.0
    %2934 = vmatpush1.msra.mxu0 0.0
    %2935 = vmatprep.subr.mxu0 0.0
    %2936 = vmatpush1.msra.mxu0 0.0
    %2937 = vmatprep.subr.mxu0 0.0
    %2938 = vmatpush1.msra.mxu0 0.0
    %2939 = vmatprep.subr.mxu0 0.0
    %2940 = vmatpush1.msra.mxu0 0.0
    %2941 = vmatprep.subr.mxu0 0.0
    %2942 = vmatpush1.msra.mxu0 0.0
    %2943 = vmatprep.subr.mxu0 0.0
    %2944 = vmatpush1.msra.mxu0 0.0
    %2945 = vmatprep.subr.mxu0 0.0
    %2946 = vmatpush1.msra.mxu0 0.0
    %2947 = vmatprep.subr.mxu0 0.0
    %2948 = vmatpush1.msra.mxu0 0.0
    %2949 = vmatprep.subr.mxu0 0.0
    %2950 = vmatpush1.msra.mxu0 0.0
    %2951 = vmatprep.subr.mxu0 0.0
    %2952 = vmatpush1.msra.mxu0 0.0
    %2953 = vmatprep.subr.mxu0 0.0
    %2954 = vmatpush1.msra.mxu0 0.0
    %2955 = vmatprep.subr.mxu0 0.0
    %2956 = vmatpush1.msra.mxu0 0.0
    %2957 = vmatprep.subr.mxu0 0.0
    %2958 = vmatpush1.msra.mxu0 0.0
    %2959 = vmatprep.mubr.f32.mxu0 0.0
    %v2960 = vand.u32 %v2721, 4294901760
    %2961 = vmatmul.mubr.f32.gmra.mrb[0].mxu0 %v2960
    %v2962 = vpop.f32.mrb[0].mxu0
    %v2963 = vadd.f32 %v2811, %v2962
    %v2964 = vpop.f32.mrb[0].mxu0
    %v2965 = vadd.f32 %v2813, %v2964
    %2966 = vdwg.mxu0
    %v2967 = vand.u32 %v650, 4294901760
    %v2968 = vsub.f32 %v650, %v2967
    %2969 = vmatprep.subr.mxu0 %v2968
    %v2970 = vand.u32 %v649, 4294901760
    %v2971 = vsub.f32 %v649, %v2970
    %2972 = vmatpush1.msra.mxu0 %v2971
    %v2973 = vand.u32 %v652, 4294901760
    %v2974 = vsub.f32 %v652, %v2973
    %2975 = vmatprep.subr.mxu0 %v2974
    %v2976 = vand.u32 %v651, 4294901760
    %v2977 = vsub.f32 %v651, %v2976
    %2978 = vmatpush1.msra.mxu0 %v2977
    %v2979 = vand.u32 %v654, 4294901760
    %v2980 = vsub.f32 %v654, %v2979
    %2981 = vmatprep.subr.mxu0 %v2980
    %v2982 = vand.u32 %v653, 4294901760
    %v2983 = vsub.f32 %v653, %v2982
    %2984 = vmatpush1.msra.mxu0 %v2983
    %v2985 = vand.u32 %v656, 4294901760
    %v2986 = vsub.f32 %v656, %v2985
    %2987 = vmatprep.subr.mxu0 %v2986
    %v2988 = vand.u32 %v655, 4294901760
    %v2989 = vsub.f32 %v655, %v2988
    %2990 = vmatpush1.msra.mxu0 %v2989
    %v2991 = vand.u32 %v658, 4294901760
    %v2992 = vsub.f32 %v658, %v2991
    %2993 = vmatprep.subr.mxu0 %v2992
    %v2994 = vand.u32 %v657, 4294901760
    %v2995 = vsub.f32 %v657, %v2994
    %2996 = vmatpush1.msra.mxu0 %v2995
    %v2997 = vand.u32 %v660, 4294901760
    %v2998 = vsub.f32 %v660, %v2997
    %2999 = vmatprep.subr.mxu0 %v2998
    %v3000 = vand.u32 %v659, 4294901760
    %v3001 = vsub.f32 %v659, %v3000
    %3002 = vmatpush1.msra.mxu0 %v3001
    %v3003 = vand.u32 %v662, 4294901760
    %v3004 = vsub.f32 %v662, %v3003
    %3005 = vmatprep.subr.mxu0 %v3004
    %v3006 = vand.u32 %v661, 4294901760
    %v3007 = vsub.f32 %v661, %v3006
    %3008 = vmatpush1.msra.mxu0 %v3007
    %v3009 = vand.u32 %v664, 4294901760
    %v3010 = vsub.f32 %v664, %v3009
    %3011 = vmatprep.subr.mxu0 %v3010
    %v3012 = vand.u32 %v663, 4294901760
    %v3013 = vsub.f32 %v663, %v3012
    %3014 = vmatpush1.msra.mxu0 %v3013
    %3015 = vmatprep.subr.mxu0 0.0
    %3016 = vmatpush1.msra.mxu0 0.0
    %3017 = vmatprep.subr.mxu0 0.0
    %3018 = vmatpush1.msra.mxu0 0.0
    %3019 = vmatprep.subr.mxu0 0.0
    %3020 = vmatpush1.msra.mxu0 0.0
    %3021 = vmatprep.subr.mxu0 0.0
    %3022 = vmatpush1.msra.mxu0 0.0
    %3023 = vmatprep.subr.mxu0 0.0
    %3024 = vmatpush1.msra.mxu0 0.0
    %3025 = vmatprep.subr.mxu0 0.0
    %3026 = vmatpush1.msra.mxu0 0.0
    %3027 = vmatprep.subr.mxu0 0.0
    %3028 = vmatpush1.msra.mxu0 0.0
    %3029 = vmatprep.subr.mxu0 0.0
    %3030 = vmatpush1.msra.mxu0 0.0
    %3031 = vmatprep.subr.mxu0 0.0
    %3032 = vmatpush1.msra.mxu0 0.0
    %3033 = vmatprep.subr.mxu0 0.0
    %3034 = vmatpush1.msra.mxu0 0.0
    %3035 = vmatprep.subr.mxu0 0.0
    %3036 = vmatpush1.msra.mxu0 0.0
    %3037 = vmatprep.subr.mxu0 0.0
    %3038 = vmatpush1.msra.mxu0 0.0
    %3039 = vmatprep.subr.mxu0 0.0
    %3040 = vmatpush1.msra.mxu0 0.0
    %3041 = vmatprep.subr.mxu0 0.0
    %3042 = vmatpush1.msra.mxu0 0.0
    %3043 = vmatprep.subr.mxu0 0.0
    %3044 = vmatpush1.msra.mxu0 0.0
    %3045 = vmatprep.subr.mxu0 0.0
    %3046 = vmatpush1.msra.mxu0 0.0
    %3047 = vmatprep.subr.mxu0 0.0
    %3048 = vmatpush1.msra.mxu0 0.0
    %3049 = vmatprep.subr.mxu0 0.0
    %3050 = vmatpush1.msra.mxu0 0.0
    %3051 = vmatprep.subr.mxu0 0.0
    %3052 = vmatpush1.msra.mxu0 0.0
    %3053 = vmatprep.subr.mxu0 0.0
    %3054 = vmatpush1.msra.mxu0 0.0
    %3055 = vmatprep.subr.mxu0 0.0
    %3056 = vmatpush1.msra.mxu0 0.0
    %3057 = vmatprep.subr.mxu0 0.0
    %3058 = vmatpush1.msra.mxu0 0.0
    %3059 = vmatprep.subr.mxu0 0.0
    %3060 = vmatpush1.msra.mxu0 0.0
    %3061 = vmatprep.subr.mxu0 0.0
    %3062 = vmatpush1.msra.mxu0 0.0
    %3063 = vmatprep.mubr.f32.mxu0 0.0
    %v3064 = vand.u32 %v2721, 4294901760
    %v3065 = vsub.f32 %v2721, %v3064
    %3066 = vmatmul.mubr.f32.gmra.mrb[0].mxu0 %v3065
    %v3067 = vpop.f32.mrb[0].mxu0
    %v3068 = vadd.f32 %v2963, %v3067
    %v3069 = vpop.f32.mrb[0].mxu0
    %v3070 = vadd.f32 %v2965, %v3069
    %3071 = vdwg.mxu0
    %v3072 = vand.u32 %v650, 4294901760
    %3073 = vmatprep.subr.mxu0 %v3072
    %v3074 = vand.u32 %v649, 4294901760
    %3075 = vmatpush1.msra.mxu0 %v3074
    %v3076 = vand.u32 %v652, 4294901760
    %3077 = vmatprep.subr.mxu0 %v3076
    %v3078 = vand.u32 %v651, 4294901760
    %3079 = vmatpush1.msra.mxu0 %v3078
    %v3080 = vand.u32 %v654, 4294901760
    %3081 = vmatprep.subr.mxu0 %v3080
    %v3082 = vand.u32 %v653, 4294901760
    %3083 = vmatpush1.msra.mxu0 %v3082
    %v3084 = vand.u32 %v656, 4294901760
    %3085 = vmatprep.subr.mxu0 %v3084
    %v3086 = vand.u32 %v655, 4294901760
    %3087 = vmatpush1.msra.mxu0 %v3086
    %v3088 = vand.u32 %v658, 4294901760
    %3089 = vmatprep.subr.mxu0 %v3088
    %v3090 = vand.u32 %v657, 4294901760
    %3091 = vmatpush1.msra.mxu0 %v3090
    %v3092 = vand.u32 %v660, 4294901760
    %3093 = vmatprep.subr.mxu0 %v3092
    %v3094 = vand.u32 %v659, 4294901760
    %3095 = vmatpush1.msra.mxu0 %v3094
    %v3096 = vand.u32 %v662, 4294901760
    %3097 = vmatprep.subr.mxu0 %v3096
    %v3098 = vand.u32 %v661, 4294901760
    %3099 = vmatpush1.msra.mxu0 %v3098
    %v3100 = vand.u32 %v664, 4294901760
    %3101 = vmatprep.subr.mxu0 %v3100
    %v3102 = vand.u32 %v663, 4294901760
    %3103 = vmatpush1.msra.mxu0 %v3102
    %3104 = vmatprep.subr.mxu0 0.0
    %3105 = vmatpush1.msra.mxu0 0.0
    %3106 = vmatprep.subr.mxu0 0.0
    %3107 = vmatpush1.msra.mxu0 0.0
    %3108 = vmatprep.subr.mxu0 0.0
    %3109 = vmatpush1.msra.mxu0 0.0
    %3110 = vmatprep.subr.mxu0 0.0
    %3111 = vmatpush1.msra.mxu0 0.0
    %3112 = vmatprep.subr.mxu0 0.0
    %3113 = vmatpush1.msra.mxu0 0.0
    %3114 = vmatprep.subr.mxu0 0.0
    %3115 = vmatpush1.msra.mxu0 0.0
    %3116 = vmatprep.subr.mxu0 0.0
    %3117 = vmatpush1.msra.mxu0 0.0
    %3118 = vmatprep.subr.mxu0 0.0
    %3119 = vmatpush1.msra.mxu0 0.0
    %3120 = vmatprep.subr.mxu0 0.0
    %3121 = vmatpush1.msra.mxu0 0.0
    %3122 = vmatprep.subr.mxu0 0.0
    %3123 = vmatpush1.msra.mxu0 0.0
    %3124 = vmatprep.subr.mxu0 0.0
    %3125 = vmatpush1.msra.mxu0 0.0
    %3126 = vmatprep.subr.mxu0 0.0
    %3127 = vmatpush1.msra.mxu0 0.0
    %3128 = vmatprep.subr.mxu0 0.0
    %3129 = vmatpush1.msra.mxu0 0.0
    %3130 = vmatprep.subr.mxu0 0.0
    %3131 = vmatpush1.msra.mxu0 0.0
    %3132 = vmatprep.subr.mxu0 0.0
    %3133 = vmatpush1.msra.mxu0 0.0
    %3134 = vmatprep.subr.mxu0 0.0
    %3135 = vmatpush1.msra.mxu0 0.0
    %3136 = vmatprep.subr.mxu0 0.0
    %3137 = vmatpush1.msra.mxu0 0.0
    %3138 = vmatprep.subr.mxu0 0.0
    %3139 = vmatpush1.msra.mxu0 0.0
    %3140 = vmatprep.subr.mxu0 0.0
    %3141 = vmatpush1.msra.mxu0 0.0
    %3142 = vmatprep.subr.mxu0 0.0
    %3143 = vmatpush1.msra.mxu0 0.0
    %3144 = vmatprep.subr.mxu0 0.0
    %3145 = vmatpush1.msra.mxu0 0.0
    %3146 = vmatprep.subr.mxu0 0.0
    %3147 = vmatpush1.msra.mxu0 0.0
    %3148 = vmatprep.subr.mxu0 0.0
    %3149 = vmatpush1.msra.mxu0 0.0
    %3150 = vmatprep.subr.mxu0 0.0
    %3151 = vmatpush1.msra.mxu0 0.0
    %3152 = vmatprep.mubr.f32.mxu0 0.0
    %v3153 = vand.u32 %v2721, 4294901760
    %v3154 = vsub.f32 %v2721, %v3153
    %v3155 = vand.u32 %v3154, 4294901760
    %3156 = vmatmul.mubr.f32.gmra.mrb[0].mxu0 %v3155
    %v3157 = vpop.f32.mrb[0].mxu0
    %v3158 = vadd.f32 %v3068, %v3157
    %v3159 = vpop.f32.mrb[0].mxu0
    %v3160 = vadd.f32 %v3070, %v3159
    %3161 = vdwg.mxu0
    %v3162 = vand.u32 %v650, 4294901760
    %v3163 = vsub.f32 %v650, %v3162
    %v3164 = vand.u32 %v3163, 4294901760
    %3165 = vmatprep.subr.mxu0 %v3164
    %v3166 = vand.u32 %v649, 4294901760
    %v3167 = vsub.f32 %v649, %v3166
    %v3168 = vand.u32 %v3167, 4294901760
    %3169 = vmatpush1.msra.mxu0 %v3168
    %v3170 = vand.u32 %v652, 4294901760
    %v3171 = vsub.f32 %v652, %v3170
    %v3172 = vand.u32 %v3171, 4294901760
    %3173 = vmatprep.subr.mxu0 %v3172
    %v3174 = vand.u32 %v651, 4294901760
    %v3175 = vsub.f32 %v651, %v3174
    %v3176 = vand.u32 %v3175, 4294901760
    %3177 = vmatpush1.msra.mxu0 %v3176
    %v3178 = vand.u32 %v654, 4294901760
    %v3179 = vsub.f32 %v654, %v3178
    %v3180 = vand.u32 %v3179, 4294901760
    %3181 = vmatprep.subr.mxu0 %v3180
    %v3182 = vand.u32 %v653, 4294901760
    %v3183 = vsub.f32 %v653, %v3182
    %v3184 = vand.u32 %v3183, 4294901760
    %3185 = vmatpush1.msra.mxu0 %v3184
    %v3186 = vand.u32 %v656, 4294901760
    %v3187 = vsub.f32 %v656, %v3186
    %v3188 = vand.u32 %v3187, 4294901760
    %3189 = vmatprep.subr.mxu0 %v3188
    %v3190 = vand.u32 %v655, 4294901760
    %v3191 = vsub.f32 %v655, %v3190
    %v3192 = vand.u32 %v3191, 4294901760
    %3193 = vmatpush1.msra.mxu0 %v3192
    %v3194 = vand.u32 %v658, 4294901760
    %v3195 = vsub.f32 %v658, %v3194
    %v3196 = vand.u32 %v3195, 4294901760
    %3197 = vmatprep.subr.mxu0 %v3196
    %v3198 = vand.u32 %v657, 4294901760
    %v3199 = vsub.f32 %v657, %v3198
    %v3200 = vand.u32 %v3199, 4294901760
    %3201 = vmatpush1.msra.mxu0 %v3200
    %v3202 = vand.u32 %v660, 4294901760
    %v3203 = vsub.f32 %v660, %v3202
    %v3204 = vand.u32 %v3203, 4294901760
    %3205 = vmatprep.subr.mxu0 %v3204
    %v3206 = vand.u32 %v659, 4294901760
    %v3207 = vsub.f32 %v659, %v3206
    %v3208 = vand.u32 %v3207, 4294901760
    %3209 = vmatpush1.msra.mxu0 %v3208
    %v3210 = vand.u32 %v662, 4294901760
    %v3211 = vsub.f32 %v662, %v3210
    %v3212 = vand.u32 %v3211, 4294901760
    %3213 = vmatprep.subr.mxu0 %v3212
    %v3214 = vand.u32 %v661, 4294901760
    %v3215 = vsub.f32 %v661, %v3214
    %v3216 = vand.u32 %v3215, 4294901760
    %3217 = vmatpush1.msra.mxu0 %v3216
    %v3218 = vand.u32 %v664, 4294901760
    %v3219 = vsub.f32 %v664, %v3218
    %v3220 = vand.u32 %v3219, 4294901760
    %3221 = vmatprep.subr.mxu0 %v3220
    %v3222 = vand.u32 %v663, 4294901760
    %v3223 = vsub.f32 %v663, %v3222
    %v3224 = vand.u32 %v3223, 4294901760
    %3225 = vmatpush1.msra.mxu0 %v3224
    %3226 = vmatprep.subr.mxu0 0.0
    %3227 = vmatpush1.msra.mxu0 0.0
    %3228 = vmatprep.subr.mxu0 0.0
    %3229 = vmatpush1.msra.mxu0 0.0
    %3230 = vmatprep.subr.mxu0 0.0
    %3231 = vmatpush1.msra.mxu0 0.0
    %3232 = vmatprep.subr.mxu0 0.0
    %3233 = vmatpush1.msra.mxu0 0.0
    %3234 = vmatprep.subr.mxu0 0.0
    %3235 = vmatpush1.msra.mxu0 0.0
    %3236 = vmatprep.subr.mxu0 0.0
    %3237 = vmatpush1.msra.mxu0 0.0
    %3238 = vmatprep.subr.mxu0 0.0
    %3239 = vmatpush1.msra.mxu0 0.0
    %3240 = vmatprep.subr.mxu0 0.0
    %3241 = vmatpush1.msra.mxu0 0.0
    %3242 = vmatprep.subr.mxu0 0.0
    %3243 = vmatpush1.msra.mxu0 0.0
    %3244 = vmatprep.subr.mxu0 0.0
    %3245 = vmatpush1.msra.mxu0 0.0
    %3246 = vmatprep.subr.mxu0 0.0
    %3247 = vmatpush1.msra.mxu0 0.0
    %3248 = vmatprep.subr.mxu0 0.0
    %3249 = vmatpush1.msra.mxu0 0.0
    %3250 = vmatprep.subr.mxu0 0.0
    %3251 = vmatpush1.msra.mxu0 0.0
    %3252 = vmatprep.subr.mxu0 0.0
    %3253 = vmatpush1.msra.mxu0 0.0
    %3254 = vmatprep.subr.mxu0 0.0
    %3255 = vmatpush1.msra.mxu0 0.0
    %3256 = vmatprep.subr.mxu0 0.0
    %3257 = vmatpush1.msra.mxu0 0.0
    %3258 = vmatprep.subr.mxu0 0.0
    %3259 = vmatpush1.msra.mxu0 0.0
    %3260 = vmatprep.subr.mxu0 0.0
    %3261 = vmatpush1.msra.mxu0 0.0
    %3262 = vmatprep.subr.mxu0 0.0
    %3263 = vmatpush1.msra.mxu0 0.0
    %3264 = vmatprep.subr.mxu0 0.0
    %3265 = vmatpush1.msra.mxu0 0.0
    %3266 = vmatprep.subr.mxu0 0.0
    %3267 = vmatpush1.msra.mxu0 0.0
    %3268 = vmatprep.subr.mxu0 0.0
    %3269 = vmatpush1.msra.mxu0 0.0
    %3270 = vmatprep.subr.mxu0 0.0
    %3271 = vmatpush1.msra.mxu0 0.0
    %3272 = vmatprep.subr.mxu0 0.0
    %3273 = vmatpush1.msra.mxu0 0.0
    %3274 = vmatprep.mubr.f32.mxu0 0.0
    %v3275 = vand.u32 %v2721, 4294901760
    %3276 = vmatmul.mubr.f32.gmra.mrb[0].mxu0 %v3275
    %v3277 = vpop.f32.mrb[0].mxu0
    %v3278 = vadd.f32 %v3158, %v3277
    %v3279 = vpop.f32.mrb[0].mxu0
    %v3280 = vadd.f32 %v3160, %v3279
    %3281 = vdwg.mxu0
    %v3282 = vand.u32 %v650, 4294901760
    %3283 = vmatprep.subr.mxu0 %v3282
    %v3284 = vand.u32 %v649, 4294901760
    %3285 = vmatpush1.msra.mxu0 %v3284
    %v3286 = vand.u32 %v652, 4294901760
    %3287 = vmatprep.subr.mxu0 %v3286
    %v3288 = vand.u32 %v651, 4294901760
    %3289 = vmatpush1.msra.mxu0 %v3288
    %v3290 = vand.u32 %v654, 4294901760
    %3291 = vmatprep.subr.mxu0 %v3290
    %v3292 = vand.u32 %v653, 4294901760
    %3293 = vmatpush1.msra.mxu0 %v3292
    %v3294 = vand.u32 %v656, 4294901760
    %3295 = vmatprep.subr.mxu0 %v3294
    %v3296 = vand.u32 %v655, 4294901760
    %3297 = vmatpush1.msra.mxu0 %v3296
    %v3298 = vand.u32 %v658, 4294901760
    %3299 = vmatprep.subr.mxu0 %v3298
    %v3300 = vand.u32 %v657, 4294901760
    %3301 = vmatpush1.msra.mxu0 %v3300
    %v3302 = vand.u32 %v660, 4294901760
    %3303 = vmatprep.subr.mxu0 %v3302
    %v3304 = vand.u32 %v659, 4294901760
    %3305 = vmatpush1.msra.mxu0 %v3304
    %v3306 = vand.u32 %v662, 4294901760
    %3307 = vmatprep.subr.mxu0 %v3306
    %v3308 = vand.u32 %v661, 4294901760
    %3309 = vmatpush1.msra.mxu0 %v3308
    %v3310 = vand.u32 %v664, 4294901760
    %3311 = vmatprep.subr.mxu0 %v3310
    %v3312 = vand.u32 %v663, 4294901760
    %3313 = vmatpush1.msra.mxu0 %v3312
    %3314 = vmatprep.subr.mxu0 0.0
    %3315 = vmatpush1.msra.mxu0 0.0
    %3316 = vmatprep.subr.mxu0 0.0
    %3317 = vmatpush1.msra.mxu0 0.0
    %3318 = vmatprep.subr.mxu0 0.0
    %3319 = vmatpush1.msra.mxu0 0.0
    %3320 = vmatprep.subr.mxu0 0.0
    %3321 = vmatpush1.msra.mxu0 0.0
    %3322 = vmatprep.subr.mxu0 0.0
    %3323 = vmatpush1.msra.mxu0 0.0
    %3324 = vmatprep.subr.mxu0 0.0
    %3325 = vmatpush1.msra.mxu0 0.0
    %3326 = vmatprep.subr.mxu0 0.0
    %3327 = vmatpush1.msra.mxu0 0.0
    %3328 = vmatprep.subr.mxu0 0.0
    %3329 = vmatpush1.msra.mxu0 0.0
    %3330 = vmatprep.subr.mxu0 0.0
    %3331 = vmatpush1.msra.mxu0 0.0
    %3332 = vmatprep.subr.mxu0 0.0
    %3333 = vmatpush1.msra.mxu0 0.0
    %3334 = vmatprep.subr.mxu0 0.0
    %3335 = vmatpush1.msra.mxu0 0.0
    %3336 = vmatprep.subr.mxu0 0.0
    %3337 = vmatpush1.msra.mxu0 0.0
    %3338 = vmatprep.subr.mxu0 0.0
    %3339 = vmatpush1.msra.mxu0 0.0
    %3340 = vmatprep.subr.mxu0 0.0
    %3341 = vmatpush1.msra.mxu0 0.0
    %3342 = vmatprep.subr.mxu0 0.0
    %3343 = vmatpush1.msra.mxu0 0.0
    %3344 = vmatprep.subr.mxu0 0.0
    %3345 = vmatpush1.msra.mxu0 0.0
    %3346 = vmatprep.subr.mxu0 0.0
    %3347 = vmatpush1.msra.mxu0 0.0
    %3348 = vmatprep.subr.mxu0 0.0
    %3349 = vmatpush1.msra.mxu0 0.0
    %3350 = vmatprep.subr.mxu0 0.0
    %3351 = vmatpush1.msra.mxu0 0.0
    %3352 = vmatprep.subr.mxu0 0.0
    %3353 = vmatpush1.msra.mxu0 0.0
    %3354 = vmatprep.subr.mxu0 0.0
    %3355 = vmatpush1.msra.mxu0 0.0
    %3356 = vmatprep.subr.mxu0 0.0
    %3357 = vmatpush1.msra.mxu0 0.0
    %3358 = vmatprep.subr.mxu0 0.0
    %3359 = vmatpush1.msra.mxu0 0.0
    %3360 = vmatprep.subr.mxu0 0.0
    %3361 = vmatpush1.msra.mxu0 0.0
    %3362 = vmatprep.mubr.f32.mxu0 0.0
    %v3363 = vand.u32 %v2721, 4294901760
    %3364 = vmatmul.mubr.f32.gmra.mrb[0].mxu0 %v3363
    %v3365 = vpop.f32.mrb[0].mxu0
    %v3366 = vadd.f32 %v3278, %v3365
    %v3367 = vpop.f32.mrb[0].mxu0
    %v3368 = vadd.f32 %v3280, %v3367
    %3369 = vdwg.mxu0
    %v3370 = vadd.f32 %v616, %v3366
    %v3371 = vadd.f32 %v618, %v3368
    %v3372 = vxor.u32 %v3370, 2147483648
    %v3373 = vmul.f32 %v3372, 1.442695
    %v3374 = vpow.pop %v3373
    %v3375 = vadd.f32 %v3374, 1.0
    %v3376 = vrcp.pop %v3375
    %v3377 = vmul.f32 1.0, %v3376
    %3379 = vrot.lane.b32.xlu0 %v3371, 64
    %v3380 = vpop.permute.xlu0 %3379
    %v3382 = vmul.f32 %v3377, %v3380
    %v3383 = vadd.f32 %v3371, %v3382
    %v3384 = vtanh.pop %v3383
    %v3385 = vsub.f32 1.0, %v3377
    %3387 = vrot.lane.b32.xlu0 %v3384, 64
    %v3388 = vpop.permute.xlu0 %3387
    %v3390 = vmul.f32 %v3385, %v3388
    %v3392 = vmul.f32 %v3377, %v2718
    %v3393 = vadd.f32 %v3390, %v3392
    %3395 = vrot.lane.b32.xlu0 %v3393, 64
    %v3396 = vpop.permute.xlu0 %3395
    %v3397 = vsel %vm665, %v3396, 0
    %v3399 = vand.u32 %v650, 4294901760
    %3400 = vmatprep.subr.mxu0 %v3399
    %v3401 = vand.u32 %v649, 4294901760
    %3402 = vmatpush1.msra.mxu0 %v3401
    %v3403 = vand.u32 %v652, 4294901760
    %3404 = vmatprep.subr.mxu0 %v3403
    %v3405 = vand.u32 %v651, 4294901760
    %3406 = vmatpush1.msra.mxu0 %v3405
    %v3407 = vand.u32 %v654, 4294901760
    %3408 = vmatprep.subr.mxu0 %v3407
    %v3409 = vand.u32 %v653, 4294901760
    %3410 = vmatpush1.msra.mxu0 %v3409
    %v3411 = vand.u32 %v656, 4294901760
    %3412 = vmatprep.subr.mxu0 %v3411
    %v3413 = vand.u32 %v655, 4294901760
    %3414 = vmatpush1.msra.mxu0 %v3413
    %v3415 = vand.u32 %v658, 4294901760
    %3416 = vmatprep.subr.mxu0 %v3415
    %v3417 = vand.u32 %v657, 4294901760
    %3418 = vmatpush1.msra.mxu0 %v3417
    %v3419 = vand.u32 %v660, 4294901760
    %3420 = vmatprep.subr.mxu0 %v3419
    %v3421 = vand.u32 %v659, 4294901760
    %3422 = vmatpush1.msra.mxu0 %v3421
    %v3423 = vand.u32 %v662, 4294901760
    %3424 = vmatprep.subr.mxu0 %v3423
    %v3425 = vand.u32 %v661, 4294901760
    %3426 = vmatpush1.msra.mxu0 %v3425
    %v3427 = vand.u32 %v664, 4294901760
    %3428 = vmatprep.subr.mxu0 %v3427
    %v3429 = vand.u32 %v663, 4294901760
    %3430 = vmatpush1.msra.mxu0 %v3429
    %3431 = vmatprep.subr.mxu0 0.0
    %3432 = vmatpush1.msra.mxu0 0.0
    %3433 = vmatprep.subr.mxu0 0.0
    %3434 = vmatpush1.msra.mxu0 0.0
    %3435 = vmatprep.subr.mxu0 0.0
    %3436 = vmatpush1.msra.mxu0 0.0
    %3437 = vmatprep.subr.mxu0 0.0
    %3438 = vmatpush1.msra.mxu0 0.0
    %3439 = vmatprep.subr.mxu0 0.0
    %3440 = vmatpush1.msra.mxu0 0.0
    %3441 = vmatprep.subr.mxu0 0.0
    %3442 = vmatpush1.msra.mxu0 0.0
    %3443 = vmatprep.subr.mxu0 0.0
    %3444 = vmatpush1.msra.mxu0 0.0
    %3445 = vmatprep.subr.mxu0 0.0
    %3446 = vmatpush1.msra.mxu0 0.0
    %3447 = vmatprep.subr.mxu0 0.0
    %3448 = vmatpush1.msra.mxu0 0.0
    %3449 = vmatprep.subr.mxu0 0.0
    %3450 = vmatpush1.msra.mxu0 0.0
    %3451 = vmatprep.subr.mxu0 0.0
    %3452 = vmatpush1.msra.mxu0 0.0
    %3453 = vmatprep.subr.mxu0 0.0
    %3454 = vmatpush1.msra.mxu0 0.0
    %3455 = vmatprep.subr.mxu0 0.0
    %3456 = vmatpush1.msra.mxu0 0.0
    %3457 = vmatprep.subr.mxu0 0.0
    %3458 = vmatpush1.msra.mxu0 0.0
    %3459 = vmatprep.subr.mxu0 0.0
    %3460 = vmatpush1.msra.mxu0 0.0
    %3461 = vmatprep.subr.mxu0 0.0
    %3462 = vmatpush1.msra.mxu0 0.0
    %3463 = vmatprep.subr.mxu0 0.0
    %3464 = vmatpush1.msra.mxu0 0.0
    %3465 = vmatprep.subr.mxu0 0.0
    %3466 = vmatpush1.msra.mxu0 0.0
    %3467 = vmatprep.subr.mxu0 0.0
    %3468 = vmatpush1.msra.mxu0 0.0
    %3469 = vmatprep.subr.mxu0 0.0
    %3470 = vmatpush1.msra.mxu0 0.0
    %3471 = vmatprep.subr.mxu0 0.0
    %3472 = vmatpush1.msra.mxu0 0.0
    %3473 = vmatprep.subr.mxu0 0.0
    %3474 = vmatpush1.msra.mxu0 0.0
    %3475 = vmatprep.subr.mxu0 0.0
    %3476 = vmatpush1.msra.mxu0 0.0
    %3477 = vmatprep.subr.mxu0 0.0
    %3478 = vmatpush1.msra.mxu0 0.0
    %3479 = vmatprep.mubr.f32.mxu0 0.0
    %v3480 = vand.u32 %v3397, 4294901760
    %v3481 = vsub.f32 %v3397, %v3480
    %v3482 = vand.u32 %v3481, 4294901760
    %v3483 = vsub.f32 %v3481, %v3482
    %v3484 = vand.u32 %v3483, 4294901760
    %3485 = vmatmul.mubr.f32.gmra.mrb[0].mxu0 %v3484
    %v3486 = vpop.f32.mrb[0].mxu0
    %v3487 = vadd.f32 0.0, %v3486
    %v3488 = vpop.f32.mrb[0].mxu0
    %v3489 = vadd.f32 0.0, %v3488
    %3490 = vdwg.mxu0
    %v3491 = vand.u32 %v650, 4294901760
    %v3492 = vsub.f32 %v650, %v3491
    %v3493 = vand.u32 %v3492, 4294901760
    %v3494 = vsub.f32 %v3492, %v3493
    %v3495 = vand.u32 %v3494, 4294901760
    %3496 = vmatprep.subr.mxu0 %v3495
    %v3497 = vand.u32 %v649, 4294901760
    %v3498 = vsub.f32 %v649, %v3497
    %v3499 = vand.u32 %v3498, 4294901760
    %v3500 = vsub.f32 %v3498, %v3499
    %v3501 = vand.u32 %v3500, 4294901760
    %3502 = vmatpush1.msra.mxu0 %v3501
    %v3503 = vand.u32 %v652, 4294901760
    %v3504 = vsub.f32 %v652, %v3503
    %v3505 = vand.u32 %v3504, 4294901760
    %v3506 = vsub.f32 %v3504, %v3505
    %v3507 = vand.u32 %v3506, 4294901760
    %3508 = vmatprep.subr.mxu0 %v3507
    %v3509 = vand.u32 %v651, 4294901760
    %v3510 = vsub.f32 %v651, %v3509
    %v3511 = vand.u32 %v3510, 4294901760
    %v3512 = vsub.f32 %v3510, %v3511
    %v3513 = vand.u32 %v3512, 4294901760
    %3514 = vmatpush1.msra.mxu0 %v3513
    %v3515 = vand.u32 %v654, 4294901760
    %v3516 = vsub.f32 %v654, %v3515
    %v3517 = vand.u32 %v3516, 4294901760
    %v3518 = vsub.f32 %v3516, %v3517
    %v3519 = vand.u32 %v3518, 4294901760
    %3520 = vmatprep.subr.mxu0 %v3519
    %v3521 = vand.u32 %v653, 4294901760
    %v3522 = vsub.f32 %v653, %v3521
    %v3523 = vand.u32 %v3522, 4294901760
    %v3524 = vsub.f32 %v3522, %v3523
    %v3525 = vand.u32 %v3524, 4294901760
    %3526 = vmatpush1.msra.mxu0 %v3525
    %v3527 = vand.u32 %v656, 4294901760
    %v3528 = vsub.f32 %v656, %v3527
    %v3529 = vand.u32 %v3528, 4294901760
    %v3530 = vsub.f32 %v3528, %v3529
    %v3531 = vand.u32 %v3530, 4294901760
    %3532 = vmatprep.subr.mxu0 %v3531
    %v3533 = vand.u32 %v655, 4294901760
    %v3534 = vsub.f32 %v655, %v3533
    %v3535 = vand.u32 %v3534, 4294901760
    %v3536 = vsub.f32 %v3534, %v3535
    %v3537 = vand.u32 %v3536, 4294901760
    %3538 = vmatpush1.msra.mxu0 %v3537
    %v3539 = vand.u32 %v658, 4294901760
    %v3540 = vsub.f32 %v658, %v3539
    %v3541 = vand.u32 %v3540, 4294901760
    %v3542 = vsub.f32 %v3540, %v3541
    %v3543 = vand.u32 %v3542, 4294901760
    %3544 = vmatprep.subr.mxu0 %v3543
    %v3545 = vand.u32 %v657, 4294901760
    %v3546 = vsub.f32 %v657, %v3545
    %v3547 = vand.u32 %v3546, 4294901760
    %v3548 = vsub.f32 %v3546, %v3547
    %v3549 = vand.u32 %v3548, 4294901760
    %3550 = vmatpush1.msra.mxu0 %v3549
    %v3551 = vand.u32 %v660, 4294901760
    %v3552 = vsub.f32 %v660, %v3551
    %v3553 = vand.u32 %v3552, 4294901760
    %v3554 = vsub.f32 %v3552, %v3553
    %v3555 = vand.u32 %v3554, 4294901760
    %3556 = vmatprep.subr.mxu0 %v3555
    %v3557 = vand.u32 %v659, 4294901760
    %v3558 = vsub.f32 %v659, %v3557
    %v3559 = vand.u32 %v3558, 4294901760
    %v3560 = vsub.f32 %v3558, %v3559
    %v3561 = vand.u32 %v3560, 4294901760
    %3562 = vmatpush1.msra.mxu0 %v3561
    %v3563 = vand.u32 %v662, 4294901760
    %v3564 = vsub.f32 %v662, %v3563
    %v3565 = vand.u32 %v3564, 4294901760
    %v3566 = vsub.f32 %v3564, %v3565
    %v3567 = vand.u32 %v3566, 4294901760
    %3568 = vmatprep.subr.mxu0 %v3567
    %v3569 = vand.u32 %v661, 4294901760
    %v3570 = vsub.f32 %v661, %v3569
    %v3571 = vand.u32 %v3570, 4294901760
    %v3572 = vsub.f32 %v3570, %v3571
    %v3573 = vand.u32 %v3572, 4294901760
    %3574 = vmatpush1.msra.mxu0 %v3573
    %v3575 = vand.u32 %v664, 4294901760
    %v3576 = vsub.f32 %v664, %v3575
    %v3577 = vand.u32 %v3576, 4294901760
    %v3578 = vsub.f32 %v3576, %v3577
    %v3579 = vand.u32 %v3578, 4294901760
    %3580 = vmatprep.subr.mxu0 %v3579
    %v3581 = vand.u32 %v663, 4294901760
    %v3582 = vsub.f32 %v663, %v3581
    %v3583 = vand.u32 %v3582, 4294901760
    %v3584 = vsub.f32 %v3582, %v3583
    %v3585 = vand.u32 %v3584, 4294901760
    %3586 = vmatpush1.msra.mxu0 %v3585
    %3587 = vmatprep.subr.mxu0 0.0
    %3588 = vmatpush1.msra.mxu0 0.0
    %3589 = vmatprep.subr.mxu0 0.0
    %3590 = vmatpush1.msra.mxu0 0.0
    %3591 = vmatprep.subr.mxu0 0.0
    %3592 = vmatpush1.msra.mxu0 0.0
    %3593 = vmatprep.subr.mxu0 0.0
    %3594 = vmatpush1.msra.mxu0 0.0
    %3595 = vmatprep.subr.mxu0 0.0
    %3596 = vmatpush1.msra.mxu0 0.0
    %3597 = vmatprep.subr.mxu0 0.0
    %3598 = vmatpush1.msra.mxu0 0.0
    %3599 = vmatprep.subr.mxu0 0.0
    %3600 = vmatpush1.msra.mxu0 0.0
    %3601 = vmatprep.subr.mxu0 0.0
    %3602 = vmatpush1.msra.mxu0 0.0
    %3603 = vmatprep.subr.mxu0 0.0
    %3604 = vmatpush1.msra.mxu0 0.0
    %3605 = vmatprep.subr.mxu0 0.0
    %3606 = vmatpush1.msra.mxu0 0.0
    %3607 = vmatprep.subr.mxu0 0.0
    %3608 = vmatpush1.msra.mxu0 0.0
    %3609 = vmatprep.subr.mxu0 0.0
    %3610 = vmatpush1.msra.mxu0 0.0
    %3611 = vmatprep.subr.mxu0 0.0
    %3612 = vmatpush1.msra.mxu0 0.0
    %3613 = vmatprep.subr.mxu0 0.0
    %3614 = vmatpush1.msra.mxu0 0.0
    %3615 = vmatprep.subr.mxu0 0.0
    %3616 = vmatpush1.msra.mxu0 0.0
    %3617 = vmatprep.subr.mxu0 0.0
    %3618 = vmatpush1.msra.mxu0 0.0
    %3619 = vmatprep.subr.mxu0 0.0
    %3620 = vmatpush1.msra.mxu0 0.0
    %3621 = vmatprep.subr.mxu0 0.0
    %3622 = vmatpush1.msra.mxu0 0.0
    %3623 = vmatprep.subr.mxu0 0.0
    %3624 = vmatpush1.msra.mxu0 0.0
    %3625 = vmatprep.subr.mxu0 0.0
    %3626 = vmatpush1.msra.mxu0 0.0
    %3627 = vmatprep.subr.mxu0 0.0
    %3628 = vmatpush1.msra.mxu0 0.0
    %3629 = vmatprep.subr.mxu0 0.0
    %3630 = vmatpush1.msra.mxu0 0.0
    %3631 = vmatprep.subr.mxu0 0.0
    %3632 = vmatpush1.msra.mxu0 0.0
    %3633 = vmatprep.subr.mxu0 0.0
    %3634 = vmatpush1.msra.mxu0 0.0
    %3635 = vmatprep.mubr.f32.mxu0 0.0
    %v3636 = vand.u32 %v3397, 4294901760
    %3637 = vmatmul.mubr.f32.gmra.mrb[0].mxu0 %v3636
    %v3638 = vpop.f32.mrb[0].mxu0
    %v3639 = vadd.f32 %v3487, %v3638
    %v3640 = vpop.f32.mrb[0].mxu0
    %v3641 = vadd.f32 %v3489, %v3640
    %3642 = vdwg.mxu0
    %v3643 = vand.u32 %v650, 4294901760
    %v3644 = vsub.f32 %v650, %v3643
    %3645 = vmatprep.subr.mxu0 %v3644
    %v3646 = vand.u32 %v649, 4294901760
    %v3647 = vsub.f32 %v649, %v3646
    %3648 = vmatpush1.msra.mxu0 %v3647
    %v3649 = vand.u32 %v652, 4294901760
    %v3650 = vsub.f32 %v652, %v3649
    %3651 = vmatprep.subr.mxu0 %v3650
    %v3652 = vand.u32 %v651, 4294901760
    %v3653 = vsub.f32 %v651, %v3652
    %3654 = vmatpush1.msra.mxu0 %v3653
    %v3655 = vand.u32 %v654, 4294901760
    %v3656 = vsub.f32 %v654, %v3655
    %3657 = vmatprep.subr.mxu0 %v3656
    %v3658 = vand.u32 %v653, 4294901760
    %v3659 = vsub.f32 %v653, %v3658
    %3660 = vmatpush1.msra.mxu0 %v3659
    %v3661 = vand.u32 %v656, 4294901760
    %v3662 = vsub.f32 %v656, %v3661
    %3663 = vmatprep.subr.mxu0 %v3662
    %v3664 = vand.u32 %v655, 4294901760
    %v3665 = vsub.f32 %v655, %v3664
    %3666 = vmatpush1.msra.mxu0 %v3665
    %v3667 = vand.u32 %v658, 4294901760
    %v3668 = vsub.f32 %v658, %v3667
    %3669 = vmatprep.subr.mxu0 %v3668
    %v3670 = vand.u32 %v657, 4294901760
    %v3671 = vsub.f32 %v657, %v3670
    %3672 = vmatpush1.msra.mxu0 %v3671
    %v3673 = vand.u32 %v660, 4294901760
    %v3674 = vsub.f32 %v660, %v3673
    %3675 = vmatprep.subr.mxu0 %v3674
    %v3676 = vand.u32 %v659, 4294901760
    %v3677 = vsub.f32 %v659, %v3676
    %3678 = vmatpush1.msra.mxu0 %v3677
    %v3679 = vand.u32 %v662, 4294901760
    %v3680 = vsub.f32 %v662, %v3679
    %3681 = vmatprep.subr.mxu0 %v3680
    %v3682 = vand.u32 %v661, 4294901760
    %v3683 = vsub.f32 %v661, %v3682
    %3684 = vmatpush1.msra.mxu0 %v3683
    %v3685 = vand.u32 %v664, 4294901760
    %v3686 = vsub.f32 %v664, %v3685
    %3687 = vmatprep.subr.mxu0 %v3686
    %v3688 = vand.u32 %v663, 4294901760
    %v3689 = vsub.f32 %v663, %v3688
    %3690 = vmatpush1.msra.mxu0 %v3689
    %3691 = vmatprep.subr.mxu0 0.0
    %3692 = vmatpush1.msra.mxu0 0.0
    %3693 = vmatprep.subr.mxu0 0.0
    %3694 = vmatpush1.msra.mxu0 0.0
    %3695 = vmatprep.subr.mxu0 0.0
    %3696 = vmatpush1.msra.mxu0 0.0
    %3697 = vmatprep.subr.mxu0 0.0
    %3698 = vmatpush1.msra.mxu0 0.0
    %3699 = vmatprep.subr.mxu0 0.0
    %3700 = vmatpush1.msra.mxu0 0.0
    %3701 = vmatprep.subr.mxu0 0.0
    %3702 = vmatpush1.msra.mxu0 0.0
    %3703 = vmatprep.subr.mxu0 0.0
    %3704 = vmatpush1.msra.mxu0 0.0
    %3705 = vmatprep.subr.mxu0 0.0
    %3706 = vmatpush1.msra.mxu0 0.0
    %3707 = vmatprep.subr.mxu0 0.0
    %3708 = vmatpush1.msra.mxu0 0.0
    %3709 = vmatprep.subr.mxu0 0.0
    %3710 = vmatpush1.msra.mxu0 0.0
    %3711 = vmatprep.subr.mxu0 0.0
    %3712 = vmatpush1.msra.mxu0 0.0
    %3713 = vmatprep.subr.mxu0 0.0
    %3714 = vmatpush1.msra.mxu0 0.0
    %3715 = vmatprep.subr.mxu0 0.0
    %3716 = vmatpush1.msra.mxu0 0.0
    %3717 = vmatprep.subr.mxu0 0.0
    %3718 = vmatpush1.msra.mxu0 0.0
    %3719 = vmatprep.subr.mxu0 0.0
    %3720 = vmatpush1.msra.mxu0 0.0
    %3721 = vmatprep.subr.mxu0 0.0
    %3722 = vmatpush1.msra.mxu0 0.0
    %3723 = vmatprep.subr.mxu0 0.0
    %3724 = vmatpush1.msra.mxu0 0.0
    %3725 = vmatprep.subr.mxu0 0.0
    %3726 = vmatpush1.msra.mxu0 0.0
    %3727 = vmatprep.subr.mxu0 0.0
    %3728 = vmatpush1.msra.mxu0 0.0
    %3729 = vmatprep.subr.mxu0 0.0
    %3730 = vmatpush1.msra.mxu0 0.0
    %3731 = vmatprep.subr.mxu0 0.0
    %3732 = vmatpush1.msra.mxu0 0.0
    %3733 = vmatprep.subr.mxu0 0.0
    %3734 = vmatpush1.msra.mxu0 0.0
    %3735 = vmatprep.subr.mxu0 0.0
    %3736 = vmatpush1.msra.mxu0 0.0
    %3737 = vmatprep.subr.mxu0 0.0
    %3738 = vmatpush1.msra.mxu0 0.0
    %3739 = vmatprep.mubr.f32.mxu0 0.0
    %v3740 = vand.u32 %v3397, 4294901760
    %v3741 = vsub.f32 %v3397, %v3740
    %3742 = vmatmul.mubr.f32.gmra.mrb[0].mxu0 %v3741
    %v3743 = vpop.f32.mrb[0].mxu0
    %v3744 = vadd.f32 %v3639, %v3743
    %v3745 = vpop.f32.mrb[0].mxu0
    %v3746 = vadd.f32 %v3641, %v3745
    %3747 = vdwg.mxu0
    %v3748 = vand.u32 %v650, 4294901760
    %3749 = vmatprep.subr.mxu0 %v3748
    %v3750 = vand.u32 %v649, 4294901760
    %3751 = vmatpush1.msra.mxu0 %v3750
    %v3752 = vand.u32 %v652, 4294901760
    %3753 = vmatprep.subr.mxu0 %v3752
    %v3754 = vand.u32 %v651, 4294901760
    %3755 = vmatpush1.msra.mxu0 %v3754
    %v3756 = vand.u32 %v654, 4294901760
    %3757 = vmatprep.subr.mxu0 %v3756
    %v3758 = vand.u32 %v653, 4294901760
    %3759 = vmatpush1.msra.mxu0 %v3758
    %v3760 = vand.u32 %v656, 4294901760
    %3761 = vmatprep.subr.mxu0 %v3760
    %v3762 = vand.u32 %v655, 4294901760
    %3763 = vmatpush1.msra.mxu0 %v3762
    %v3764 = vand.u32 %v658, 4294901760
    %3765 = vmatprep.subr.mxu0 %v3764
    %v3766 = vand.u32 %v657, 4294901760
    %3767 = vmatpush1.msra.mxu0 %v3766
    %v3768 = vand.u32 %v660, 4294901760
    %3769 = vmatprep.subr.mxu0 %v3768
    %v3770 = vand.u32 %v659, 4294901760
    %3771 = vmatpush1.msra.mxu0 %v3770
    %v3772 = vand.u32 %v662, 4294901760
    %3773 = vmatprep.subr.mxu0 %v3772
    %v3774 = vand.u32 %v661, 4294901760
    %3775 = vmatpush1.msra.mxu0 %v3774
    %v3776 = vand.u32 %v664, 4294901760
    %3777 = vmatprep.subr.mxu0 %v3776
    %v3778 = vand.u32 %v663, 4294901760
    %3779 = vmatpush1.msra.mxu0 %v3778
    %3780 = vmatprep.subr.mxu0 0.0
    %3781 = vmatpush1.msra.mxu0 0.0
    %3782 = vmatprep.subr.mxu0 0.0
    %3783 = vmatpush1.msra.mxu0 0.0
    %3784 = vmatprep.subr.mxu0 0.0
    %3785 = vmatpush1.msra.mxu0 0.0
    %3786 = vmatprep.subr.mxu0 0.0
    %3787 = vmatpush1.msra.mxu0 0.0
    %3788 = vmatprep.subr.mxu0 0.0
    %3789 = vmatpush1.msra.mxu0 0.0
    %3790 = vmatprep.subr.mxu0 0.0
    %3791 = vmatpush1.msra.mxu0 0.0
    %3792 = vmatprep.subr.mxu0 0.0
    %3793 = vmatpush1.msra.mxu0 0.0
    %3794 = vmatprep.subr.mxu0 0.0
    %3795 = vmatpush1.msra.mxu0 0.0
    %3796 = vmatprep.subr.mxu0 0.0
    %3797 = vmatpush1.msra.mxu0 0.0
    %3798 = vmatprep.subr.mxu0 0.0
    %3799 = vmatpush1.msra.mxu0 0.0
    %3800 = vmatprep.subr.mxu0 0.0
    %3801 = vmatpush1.msra.mxu0 0.0
    %3802 = vmatprep.subr.mxu0 0.0
    %3803 = vmatpush1.msra.mxu0 0.0
    %3804 = vmatprep.subr.mxu0 0.0
    %3805 = vmatpush1.msra.mxu0 0.0
    %3806 = vmatprep.subr.mxu0 0.0
    %3807 = vmatpush1.msra.mxu0 0.0
    %3808 = vmatprep.subr.mxu0 0.0
    %3809 = vmatpush1.msra.mxu0 0.0
    %3810 = vmatprep.subr.mxu0 0.0
    %3811 = vmatpush1.msra.mxu0 0.0
    %3812 = vmatprep.subr.mxu0 0.0
    %3813 = vmatpush1.msra.mxu0 0.0
    %3814 = vmatprep.subr.mxu0 0.0
    %3815 = vmatpush1.msra.mxu0 0.0
    %3816 = vmatprep.subr.mxu0 0.0
    %3817 = vmatpush1.msra.mxu0 0.0
    %3818 = vmatprep.subr.mxu0 0.0
    %3819 = vmatpush1.msra.mxu0 0.0
    %3820 = vmatprep.subr.mxu0 0.0
    %3821 = vmatpush1.msra.mxu0 0.0
    %3822 = vmatprep.subr.mxu0 0.0
    %3823 = vmatpush1.msra.mxu0 0.0
    %3824 = vmatprep.subr.mxu0 0.0
    %3825 = vmatpush1.msra.mxu0 0.0
    %3826 = vmatprep.subr.mxu0 0.0
    %3827 = vmatpush1.msra.mxu0 0.0
    %3828 = vmatprep.mubr.f32.mxu0 0.0
    %v3829 = vand.u32 %v3397, 4294901760
    %v3830 = vsub.f32 %v3397, %v3829
    %v3831 = vand.u32 %v3830, 4294901760
    %3832 = vmatmul.mubr.f32.gmra.mrb[0].mxu0 %v3831
    %v3833 = vpop.f32.mrb[0].mxu0
    %v3834 = vadd.f32 %v3744, %v3833
    %v3835 = vpop.f32.mrb[0].mxu0
    %v3836 = vadd.f32 %v3746, %v3835
    %3837 = vdwg.mxu0
    %v3838 = vand.u32 %v650, 4294901760
    %v3839 = vsub.f32 %v650, %v3838
    %v3840 = vand.u32 %v3839, 4294901760
    %3841 = vmatprep.subr.mxu0 %v3840
    %v3842 = vand.u32 %v649, 4294901760
    %v3843 = vsub.f32 %v649, %v3842
    %v3844 = vand.u32 %v3843, 4294901760
    %3845 = vmatpush1.msra.mxu0 %v3844
    %v3846 = vand.u32 %v652, 4294901760
    %v3847 = vsub.f32 %v652, %v3846
    %v3848 = vand.u32 %v3847, 4294901760
    %3849 = vmatprep.subr.mxu0 %v3848
    %v3850 = vand.u32 %v651, 4294901760
    %v3851 = vsub.f32 %v651, %v3850
    %v3852 = vand.u32 %v3851, 4294901760
    %3853 = vmatpush1.msra.mxu0 %v3852
    %v3854 = vand.u32 %v654, 4294901760
    %v3855 = vsub.f32 %v654, %v3854
    %v3856 = vand.u32 %v3855, 4294901760
    %3857 = vmatprep.subr.mxu0 %v3856
    %v3858 = vand.u32 %v653, 4294901760
    %v3859 = vsub.f32 %v653, %v3858
    %v3860 = vand.u32 %v3859, 4294901760
    %3861 = vmatpush1.msra.mxu0 %v3860
    %v3862 = vand.u32 %v656, 4294901760
    %v3863 = vsub.f32 %v656, %v3862
    %v3864 = vand.u32 %v3863, 4294901760
    %3865 = vmatprep.subr.mxu0 %v3864
    %v3866 = vand.u32 %v655, 4294901760
    %v3867 = vsub.f32 %v655, %v3866
    %v3868 = vand.u32 %v3867, 4294901760
    %3869 = vmatpush1.msra.mxu0 %v3868
    %v3870 = vand.u32 %v658, 4294901760
    %v3871 = vsub.f32 %v658, %v3870
    %v3872 = vand.u32 %v3871, 4294901760
    %3873 = vmatprep.subr.mxu0 %v3872
    %v3874 = vand.u32 %v657, 4294901760
    %v3875 = vsub.f32 %v657, %v3874
    %v3876 = vand.u32 %v3875, 4294901760
    %3877 = vmatpush1.msra.mxu0 %v3876
    %v3878 = vand.u32 %v660, 4294901760
    %v3879 = vsub.f32 %v660, %v3878
    %v3880 = vand.u32 %v3879, 4294901760
    %3881 = vmatprep.subr.mxu0 %v3880
    %v3882 = vand.u32 %v659, 4294901760
    %v3883 = vsub.f32 %v659, %v3882
    %v3884 = vand.u32 %v3883, 4294901760
    %3885 = vmatpush1.msra.mxu0 %v3884
    %v3886 = vand.u32 %v662, 4294901760
    %v3887 = vsub.f32 %v662, %v3886
    %v3888 = vand.u32 %v3887, 4294901760
    %3889 = vmatprep.subr.mxu0 %v3888
    %v3890 = vand.u32 %v661, 4294901760
    %v3891 = vsub.f32 %v661, %v3890
    %v3892 = vand.u32 %v3891, 4294901760
    %3893 = vmatpush1.msra.mxu0 %v3892
    %v3894 = vand.u32 %v664, 4294901760
    %v3895 = vsub.f32 %v664, %v3894
    %v3896 = vand.u32 %v3895, 4294901760
    %3897 = vmatprep.subr.mxu0 %v3896
    %v3898 = vand.u32 %v663, 4294901760
    %v3899 = vsub.f32 %v663, %v3898
    %v3900 = vand.u32 %v3899, 4294901760
    %3901 = vmatpush1.msra.mxu0 %v3900
    %3902 = vmatprep.subr.mxu0 0.0
    %3903 = vmatpush1.msra.mxu0 0.0
    %3904 = vmatprep.subr.mxu0 0.0
    %3905 = vmatpush1.msra.mxu0 0.0
    %3906 = vmatprep.subr.mxu0 0.0
    %3907 = vmatpush1.msra.mxu0 0.0
    %3908 = vmatprep.subr.mxu0 0.0
    %3909 = vmatpush1.msra.mxu0 0.0
    %3910 = vmatprep.subr.mxu0 0.0
    %3911 = vmatpush1.msra.mxu0 0.0
    %3912 = vmatprep.subr.mxu0 0.0
    %3913 = vmatpush1.msra.mxu0 0.0
    %3914 = vmatprep.subr.mxu0 0.0
    %3915 = vmatpush1.msra.mxu0 0.0
    %3916 = vmatprep.subr.mxu0 0.0
    %3917 = vmatpush1.msra.mxu0 0.0
    %3918 = vmatprep.subr.mxu0 0.0
    %3919 = vmatpush1.msra.mxu0 0.0
    %3920 = vmatprep.subr.mxu0 0.0
    %3921 = vmatpush1.msra.mxu0 0.0
    %3922 = vmatprep.subr.mxu0 0.0
    %3923 = vmatpush1.msra.mxu0 0.0
    %3924 = vmatprep.subr.mxu0 0.0
    %3925 = vmatpush1.msra.mxu0 0.0
    %3926 = vmatprep.subr.mxu0 0.0
    %3927 = vmatpush1.msra.mxu0 0.0
    %3928 = vmatprep.subr.mxu0 0.0
    %3929 = vmatpush1.msra.mxu0 0.0
    %3930 = vmatprep.subr.mxu0 0.0
    %3931 = vmatpush1.msra.mxu0 0.0
    %3932 = vmatprep.subr.mxu0 0.0
    %3933 = vmatpush1.msra.mxu0 0.0
    %3934 = vmatprep.subr.mxu0 0.0
    %3935 = vmatpush1.msra.mxu0 0.0
    %3936 = vmatprep.subr.mxu0 0.0
    %3937 = vmatpush1.msra.mxu0 0.0
    %3938 = vmatprep.subr.mxu0 0.0
    %3939 = vmatpush1.msra.mxu0 0.0
    %3940 = vmatprep.subr.mxu0 0.0
    %3941 = vmatpush1.msra.mxu0 0.0
    %3942 = vmatprep.subr.mxu0 0.0
    %3943 = vmatpush1.msra.mxu0 0.0
    %3944 = vmatprep.subr.mxu0 0.0
    %3945 = vmatpush1.msra.mxu0 0.0
    %3946 = vmatprep.subr.mxu0 0.0
    %3947 = vmatpush1.msra.mxu0 0.0
    %3948 = vmatprep.subr.mxu0 0.0
    %3949 = vmatpush1.msra.mxu0 0.0
    %3950 = vmatprep.mubr.f32.mxu0 0.0
    %v3951 = vand.u32 %v3397, 4294901760
    %3952 = vmatmul.mubr.f32.gmra.mrb[0].mxu0 %v3951
    %v3953 = vpop.f32.mrb[0].mxu0
    %v3954 = vadd.f32 %v3834, %v3953
    %v3955 = vpop.f32.mrb[0].mxu0
    %v3956 = vadd.f32 %v3836, %v3955
    %3957 = vdwg.mxu0
    %v3958 = vand.u32 %v650, 4294901760
    %3959 = vmatprep.subr.mxu0 %v3958
    %v3960 = vand.u32 %v649, 4294901760
    %3961 = vmatpush1.msra.mxu0 %v3960
    %v3962 = vand.u32 %v652, 4294901760
    %3963 = vmatprep.subr.mxu0 %v3962
    %v3964 = vand.u32 %v651, 4294901760
    %3965 = vmatpush1.msra.mxu0 %v3964
    %v3966 = vand.u32 %v654, 4294901760
    %3967 = vmatprep.subr.mxu0 %v3966
    %v3968 = vand.u32 %v653, 4294901760
    %3969 = vmatpush1.msra.mxu0 %v3968
    %v3970 = vand.u32 %v656, 4294901760
    %3971 = vmatprep.subr.mxu0 %v3970
    %v3972 = vand.u32 %v655, 4294901760
    %3973 = vmatpush1.msra.mxu0 %v3972
    %v3974 = vand.u32 %v658, 4294901760
    %3975 = vmatprep.subr.mxu0 %v3974
    %v3976 = vand.u32 %v657, 4294901760
    %3977 = vmatpush1.msra.mxu0 %v3976
    %v3978 = vand.u32 %v660, 4294901760
    %3979 = vmatprep.subr.mxu0 %v3978
    %v3980 = vand.u32 %v659, 4294901760
    %3981 = vmatpush1.msra.mxu0 %v3980
    %v3982 = vand.u32 %v662, 4294901760
    %3983 = vmatprep.subr.mxu0 %v3982
    %v3984 = vand.u32 %v661, 4294901760
    %3985 = vmatpush1.msra.mxu0 %v3984
    %v3986 = vand.u32 %v664, 4294901760
    %3987 = vmatprep.subr.mxu0 %v3986
    %v3988 = vand.u32 %v663, 4294901760
    %3989 = vmatpush1.msra.mxu0 %v3988
    %3990 = vmatprep.subr.mxu0 0.0
    %3991 = vmatpush1.msra.mxu0 0.0
    %3992 = vmatprep.subr.mxu0 0.0
    %3993 = vmatpush1.msra.mxu0 0.0
    %3994 = vmatprep.subr.mxu0 0.0
    %3995 = vmatpush1.msra.mxu0 0.0
    %3996 = vmatprep.subr.mxu0 0.0
    %3997 = vmatpush1.msra.mxu0 0.0
    %3998 = vmatprep.subr.mxu0 0.0
    %3999 = vmatpush1.msra.mxu0 0.0
    %4000 = vmatprep.subr.mxu0 0.0
    %4001 = vmatpush1.msra.mxu0 0.0
    %4002 = vmatprep.subr.mxu0 0.0
    %4003 = vmatpush1.msra.mxu0 0.0
    %4004 = vmatprep.subr.mxu0 0.0
    %4005 = vmatpush1.msra.mxu0 0.0
    %4006 = vmatprep.subr.mxu0 0.0
    %4007 = vmatpush1.msra.mxu0 0.0
    %4008 = vmatprep.subr.mxu0 0.0
    %4009 = vmatpush1.msra.mxu0 0.0
    %4010 = vmatprep.subr.mxu0 0.0
    %4011 = vmatpush1.msra.mxu0 0.0
    %4012 = vmatprep.subr.mxu0 0.0
    %4013 = vmatpush1.msra.mxu0 0.0
    %4014 = vmatprep.subr.mxu0 0.0
    %4015 = vmatpush1.msra.mxu0 0.0
    %4016 = vmatprep.subr.mxu0 0.0
    %4017 = vmatpush1.msra.mxu0 0.0
    %4018 = vmatprep.subr.mxu0 0.0
    %4019 = vmatpush1.msra.mxu0 0.0
    %4020 = vmatprep.subr.mxu0 0.0
    %4021 = vmatpush1.msra.mxu0 0.0
    %4022 = vmatprep.subr.mxu0 0.0
    %4023 = vmatpush1.msra.mxu0 0.0
    %4024 = vmatprep.subr.mxu0 0.0
    %4025 = vmatpush1.msra.mxu0 0.0
    %4026 = vmatprep.subr.mxu0 0.0
    %4027 = vmatpush1.msra.mxu0 0.0
    %4028 = vmatprep.subr.mxu0 0.0
    %4029 = vmatpush1.msra.mxu0 0.0
    %4030 = vmatprep.subr.mxu0 0.0
    %4031 = vmatpush1.msra.mxu0 0.0
    %4032 = vmatprep.subr.mxu0 0.0
    %4033 = vmatpush1.msra.mxu0 0.0
    %4034 = vmatprep.subr.mxu0 0.0
    %4035 = vmatpush1.msra.mxu0 0.0
    %4036 = vmatprep.subr.mxu0 0.0
    %4037 = vmatpush1.msra.mxu0 0.0
    %4038 = vmatprep.mubr.f32.mxu0 0.0
    %v4039 = vand.u32 %v3397, 4294901760
    %4040 = vmatmul.mubr.f32.gmra.mrb[0].mxu0 %v4039
    %v4041 = vpop.f32.mrb[0].mxu0
    %v4042 = vadd.f32 %v3954, %v4041
    %v4043 = vpop.f32.mrb[0].mxu0
    %v4044 = vadd.f32 %v3956, %v4043
    %4045 = vdwg.mxu0
    %v4048 = vrot.slane %v4042, 6
    %v4049 = vrot.slane %v4044, 6
    %v4052 = vadd.f32 %v616, %v4048
    %v4053 = vadd.f32 %v618, %v4049
    %v4054 = vxor.u32 %v4052, 2147483648
    %v4055 = vmul.f32 %v4054, 1.442695
    %v4056 = vpow.pop %v4055
    %v4057 = vadd.f32 %v4056, 1.0
    %v4058 = vrcp.pop %v4057
    %v4059 = vmul.f32 1.0, %v4058
    %4061 = vrot.lane.b32.xlu0 %v4053, 64
    %v4062 = vpop.permute.xlu0 %4061
    %v4064 = vmul.f32 %v4059, %v4062
    %v4065 = vadd.f32 %v4053, %v4064
    %v4066 = vtanh.pop %v4065
    %v4067 = vsub.f32 1.0, %v4059
    %4069 = vrot.lane.b32.xlu0 %v4066, 64
    %v4070 = vpop.permute.xlu0 %4069
    %v4072 = vmul.f32 %v4067, %v4070
    %v4073 = vrot.slane %v3393, 6
    %v4075 = vmul.f32 %v4059, %v4073
    %v4076 = vadd.f32 %v4072, %v4075
    %v4078 = vrot.slane %v4076, 2
    %4079 = vrot.lane.b32.xlu0 %v4078, 64
    %v4080 = vpop.permute.xlu0 %4079
    %v4081 = vsel %vm665, %v4080, 0
    %v4083 = vand.u32 %v650, 4294901760
    %4084 = vmatprep.subr.mxu0 %v4083
    %v4085 = vand.u32 %v649, 4294901760
    %4086 = vmatpush1.msra.mxu0 %v4085
    %v4087 = vand.u32 %v652, 4294901760
    %4088 = vmatprep.subr.mxu0 %v4087
    %v4089 = vand.u32 %v651, 4294901760
    %4090 = vmatpush1.msra.mxu0 %v4089
    %v4091 = vand.u32 %v654, 4294901760
    %4092 = vmatprep.subr.mxu0 %v4091
    %v4093 = vand.u32 %v653, 4294901760
    %4094 = vmatpush1.msra.mxu0 %v4093
    %v4095 = vand.u32 %v656, 4294901760
    %4096 = vmatprep.subr.mxu0 %v4095
    %v4097 = vand.u32 %v655, 4294901760
    %4098 = vmatpush1.msra.mxu0 %v4097
    %v4099 = vand.u32 %v658, 4294901760
    %4100 = vmatprep.subr.mxu0 %v4099
    %v4101 = vand.u32 %v657, 4294901760
    %4102 = vmatpush1.msra.mxu0 %v4101
    %v4103 = vand.u32 %v660, 4294901760
    %4104 = vmatprep.subr.mxu0 %v4103
    %v4105 = vand.u32 %v659, 4294901760
    %4106 = vmatpush1.msra.mxu0 %v4105
    %v4107 = vand.u32 %v662, 4294901760
    %4108 = vmatprep.subr.mxu0 %v4107
    %v4109 = vand.u32 %v661, 4294901760
    %4110 = vmatpush1.msra.mxu0 %v4109
    %v4111 = vand.u32 %v664, 4294901760
    %4112 = vmatprep.subr.mxu0 %v4111
    %v4113 = vand.u32 %v663, 4294901760
    %4114 = vmatpush1.msra.mxu0 %v4113
    %4115 = vmatprep.subr.mxu0 0.0
    %4116 = vmatpush1.msra.mxu0 0.0
    %4117 = vmatprep.subr.mxu0 0.0
    %4118 = vmatpush1.msra.mxu0 0.0
    %4119 = vmatprep.subr.mxu0 0.0
    %4120 = vmatpush1.msra.mxu0 0.0
    %4121 = vmatprep.subr.mxu0 0.0
    %4122 = vmatpush1.msra.mxu0 0.0
    %4123 = vmatprep.subr.mxu0 0.0
    %4124 = vmatpush1.msra.mxu0 0.0
    %4125 = vmatprep.subr.mxu0 0.0
    %4126 = vmatpush1.msra.mxu0 0.0
    %4127 = vmatprep.subr.mxu0 0.0
    %4128 = vmatpush1.msra.mxu0 0.0
    %4129 = vmatprep.subr.mxu0 0.0
    %4130 = vmatpush1.msra.mxu0 0.0
    %4131 = vmatprep.subr.mxu0 0.0
    %4132 = vmatpush1.msra.mxu0 0.0
    %4133 = vmatprep.subr.mxu0 0.0
    %4134 = vmatpush1.msra.mxu0 0.0
    %4135 = vmatprep.subr.mxu0 0.0
    %4136 = vmatpush1.msra.mxu0 0.0
    %4137 = vmatprep.subr.mxu0 0.0
    %4138 = vmatpush1.msra.mxu0 0.0
    %4139 = vmatprep.subr.mxu0 0.0
    %4140 = vmatpush1.msra.mxu0 0.0
    %4141 = vmatprep.subr.mxu0 0.0
    %4142 = vmatpush1.msra.mxu0 0.0
    %4143 = vmatprep.subr.mxu0 0.0
    %4144 = vmatpush1.msra.mxu0 0.0
    %4145 = vmatprep.subr.mxu0 0.0
    %4146 = vmatpush1.msra.mxu0 0.0
    %4147 = vmatprep.subr.mxu0 0.0
    %4148 = vmatpush1.msra.mxu0 0.0
    %4149 = vmatprep.subr.mxu0 0.0
    %4150 = vmatpush1.msra.mxu0 0.0
    %4151 = vmatprep.subr.mxu0 0.0
    %4152 = vmatpush1.msra.mxu0 0.0
    %4153 = vmatprep.subr.mxu0 0.0
    %4154 = vmatpush1.msra.mxu0 0.0
    %4155 = vmatprep.subr.mxu0 0.0
    %4156 = vmatpush1.msra.mxu0 0.0
    %4157 = vmatprep.subr.mxu0 0.0
    %4158 = vmatpush1.msra.mxu0 0.0
    %4159 = vmatprep.subr.mxu0 0.0
    %4160 = vmatpush1.msra.mxu0 0.0
    %4161 = vmatprep.subr.mxu0 0.0
    %4162 = vmatpush1.msra.mxu0 0.0
    %4163 = vmatprep.mubr.f32.mxu0 0.0
    %v4164 = vand.u32 %v4081, 4294901760
    %v4165 = vsub.f32 %v4081, %v4164
    %v4166 = vand.u32 %v4165, 4294901760
    %v4167 = vsub.f32 %v4165, %v4166
    %v4168 = vand.u32 %v4167, 4294901760
    %4169 = vmatmul.mubr.f32.gmra.mrb[0].mxu0 %v4168
    %v4170 = vpop.f32.mrb[0].mxu0
    %v4171 = vadd.f32 0.0, %v4170
    %v4172 = vpop.f32.mrb[0].mxu0
    %v4173 = vadd.f32 0.0, %v4172
    %4174 = vdwg.mxu0
    %v4175 = vand.u32 %v650, 4294901760
    %v4176 = vsub.f32 %v650, %v4175
    %v4177 = vand.u32 %v4176, 4294901760
    %v4178 = vsub.f32 %v4176, %v4177
    %v4179 = vand.u32 %v4178, 4294901760
    %4180 = vmatprep.subr.mxu0 %v4179
    %v4181 = vand.u32 %v649, 4294901760
    %v4182 = vsub.f32 %v649, %v4181
    %v4183 = vand.u32 %v4182, 4294901760
    %v4184 = vsub.f32 %v4182, %v4183
    %v4185 = vand.u32 %v4184, 4294901760
    %4186 = vmatpush1.msra.mxu0 %v4185
    %v4187 = vand.u32 %v652, 4294901760
    %v4188 = vsub.f32 %v652, %v4187
    %v4189 = vand.u32 %v4188, 4294901760
    %v4190 = vsub.f32 %v4188, %v4189
    %v4191 = vand.u32 %v4190, 4294901760
    %4192 = vmatprep.subr.mxu0 %v4191
    %v4193 = vand.u32 %v651, 4294901760
    %v4194 = vsub.f32 %v651, %v4193
    %v4195 = vand.u32 %v4194, 4294901760
    %v4196 = vsub.f32 %v4194, %v4195
    %v4197 = vand.u32 %v4196, 4294901760
    %4198 = vmatpush1.msra.mxu0 %v4197
    %v4199 = vand.u32 %v654, 4294901760
    %v4200 = vsub.f32 %v654, %v4199
    %v4201 = vand.u32 %v4200, 4294901760
    %v4202 = vsub.f32 %v4200, %v4201
    %v4203 = vand.u32 %v4202, 4294901760
    %4204 = vmatprep.subr.mxu0 %v4203
    %v4205 = vand.u32 %v653, 4294901760
    %v4206 = vsub.f32 %v653, %v4205
    %v4207 = vand.u32 %v4206, 4294901760
    %v4208 = vsub.f32 %v4206, %v4207
    %v4209 = vand.u32 %v4208, 4294901760
    %4210 = vmatpush1.msra.mxu0 %v4209
    %v4211 = vand.u32 %v656, 4294901760
    %v4212 = vsub.f32 %v656, %v4211
    %v4213 = vand.u32 %v4212, 4294901760
    %v4214 = vsub.f32 %v4212, %v4213
    %v4215 = vand.u32 %v4214, 4294901760
    %4216 = vmatprep.subr.mxu0 %v4215
    %v4217 = vand.u32 %v655, 4294901760
    %v4218 = vsub.f32 %v655, %v4217
    %v4219 = vand.u32 %v4218, 4294901760
    %v4220 = vsub.f32 %v4218, %v4219
    %v4221 = vand.u32 %v4220, 4294901760
    %4222 = vmatpush1.msra.mxu0 %v4221
    %v4223 = vand.u32 %v658, 4294901760
    %v4224 = vsub.f32 %v658, %v4223
    %v4225 = vand.u32 %v4224, 4294901760
    %v4226 = vsub.f32 %v4224, %v4225
    %v4227 = vand.u32 %v4226, 4294901760
    %4228 = vmatprep.subr.mxu0 %v4227
    %v4229 = vand.u32 %v657, 4294901760
    %v4230 = vsub.f32 %v657, %v4229
    %v4231 = vand.u32 %v4230, 4294901760
    %v4232 = vsub.f32 %v4230, %v4231
    %v4233 = vand.u32 %v4232, 4294901760
    %4234 = vmatpush1.msra.mxu0 %v4233
    %v4235 = vand.u32 %v660, 4294901760
    %v4236 = vsub.f32 %v660, %v4235
    %v4237 = vand.u32 %v4236, 4294901760
    %v4238 = vsub.f32 %v4236, %v4237
    %v4239 = vand.u32 %v4238, 4294901760
    %4240 = vmatprep.subr.mxu0 %v4239
    %v4241 = vand.u32 %v659, 4294901760
    %v4242 = vsub.f32 %v659, %v4241
    %v4243 = vand.u32 %v4242, 4294901760
    %v4244 = vsub.f32 %v4242, %v4243
    %v4245 = vand.u32 %v4244, 4294901760
    %4246 = vmatpush1.msra.mxu0 %v4245
    %v4247 = vand.u32 %v662, 4294901760
    %v4248 = vsub.f32 %v662, %v4247
    %v4249 = vand.u32 %v4248, 4294901760
    %v4250 = vsub.f32 %v4248, %v4249
    %v4251 = vand.u32 %v4250, 4294901760
    %4252 = vmatprep.subr.mxu0 %v4251
    %v4253 = vand.u32 %v661, 4294901760
    %v4254 = vsub.f32 %v661, %v4253
    %v4255 = vand.u32 %v4254, 4294901760
    %v4256 = vsub.f32 %v4254, %v4255
    %v4257 = vand.u32 %v4256, 4294901760
    %4258 = vmatpush1.msra.mxu0 %v4257
    %v4259 = vand.u32 %v664, 4294901760
    %v4260 = vsub.f32 %v664, %v4259
    %v4261 = vand.u32 %v4260, 4294901760
    %v4262 = vsub.f32 %v4260, %v4261
    %v4263 = vand.u32 %v4262, 4294901760
    %4264 = vmatprep.subr.mxu0 %v4263
    %v4265 = vand.u32 %v663, 4294901760
    %v4266 = vsub.f32 %v663, %v4265
    %v4267 = vand.u32 %v4266, 4294901760
    %v4268 = vsub.f32 %v4266, %v4267
    %v4269 = vand.u32 %v4268, 4294901760
    %4270 = vmatpush1.msra.mxu0 %v4269
    %4271 = vmatprep.subr.mxu0 0.0
    %4272 = vmatpush1.msra.mxu0 0.0
    %4273 = vmatprep.subr.mxu0 0.0
    %4274 = vmatpush1.msra.mxu0 0.0
    %4275 = vmatprep.subr.mxu0 0.0
    %4276 = vmatpush1.msra.mxu0 0.0
    %4277 = vmatprep.subr.mxu0 0.0
    %4278 = vmatpush1.msra.mxu0 0.0
    %4279 = vmatprep.subr.mxu0 0.0
    %4280 = vmatpush1.msra.mxu0 0.0
    %4281 = vmatprep.subr.mxu0 0.0
    %4282 = vmatpush1.msra.mxu0 0.0
    %4283 = vmatprep.subr.mxu0 0.0
    %4284 = vmatpush1.msra.mxu0 0.0
    %4285 = vmatprep.subr.mxu0 0.0
    %4286 = vmatpush1.msra.mxu0 0.0
    %4287 = vmatprep.subr.mxu0 0.0
    %4288 = vmatpush1.msra.mxu0 0.0
    %4289 = vmatprep.subr.mxu0 0.0
    %4290 = vmatpush1.msra.mxu0 0.0
    %4291 = vmatprep.subr.mxu0 0.0
    %4292 = vmatpush1.msra.mxu0 0.0
    %4293 = vmatprep.subr.mxu0 0.0
    %4294 = vmatpush1.msra.mxu0 0.0
    %4295 = vmatprep.subr.mxu0 0.0
    %4296 = vmatpush1.msra.mxu0 0.0
    %4297 = vmatprep.subr.mxu0 0.0
    %4298 = vmatpush1.msra.mxu0 0.0
    %4299 = vmatprep.subr.mxu0 0.0
    %4300 = vmatpush1.msra.mxu0 0.0
    %4301 = vmatprep.subr.mxu0 0.0
    %4302 = vmatpush1.msra.mxu0 0.0
    %4303 = vmatprep.subr.mxu0 0.0
    %4304 = vmatpush1.msra.mxu0 0.0
    %4305 = vmatprep.subr.mxu0 0.0
    %4306 = vmatpush1.msra.mxu0 0.0
    %4307 = vmatprep.subr.mxu0 0.0
    %4308 = vmatpush1.msra.mxu0 0.0
    %4309 = vmatprep.subr.mxu0 0.0
    %4310 = vmatpush1.msra.mxu0 0.0
    %4311 = vmatprep.subr.mxu0 0.0
    %4312 = vmatpush1.msra.mxu0 0.0
    %4313 = vmatprep.subr.mxu0 0.0
    %4314 = vmatpush1.msra.mxu0 0.0
    %4315 = vmatprep.subr.mxu0 0.0
    %4316 = vmatpush1.msra.mxu0 0.0
    %4317 = vmatprep.subr.mxu0 0.0
    %4318 = vmatpush1.msra.mxu0 0.0
    %4319 = vmatprep.mubr.f32.mxu0 0.0
    %v4320 = vand.u32 %v4081, 4294901760
    %4321 = vmatmul.mubr.f32.gmra.mrb[0].mxu0 %v4320
    %v4322 = vpop.f32.mrb[0].mxu0
    %v4323 = vadd.f32 %v4171, %v4322
    %v4324 = vpop.f32.mrb[0].mxu0
    %v4325 = vadd.f32 %v4173, %v4324
    %4326 = vdwg.mxu0
    %v4327 = vand.u32 %v650, 4294901760
    %v4328 = vsub.f32 %v650, %v4327
    %4329 = vmatprep.subr.mxu0 %v4328
    %v4330 = vand.u32 %v649, 4294901760
    %v4331 = vsub.f32 %v649, %v4330
    %4332 = vmatpush1.msra.mxu0 %v4331
    %v4333 = vand.u32 %v652, 4294901760
    %v4334 = vsub.f32 %v652, %v4333
    %4335 = vmatprep.subr.mxu0 %v4334
    %v4336 = vand.u32 %v651, 4294901760
    %v4337 = vsub.f32 %v651, %v4336
    %4338 = vmatpush1.msra.mxu0 %v4337
    %v4339 = vand.u32 %v654, 4294901760
    %v4340 = vsub.f32 %v654, %v4339
    %4341 = vmatprep.subr.mxu0 %v4340
    %v4342 = vand.u32 %v653, 4294901760
    %v4343 = vsub.f32 %v653, %v4342
    %4344 = vmatpush1.msra.mxu0 %v4343
    %v4345 = vand.u32 %v656, 4294901760
    %v4346 = vsub.f32 %v656, %v4345
    %4347 = vmatprep.subr.mxu0 %v4346
    %v4348 = vand.u32 %v655, 4294901760
    %v4349 = vsub.f32 %v655, %v4348
    %4350 = vmatpush1.msra.mxu0 %v4349
    %v4351 = vand.u32 %v658, 4294901760
    %v4352 = vsub.f32 %v658, %v4351
    %4353 = vmatprep.subr.mxu0 %v4352
    %v4354 = vand.u32 %v657, 4294901760
    %v4355 = vsub.f32 %v657, %v4354
    %4356 = vmatpush1.msra.mxu0 %v4355
    %v4357 = vand.u32 %v660, 4294901760
    %v4358 = vsub.f32 %v660, %v4357
    %4359 = vmatprep.subr.mxu0 %v4358
    %v4360 = vand.u32 %v659, 4294901760
    %v4361 = vsub.f32 %v659, %v4360
    %4362 = vmatpush1.msra.mxu0 %v4361
    %v4363 = vand.u32 %v662, 4294901760
    %v4364 = vsub.f32 %v662, %v4363
    %4365 = vmatprep.subr.mxu0 %v4364
    %v4366 = vand.u32 %v661, 4294901760
    %v4367 = vsub.f32 %v661, %v4366
    %4368 = vmatpush1.msra.mxu0 %v4367
    %v4369 = vand.u32 %v664, 4294901760
    %v4370 = vsub.f32 %v664, %v4369
    %4371 = vmatprep.subr.mxu0 %v4370
    %v4372 = vand.u32 %v663, 4294901760
    %v4373 = vsub.f32 %v663, %v4372
    %4374 = vmatpush1.msra.mxu0 %v4373
    %4375 = vmatprep.subr.mxu0 0.0
    %4376 = vmatpush1.msra.mxu0 0.0
    %4377 = vmatprep.subr.mxu0 0.0
    %4378 = vmatpush1.msra.mxu0 0.0
    %4379 = vmatprep.subr.mxu0 0.0
    %4380 = vmatpush1.msra.mxu0 0.0
    %4381 = vmatprep.subr.mxu0 0.0
    %4382 = vmatpush1.msra.mxu0 0.0
    %4383 = vmatprep.subr.mxu0 0.0
    %4384 = vmatpush1.msra.mxu0 0.0
    %4385 = vmatprep.subr.mxu0 0.0
    %4386 = vmatpush1.msra.mxu0 0.0
    %4387 = vmatprep.subr.mxu0 0.0
    %4388 = vmatpush1.msra.mxu0 0.0
    %4389 = vmatprep.subr.mxu0 0.0
    %4390 = vmatpush1.msra.mxu0 0.0
    %4391 = vmatprep.subr.mxu0 0.0
    %4392 = vmatpush1.msra.mxu0 0.0
    %4393 = vmatprep.subr.mxu0 0.0
    %4394 = vmatpush1.msra.mxu0 0.0
    %4395 = vmatprep.subr.mxu0 0.0
    %4396 = vmatpush1.msra.mxu0 0.0
    %4397 = vmatprep.subr.mxu0 0.0
    %4398 = vmatpush1.msra.mxu0 0.0
    %4399 = vmatprep.subr.mxu0 0.0
    %4400 = vmatpush1.msra.mxu0 0.0
    %4401 = vmatprep.subr.mxu0 0.0
    %4402 = vmatpush1.msra.mxu0 0.0
    %4403 = vmatprep.subr.mxu0 0.0
    %4404 = vmatpush1.msra.mxu0 0.0
    %4405 = vmatprep.subr.mxu0 0.0
    %4406 = vmatpush1.msra.mxu0 0.0
    %4407 = vmatprep.subr.mxu0 0.0
    %4408 = vmatpush1.msra.mxu0 0.0
    %4409 = vmatprep.subr.mxu0 0.0
    %4410 = vmatpush1.msra.mxu0 0.0
    %4411 = vmatprep.subr.mxu0 0.0
    %4412 = vmatpush1.msra.mxu0 0.0
    %4413 = vmatprep.subr.mxu0 0.0
    %4414 = vmatpush1.msra.mxu0 0.0
    %4415 = vmatprep.subr.mxu0 0.0
    %4416 = vmatpush1.msra.mxu0 0.0
    %4417 = vmatprep.subr.mxu0 0.0
    %4418 = vmatpush1.msra.mxu0 0.0
    %4419 = vmatprep.subr.mxu0 0.0
    %4420 = vmatpush1.msra.mxu0 0.0
    %4421 = vmatprep.subr.mxu0 0.0
    %4422 = vmatpush1.msra.mxu0 0.0
    %4423 = vmatprep.mubr.f32.mxu0 0.0
    %v4424 = vand.u32 %v4081, 4294901760
    %v4425 = vsub.f32 %v4081, %v4424
    %4426 = vmatmul.mubr.f32.gmra.mrb[0].mxu0 %v4425
    %v4427 = vpop.f32.mrb[0].mxu0
    %v4428 = vadd.f32 %v4323, %v4427
    %v4429 = vpop.f32.mrb[0].mxu0
    %v4430 = vadd.f32 %v4325, %v4429
    %4431 = vdwg.mxu0
    %v4432 = vand.u32 %v650, 4294901760
    %4433 = vmatprep.subr.mxu0 %v4432
    %v4434 = vand.u32 %v649, 4294901760
    %4435 = vmatpush1.msra.mxu0 %v4434
    %v4436 = vand.u32 %v652, 4294901760
    %4437 = vmatprep.subr.mxu0 %v4436
    %v4438 = vand.u32 %v651, 4294901760
    %4439 = vmatpush1.msra.mxu0 %v4438
    %v4440 = vand.u32 %v654, 4294901760
    %4441 = vmatprep.subr.mxu0 %v4440
    %v4442 = vand.u32 %v653, 4294901760
    %4443 = vmatpush1.msra.mxu0 %v4442
    %v4444 = vand.u32 %v656, 4294901760
    %4445 = vmatprep.subr.mxu0 %v4444
    %v4446 = vand.u32 %v655, 4294901760
    %4447 = vmatpush1.msra.mxu0 %v4446
    %v4448 = vand.u32 %v658, 4294901760
    %4449 = vmatprep.subr.mxu0 %v4448
    %v4450 = vand.u32 %v657, 4294901760
    %4451 = vmatpush1.msra.mxu0 %v4450
    %v4452 = vand.u32 %v660, 4294901760
    %4453 = vmatprep.subr.mxu0 %v4452
    %v4454 = vand.u32 %v659, 4294901760
    %4455 = vmatpush1.msra.mxu0 %v4454
    %v4456 = vand.u32 %v662, 4294901760
    %4457 = vmatprep.subr.mxu0 %v4456
    %v4458 = vand.u32 %v661, 4294901760
    %4459 = vmatpush1.msra.mxu0 %v4458
    %v4460 = vand.u32 %v664, 4294901760
    %4461 = vmatprep.subr.mxu0 %v4460
    %v4462 = vand.u32 %v663, 4294901760
    %4463 = vmatpush1.msra.mxu0 %v4462
    %4464 = vmatprep.subr.mxu0 0.0
    %4465 = vmatpush1.msra.mxu0 0.0
    %4466 = vmatprep.subr.mxu0 0.0
    %4467 = vmatpush1.msra.mxu0 0.0
    %4468 = vmatprep.subr.mxu0 0.0
    %4469 = vmatpush1.msra.mxu0 0.0
    %4470 = vmatprep.subr.mxu0 0.0
    %4471 = vmatpush1.msra.mxu0 0.0
    %4472 = vmatprep.subr.mxu0 0.0
    %4473 = vmatpush1.msra.mxu0 0.0
    %4474 = vmatprep.subr.mxu0 0.0
    %4475 = vmatpush1.msra.mxu0 0.0
    %4476 = vmatprep.subr.mxu0 0.0
    %4477 = vmatpush1.msra.mxu0 0.0
    %4478 = vmatprep.subr.mxu0 0.0
    %4479 = vmatpush1.msra.mxu0 0.0
    %4480 = vmatprep.subr.mxu0 0.0
    %4481 = vmatpush1.msra.mxu0 0.0
    %4482 = vmatprep.subr.mxu0 0.0
    %4483 = vmatpush1.msra.mxu0 0.0
    %4484 = vmatprep.subr.mxu0 0.0
    %4485 = vmatpush1.msra.mxu0 0.0
    %4486 = vmatprep.subr.mxu0 0.0
    %4487 = vmatpush1.msra.mxu0 0.0
    %4488 = vmatprep.subr.mxu0 0.0
    %4489 = vmatpush1.msra.mxu0 0.0
    %4490 = vmatprep.subr.mxu0 0.0
    %4491 = vmatpush1.msra.mxu0 0.0
    %4492 = vmatprep.subr.mxu0 0.0
    %4493 = vmatpush1.msra.mxu0 0.0
    %4494 = vmatprep.subr.mxu0 0.0
    %4495 = vmatpush1.msra.mxu0 0.0
    %4496 = vmatprep.subr.mxu0 0.0
    %4497 = vmatpush1.msra.mxu0 0.0
    %4498 = vmatprep.subr.mxu0 0.0
    %4499 = vmatpush1.msra.mxu0 0.0
    %4500 = vmatprep.subr.mxu0 0.0
    %4501 = vmatpush1.msra.mxu0 0.0
    %4502 = vmatprep.subr.mxu0 0.0
    %4503 = vmatpush1.msra.mxu0 0.0
    %4504 = vmatprep.subr.mxu0 0.0
    %4505 = vmatpush1.msra.mxu0 0.0
    %4506 = vmatprep.subr.mxu0 0.0
    %4507 = vmatpush1.msra.mxu0 0.0
    %4508 = vmatprep.subr.mxu0 0.0
    %4509 = vmatpush1.msra.mxu0 0.0
    %4510 = vmatprep.subr.mxu0 0.0
    %4511 = vmatpush1.msra.mxu0 0.0
    %4512 = vmatprep.mubr.f32.mxu0 0.0
    %v4513 = vand.u32 %v4081, 4294901760
    %v4514 = vsub.f32 %v4081, %v4513
    %v4515 = vand.u32 %v4514, 4294901760
    %4516 = vmatmul.mubr.f32.gmra.mrb[0].mxu0 %v4515
    %v4517 = vpop.f32.mrb[0].mxu0
    %v4518 = vadd.f32 %v4428, %v4517
    %v4519 = vpop.f32.mrb[0].mxu0
    %v4520 = vadd.f32 %v4430, %v4519
    %4521 = vdwg.mxu0
    %v4522 = vand.u32 %v650, 4294901760
    %v4523 = vsub.f32 %v650, %v4522
    %v4524 = vand.u32 %v4523, 4294901760
    %4525 = vmatprep.subr.mxu0 %v4524
    %v4526 = vand.u32 %v649, 4294901760
    %v4527 = vsub.f32 %v649, %v4526
    %v4528 = vand.u32 %v4527, 4294901760
    %4529 = vmatpush1.msra.mxu0 %v4528
    %v4530 = vand.u32 %v652, 4294901760
    %v4531 = vsub.f32 %v652, %v4530
    %v4532 = vand.u32 %v4531, 4294901760
    %4533 = vmatprep.subr.mxu0 %v4532
    %v4534 = vand.u32 %v651, 4294901760
    %v4535 = vsub.f32 %v651, %v4534
    %v4536 = vand.u32 %v4535, 4294901760
    %4537 = vmatpush1.msra.mxu0 %v4536
    %v4538 = vand.u32 %v654, 4294901760
    %v4539 = vsub.f32 %v654, %v4538
    %v4540 = vand.u32 %v4539, 4294901760
    %4541 = vmatprep.subr.mxu0 %v4540
    %v4542 = vand.u32 %v653, 4294901760
    %v4543 = vsub.f32 %v653, %v4542
    %v4544 = vand.u32 %v4543, 4294901760
    %4545 = vmatpush1.msra.mxu0 %v4544
    %v4546 = vand.u32 %v656, 4294901760
    %v4547 = vsub.f32 %v656, %v4546
    %v4548 = vand.u32 %v4547, 4294901760
    %4549 = vmatprep.subr.mxu0 %v4548
    %v4550 = vand.u32 %v655, 4294901760
    %v4551 = vsub.f32 %v655, %v4550
    %v4552 = vand.u32 %v4551, 4294901760
    %4553 = vmatpush1.msra.mxu0 %v4552
    %v4554 = vand.u32 %v658, 4294901760
    %v4555 = vsub.f32 %v658, %v4554
    %v4556 = vand.u32 %v4555, 4294901760
    %4557 = vmatprep.subr.mxu0 %v4556
    %v4558 = vand.u32 %v657, 4294901760
    %v4559 = vsub.f32 %v657, %v4558
    %v4560 = vand.u32 %v4559, 4294901760
    %4561 = vmatpush1.msra.mxu0 %v4560
    %v4562 = vand.u32 %v660, 4294901760
    %v4563 = vsub.f32 %v660, %v4562
    %v4564 = vand.u32 %v4563, 4294901760
    %4565 = vmatprep.subr.mxu0 %v4564
    %v4566 = vand.u32 %v659, 4294901760
    %v4567 = vsub.f32 %v659, %v4566
    %v4568 = vand.u32 %v4567, 4294901760
    %4569 = vmatpush1.msra.mxu0 %v4568
    %v4570 = vand.u32 %v662, 4294901760
    %v4571 = vsub.f32 %v662, %v4570
    %v4572 = vand.u32 %v4571, 4294901760
    %4573 = vmatprep.subr.mxu0 %v4572
    %v4574 = vand.u32 %v661, 4294901760
    %v4575 = vsub.f32 %v661, %v4574
    %v4576 = vand.u32 %v4575, 4294901760
    %4577 = vmatpush1.msra.mxu0 %v4576
    %v4578 = vand.u32 %v664, 4294901760
    %v4579 = vsub.f32 %v664, %v4578
    %v4580 = vand.u32 %v4579, 4294901760
    %4581 = vmatprep.subr.mxu0 %v4580
    %v4582 = vand.u32 %v663, 4294901760
    %v4583 = vsub.f32 %v663, %v4582
    %v4584 = vand.u32 %v4583, 4294901760
    %4585 = vmatpush1.msra.mxu0 %v4584
    %4586 = vmatprep.subr.mxu0 0.0
    %4587 = vmatpush1.msra.mxu0 0.0
    %4588 = vmatprep.subr.mxu0 0.0
    %4589 = vmatpush1.msra.mxu0 0.0
    %4590 = vmatprep.subr.mxu0 0.0
    %4591 = vmatpush1.msra.mxu0 0.0
    %4592 = vmatprep.subr.mxu0 0.0
    %4593 = vmatpush1.msra.mxu0 0.0
    %4594 = vmatprep.subr.mxu0 0.0
    %4595 = vmatpush1.msra.mxu0 0.0
    %4596 = vmatprep.subr.mxu0 0.0
    %4597 = vmatpush1.msra.mxu0 0.0
    %4598 = vmatprep.subr.mxu0 0.0
    %4599 = vmatpush1.msra.mxu0 0.0
    %4600 = vmatprep.subr.mxu0 0.0
    %4601 = vmatpush1.msra.mxu0 0.0
    %4602 = vmatprep.subr.mxu0 0.0
    %4603 = vmatpush1.msra.mxu0 0.0
    %4604 = vmatprep.subr.mxu0 0.0
    %4605 = vmatpush1.msra.mxu0 0.0
    %4606 = vmatprep.subr.mxu0 0.0
    %4607 = vmatpush1.msra.mxu0 0.0
    %4608 = vmatprep.subr.mxu0 0.0
    %4609 = vmatpush1.msra.mxu0 0.0
    %4610 = vmatprep.subr.mxu0 0.0
    %4611 = vmatpush1.msra.mxu0 0.0
    %4612 = vmatprep.subr.mxu0 0.0
    %4613 = vmatpush1.msra.mxu0 0.0
    %4614 = vmatprep.subr.mxu0 0.0
    %4615 = vmatpush1.msra.mxu0 0.0
    %4616 = vmatprep.subr.mxu0 0.0
    %4617 = vmatpush1.msra.mxu0 0.0
    %4618 = vmatprep.subr.mxu0 0.0
    %4619 = vmatpush1.msra.mxu0 0.0
    %4620 = vmatprep.subr.mxu0 0.0
    %4621 = vmatpush1.msra.mxu0 0.0
    %4622 = vmatprep.subr.mxu0 0.0
    %4623 = vmatpush1.msra.mxu0 0.0
    %4624 = vmatprep.subr.mxu0 0.0
    %4625 = vmatpush1.msra.mxu0 0.0
    %4626 = vmatprep.subr.mxu0 0.0
    %4627 = vmatpush1.msra.mxu0 0.0
    %4628 = vmatprep.subr.mxu0 0.0
    %4629 = vmatpush1.msra.mxu0 0.0
    %4630 = vmatprep.subr.mxu0 0.0
    %4631 = vmatpush1.msra.mxu0 0.0
    %4632 = vmatprep.subr.mxu0 0.0
    %4633 = vmatpush1.msra.mxu0 0.0
    %4634 = vmatprep.mubr.f32.mxu0 0.0
    %v4635 = vand.u32 %v4081, 4294901760
    %4636 = vmatmul.mubr.f32.gmra.mrb[0].mxu0 %v4635
    %v4637 = vpop.f32.mrb[0].mxu0
    %v4638 = vadd.f32 %v4518, %v4637
    %v4639 = vpop.f32.mrb[0].mxu0
    %v4640 = vadd.f32 %v4520, %v4639
    %4641 = vdwg.mxu0
    %v4642 = vand.u32 %v650, 4294901760
    %4643 = vmatprep.subr.mxu0 %v4642
    %v4644 = vand.u32 %v649, 4294901760
    %4645 = vmatpush1.msra.mxu0 %v4644
    %v4646 = vand.u32 %v652, 4294901760
    %4647 = vmatprep.subr.mxu0 %v4646
    %v4648 = vand.u32 %v651, 4294901760
    %4649 = vmatpush1.msra.mxu0 %v4648
    %v4650 = vand.u32 %v654, 4294901760
    %4651 = vmatprep.subr.mxu0 %v4650
    %v4652 = vand.u32 %v653, 4294901760
    %4653 = vmatpush1.msra.mxu0 %v4652
    %v4654 = vand.u32 %v656, 4294901760
    %4655 = vmatprep.subr.mxu0 %v4654
    %v4656 = vand.u32 %v655, 4294901760
    %4657 = vmatpush1.msra.mxu0 %v4656
    %v4658 = vand.u32 %v658, 4294901760
    %4659 = vmatprep.subr.mxu0 %v4658
    %v4660 = vand.u32 %v657, 4294901760
    %4661 = vmatpush1.msra.mxu0 %v4660
    %v4662 = vand.u32 %v660, 4294901760
    %4663 = vmatprep.subr.mxu0 %v4662
    %v4664 = vand.u32 %v659, 4294901760
    %4665 = vmatpush1.msra.mxu0 %v4664
    %v4666 = vand.u32 %v662, 4294901760
    %4667 = vmatprep.subr.mxu0 %v4666
    %v4668 = vand.u32 %v661, 4294901760
    %4669 = vmatpush1.msra.mxu0 %v4668
    %v4670 = vand.u32 %v664, 4294901760
    %4671 = vmatprep.subr.mxu0 %v4670
    %v4672 = vand.u32 %v663, 4294901760
    %4673 = vmatpush1.msra.mxu0 %v4672
    %4674 = vmatprep.subr.mxu0 0.0
    %4675 = vmatpush1.msra.mxu0 0.0
    %4676 = vmatprep.subr.mxu0 0.0
    %4677 = vmatpush1.msra.mxu0 0.0
    %4678 = vmatprep.subr.mxu0 0.0
    %4679 = vmatpush1.msra.mxu0 0.0
    %4680 = vmatprep.subr.mxu0 0.0
    %4681 = vmatpush1.msra.mxu0 0.0
    %4682 = vmatprep.subr.mxu0 0.0
    %4683 = vmatpush1.msra.mxu0 0.0
    %4684 = vmatprep.subr.mxu0 0.0
    %4685 = vmatpush1.msra.mxu0 0.0
    %4686 = vmatprep.subr.mxu0 0.0
    %4687 = vmatpush1.msra.mxu0 0.0
    %4688 = vmatprep.subr.mxu0 0.0
    %4689 = vmatpush1.msra.mxu0 0.0
    %4690 = vmatprep.subr.mxu0 0.0
    %4691 = vmatpush1.msra.mxu0 0.0
    %4692 = vmatprep.subr.mxu0 0.0
    %4693 = vmatpush1.msra.mxu0 0.0
    %4694 = vmatprep.subr.mxu0 0.0
    %4695 = vmatpush1.msra.mxu0 0.0
    %4696 = vmatprep.subr.mxu0 0.0
    %4697 = vmatpush1.msra.mxu0 0.0
    %4698 = vmatprep.subr.mxu0 0.0
    %4699 = vmatpush1.msra.mxu0 0.0
    %4700 = vmatprep.subr.mxu0 0.0
    %4701 = vmatpush1.msra.mxu0 0.0
    %4702 = vmatprep.subr.mxu0 0.0
    %4703 = vmatpush1.msra.mxu0 0.0
    %4704 = vmatprep.subr.mxu0 0.0
    %4705 = vmatpush1.msra.mxu0 0.0
    %4706 = vmatprep.subr.mxu0 0.0
    %4707 = vmatpush1.msra.mxu0 0.0
    %4708 = vmatprep.subr.mxu0 0.0
    %4709 = vmatpush1.msra.mxu0 0.0
    %4710 = vmatprep.subr.mxu0 0.0
    %4711 = vmatpush1.msra.mxu0 0.0
    %4712 = vmatprep.subr.mxu0 0.0
    %4713 = vmatpush1.msra.mxu0 0.0
    %4714 = vmatprep.subr.mxu0 0.0
    %4715 = vmatpush1.msra.mxu0 0.0
    %4716 = vmatprep.subr.mxu0 0.0
    %4717 = vmatpush1.msra.mxu0 0.0
    %4718 = vmatprep.subr.mxu0 0.0
    %4719 = vmatpush1.msra.mxu0 0.0
    %4720 = vmatprep.subr.mxu0 0.0
    %4721 = vmatpush1.msra.mxu0 0.0
    %4722 = vmatprep.mubr.f32.mxu0 0.0
    %v4723 = vand.u32 %v4081, 4294901760
    %4724 = vmatmul.mubr.f32.gmra.mrb[0].mxu0 %v4723
    %v4725 = vpop.f32.mrb[0].mxu0
    %v4726 = vadd.f32 %v4638, %v4725
    %v4727 = vpop.f32.mrb[0].mxu0
    %v4728 = vadd.f32 %v4640, %v4727
    %4729 = vdwg.mxu0
    %v4732 = vrot.slane %v4726, 4
    %v4733 = vrot.slane %v4728, 4
    %v4736 = vadd.f32 %v616, %v4732
    %v4737 = vadd.f32 %v618, %v4733
    %v4738 = vxor.u32 %v4736, 2147483648
    %v4739 = vmul.f32 %v4738, 1.442695
    %v4740 = vpow.pop %v4739
    %v4741 = vadd.f32 %v4740, 1.0
    %v4742 = vrcp.pop %v4741
    %v4743 = vmul.f32 1.0, %v4742
    %4745 = vrot.lane.b32.xlu0 %v4737, 64
    %v4746 = vpop.permute.xlu0 %4745
    %v4748 = vmul.f32 %v4743, %v4746
    %v4749 = vadd.f32 %v4737, %v4748
    %v4750 = vtanh.pop %v4749
    %v4751 = vsub.f32 1.0, %v4743
    %4753 = vrot.lane.b32.xlu0 %v4750, 64
    %v4754 = vpop.permute.xlu0 %4753
    %v4756 = vmul.f32 %v4751, %v4754
    %v4757 = vrot.slane %v4076, 6
    %v4759 = vmul.f32 %v4743, %v4757
    %v4760 = vadd.f32 %v4756, %v4759
    %v4762 = vrot.slane %v4760, 4
    %4763 = vrot.lane.b32.xlu0 %v4762, 64
    %v4764 = vpop.permute.xlu0 %4763
    %v4765 = vsel %vm665, %v4764, 0
    %v4767 = vand.u32 %v650, 4294901760
    %4768 = vmatprep.subr.mxu0 %v4767
    %v4769 = vand.u32 %v649, 4294901760
    %4770 = vmatpush1.msra.mxu0 %v4769
    %v4771 = vand.u32 %v652, 4294901760
    %4772 = vmatprep.subr.mxu0 %v4771
    %v4773 = vand.u32 %v651, 4294901760
    %4774 = vmatpush1.msra.mxu0 %v4773
    %v4775 = vand.u32 %v654, 4294901760
    %4776 = vmatprep.subr.mxu0 %v4775
    %v4777 = vand.u32 %v653, 4294901760
    %4778 = vmatpush1.msra.mxu0 %v4777
    %v4779 = vand.u32 %v656, 4294901760
    %4780 = vmatprep.subr.mxu0 %v4779
    %v4781 = vand.u32 %v655, 4294901760
    %4782 = vmatpush1.msra.mxu0 %v4781
    %v4783 = vand.u32 %v658, 4294901760
    %4784 = vmatprep.subr.mxu0 %v4783
    %v4785 = vand.u32 %v657, 4294901760
    %4786 = vmatpush1.msra.mxu0 %v4785
    %v4787 = vand.u32 %v660, 4294901760
    %4788 = vmatprep.subr.mxu0 %v4787
    %v4789 = vand.u32 %v659, 4294901760
    %4790 = vmatpush1.msra.mxu0 %v4789
    %v4791 = vand.u32 %v662, 4294901760
    %4792 = vmatprep.subr.mxu0 %v4791
    %v4793 = vand.u32 %v661, 4294901760
    %4794 = vmatpush1.msra.mxu0 %v4793
    %v4795 = vand.u32 %v664, 4294901760
    %4796 = vmatprep.subr.mxu0 %v4795
    %v4797 = vand.u32 %v663, 4294901760
    %4798 = vmatpush1.msra.mxu0 %v4797
    %4799 = vmatprep.subr.mxu0 0.0
    %4800 = vmatpush1.msra.mxu0 0.0
    %4801 = vmatprep.subr.mxu0 0.0
    %4802 = vmatpush1.msra.mxu0 0.0
    %4803 = vmatprep.subr.mxu0 0.0
    %4804 = vmatpush1.msra.mxu0 0.0
    %4805 = vmatprep.subr.mxu0 0.0
    %4806 = vmatpush1.msra.mxu0 0.0
    %4807 = vmatprep.subr.mxu0 0.0
    %4808 = vmatpush1.msra.mxu0 0.0
    %4809 = vmatprep.subr.mxu0 0.0
    %4810 = vmatpush1.msra.mxu0 0.0
    %4811 = vmatprep.subr.mxu0 0.0
    %4812 = vmatpush1.msra.mxu0 0.0
    %4813 = vmatprep.subr.mxu0 0.0
    %4814 = vmatpush1.msra.mxu0 0.0
    %4815 = vmatprep.subr.mxu0 0.0
    %4816 = vmatpush1.msra.mxu0 0.0
    %4817 = vmatprep.subr.mxu0 0.0
    %4818 = vmatpush1.msra.mxu0 0.0
    %4819 = vmatprep.subr.mxu0 0.0
    %4820 = vmatpush1.msra.mxu0 0.0
    %4821 = vmatprep.subr.mxu0 0.0
    %4822 = vmatpush1.msra.mxu0 0.0
    %4823 = vmatprep.subr.mxu0 0.0
    %4824 = vmatpush1.msra.mxu0 0.0
    %4825 = vmatprep.subr.mxu0 0.0
    %4826 = vmatpush1.msra.mxu0 0.0
    %4827 = vmatprep.subr.mxu0 0.0
    %4828 = vmatpush1.msra.mxu0 0.0
    %4829 = vmatprep.subr.mxu0 0.0
    %4830 = vmatpush1.msra.mxu0 0.0
    %4831 = vmatprep.subr.mxu0 0.0
    %4832 = vmatpush1.msra.mxu0 0.0
    %4833 = vmatprep.subr.mxu0 0.0
    %4834 = vmatpush1.msra.mxu0 0.0
    %4835 = vmatprep.subr.mxu0 0.0
    %4836 = vmatpush1.msra.mxu0 0.0
    %4837 = vmatprep.subr.mxu0 0.0
    %4838 = vmatpush1.msra.mxu0 0.0
    %4839 = vmatprep.subr.mxu0 0.0
    %4840 = vmatpush1.msra.mxu0 0.0
    %4841 = vmatprep.subr.mxu0 0.0
    %4842 = vmatpush1.msra.mxu0 0.0
    %4843 = vmatprep.subr.mxu0 0.0
    %4844 = vmatpush1.msra.mxu0 0.0
    %4845 = vmatprep.subr.mxu0 0.0
    %4846 = vmatpush1.msra.mxu0 0.0
    %4847 = vmatprep.mubr.f32.mxu0 0.0
    %v4848 = vand.u32 %v4765, 4294901760
    %v4849 = vsub.f32 %v4765, %v4848
    %v4850 = vand.u32 %v4849, 4294901760
    %v4851 = vsub.f32 %v4849, %v4850
    %v4852 = vand.u32 %v4851, 4294901760
    %4853 = vmatmul.mubr.f32.gmra.mrb[0].mxu0 %v4852
    %v4854 = vpop.f32.mrb[0].mxu0
    %v4855 = vadd.f32 0.0, %v4854
    %v4856 = vpop.f32.mrb[0].mxu0
    %v4857 = vadd.f32 0.0, %v4856
    %4858 = vdwg.mxu0
    %v4859 = vand.u32 %v650, 4294901760
    %v4860 = vsub.f32 %v650, %v4859
    %v4861 = vand.u32 %v4860, 4294901760
    %v4862 = vsub.f32 %v4860, %v4861
    %v4863 = vand.u32 %v4862, 4294901760
    %4864 = vmatprep.subr.mxu0 %v4863
    %v4865 = vand.u32 %v649, 4294901760
    %v4866 = vsub.f32 %v649, %v4865
    %v4867 = vand.u32 %v4866, 4294901760
    %v4868 = vsub.f32 %v4866, %v4867
    %v4869 = vand.u32 %v4868, 4294901760
    %4870 = vmatpush1.msra.mxu0 %v4869
    %v4871 = vand.u32 %v652, 4294901760
    %v4872 = vsub.f32 %v652, %v4871
    %v4873 = vand.u32 %v4872, 4294901760
    %v4874 = vsub.f32 %v4872, %v4873
    %v4875 = vand.u32 %v4874, 4294901760
    %4876 = vmatprep.subr.mxu0 %v4875
    %v4877 = vand.u32 %v651, 4294901760
    %v4878 = vsub.f32 %v651, %v4877
    %v4879 = vand.u32 %v4878, 4294901760
    %v4880 = vsub.f32 %v4878, %v4879
    %v4881 = vand.u32 %v4880, 4294901760
    %4882 = vmatpush1.msra.mxu0 %v4881
    %v4883 = vand.u32 %v654, 4294901760
    %v4884 = vsub.f32 %v654, %v4883
    %v4885 = vand.u32 %v4884, 4294901760
    %v4886 = vsub.f32 %v4884, %v4885
    %v4887 = vand.u32 %v4886, 4294901760
    %4888 = vmatprep.subr.mxu0 %v4887
    %v4889 = vand.u32 %v653, 4294901760
    %v4890 = vsub.f32 %v653, %v4889
    %v4891 = vand.u32 %v4890, 4294901760
    %v4892 = vsub.f32 %v4890, %v4891
    %v4893 = vand.u32 %v4892, 4294901760
    %4894 = vmatpush1.msra.mxu0 %v4893
    %v4895 = vand.u32 %v656, 4294901760
    %v4896 = vsub.f32 %v656, %v4895
    %v4897 = vand.u32 %v4896, 4294901760
    %v4898 = vsub.f32 %v4896, %v4897
    %v4899 = vand.u32 %v4898, 4294901760
    %4900 = vmatprep.subr.mxu0 %v4899
    %v4901 = vand.u32 %v655, 4294901760
    %v4902 = vsub.f32 %v655, %v4901
    %v4903 = vand.u32 %v4902, 4294901760
    %v4904 = vsub.f32 %v4902, %v4903
    %v4905 = vand.u32 %v4904, 4294901760
    %4906 = vmatpush1.msra.mxu0 %v4905
    %v4907 = vand.u32 %v658, 4294901760
    %v4908 = vsub.f32 %v658, %v4907
    %v4909 = vand.u32 %v4908, 4294901760
    %v4910 = vsub.f32 %v4908, %v4909
    %v4911 = vand.u32 %v4910, 4294901760
    %4912 = vmatprep.subr.mxu0 %v4911
    %v4913 = vand.u32 %v657, 4294901760
    %v4914 = vsub.f32 %v657, %v4913
    %v4915 = vand.u32 %v4914, 4294901760
    %v4916 = vsub.f32 %v4914, %v4915
    %v4917 = vand.u32 %v4916, 4294901760
    %4918 = vmatpush1.msra.mxu0 %v4917
    %v4919 = vand.u32 %v660, 4294901760
    %v4920 = vsub.f32 %v660, %v4919
    %v4921 = vand.u32 %v4920, 4294901760
    %v4922 = vsub.f32 %v4920, %v4921
    %v4923 = vand.u32 %v4922, 4294901760
    %4924 = vmatprep.subr.mxu0 %v4923
    %v4925 = vand.u32 %v659, 4294901760
    %v4926 = vsub.f32 %v659, %v4925
    %v4927 = vand.u32 %v4926, 4294901760
    %v4928 = vsub.f32 %v4926, %v4927
    %v4929 = vand.u32 %v4928, 4294901760
    %4930 = vmatpush1.msra.mxu0 %v4929
    %v4931 = vand.u32 %v662, 4294901760
    %v4932 = vsub.f32 %v662, %v4931
    %v4933 = vand.u32 %v4932, 4294901760
    %v4934 = vsub.f32 %v4932, %v4933
    %v4935 = vand.u32 %v4934, 4294901760
    %4936 = vmatprep.subr.mxu0 %v4935
    %v4937 = vand.u32 %v661, 4294901760
    %v4938 = vsub.f32 %v661, %v4937
    %v4939 = vand.u32 %v4938, 4294901760
    %v4940 = vsub.f32 %v4938, %v4939
    %v4941 = vand.u32 %v4940, 4294901760
    %4942 = vmatpush1.msra.mxu0 %v4941
    %v4943 = vand.u32 %v664, 4294901760
    %v4944 = vsub.f32 %v664, %v4943
    %v4945 = vand.u32 %v4944, 4294901760
    %v4946 = vsub.f32 %v4944, %v4945
    %v4947 = vand.u32 %v4946, 4294901760
    %4948 = vmatprep.subr.mxu0 %v4947
    %v4949 = vand.u32 %v663, 4294901760
    %v4950 = vsub.f32 %v663, %v4949
    %v4951 = vand.u32 %v4950, 4294901760
    %v4952 = vsub.f32 %v4950, %v4951
    %v4953 = vand.u32 %v4952, 4294901760
    %4954 = vmatpush1.msra.mxu0 %v4953
    %4955 = vmatprep.subr.mxu0 0.0
    %4956 = vmatpush1.msra.mxu0 0.0
    %4957 = vmatprep.subr.mxu0 0.0
    %4958 = vmatpush1.msra.mxu0 0.0
    %4959 = vmatprep.subr.mxu0 0.0
    %4960 = vmatpush1.msra.mxu0 0.0
    %4961 = vmatprep.subr.mxu0 0.0
    %4962 = vmatpush1.msra.mxu0 0.0
    %4963 = vmatprep.subr.mxu0 0.0
    %4964 = vmatpush1.msra.mxu0 0.0
    %4965 = vmatprep.subr.mxu0 0.0
    %4966 = vmatpush1.msra.mxu0 0.0
    %4967 = vmatprep.subr.mxu0 0.0
    %4968 = vmatpush1.msra.mxu0 0.0
    %4969 = vmatprep.subr.mxu0 0.0
    %4970 = vmatpush1.msra.mxu0 0.0
    %4971 = vmatprep.subr.mxu0 0.0
    %4972 = vmatpush1.msra.mxu0 0.0
    %4973 = vmatprep.subr.mxu0 0.0
    %4974 = vmatpush1.msra.mxu0 0.0
    %4975 = vmatprep.subr.mxu0 0.0
    %4976 = vmatpush1.msra.mxu0 0.0
    %4977 = vmatprep.subr.mxu0 0.0
    %4978 = vmatpush1.msra.mxu0 0.0
    %4979 = vmatprep.subr.mxu0 0.0
    %4980 = vmatpush1.msra.mxu0 0.0
    %4981 = vmatprep.subr.mxu0 0.0
    %4982 = vmatpush1.msra.mxu0 0.0
    %4983 = vmatprep.subr.mxu0 0.0
    %4984 = vmatpush1.msra.mxu0 0.0
    %4985 = vmatprep.subr.mxu0 0.0
    %4986 = vmatpush1.msra.mxu0 0.0
    %4987 = vmatprep.subr.mxu0 0.0
    %4988 = vmatpush1.msra.mxu0 0.0
    %4989 = vmatprep.subr.mxu0 0.0
    %4990 = vmatpush1.msra.mxu0 0.0
    %4991 = vmatprep.subr.mxu0 0.0
    %4992 = vmatpush1.msra.mxu0 0.0
    %4993 = vmatprep.subr.mxu0 0.0
    %4994 = vmatpush1.msra.mxu0 0.0
    %4995 = vmatprep.subr.mxu0 0.0
    %4996 = vmatpush1.msra.mxu0 0.0
    %4997 = vmatprep.subr.mxu0 0.0
    %4998 = vmatpush1.msra.mxu0 0.0
    %4999 = vmatprep.subr.mxu0 0.0
    %5000 = vmatpush1.msra.mxu0 0.0
    %5001 = vmatprep.subr.mxu0 0.0
    %5002 = vmatpush1.msra.mxu0 0.0
    %5003 = vmatprep.mubr.f32.mxu0 0.0
    %v5004 = vand.u32 %v4765, 4294901760
    %5005 = vmatmul.mubr.f32.gmra.mrb[0].mxu0 %v5004
    %v5006 = vpop.f32.mrb[0].mxu0
    %v5007 = vadd.f32 %v4855, %v5006
    %v5008 = vpop.f32.mrb[0].mxu0
    %v5009 = vadd.f32 %v4857, %v5008
    %5010 = vdwg.mxu0
    %v5011 = vand.u32 %v650, 4294901760
    %v5012 = vsub.f32 %v650, %v5011
    %5013 = vmatprep.subr.mxu0 %v5012
    %v5014 = vand.u32 %v649, 4294901760
    %v5015 = vsub.f32 %v649, %v5014
    %5016 = vmatpush1.msra.mxu0 %v5015
    %v5017 = vand.u32 %v652, 4294901760
    %v5018 = vsub.f32 %v652, %v5017
    %5019 = vmatprep.subr.mxu0 %v5018
    %v5020 = vand.u32 %v651, 4294901760
    %v5021 = vsub.f32 %v651, %v5020
    %5022 = vmatpush1.msra.mxu0 %v5021
    %v5023 = vand.u32 %v654, 4294901760
    %v5024 = vsub.f32 %v654, %v5023
    %5025 = vmatprep.subr.mxu0 %v5024
    %v5026 = vand.u32 %v653, 4294901760
    %v5027 = vsub.f32 %v653, %v5026
    %5028 = vmatpush1.msra.mxu0 %v5027
    %v5029 = vand.u32 %v656, 4294901760
    %v5030 = vsub.f32 %v656, %v5029
    %5031 = vmatprep.subr.mxu0 %v5030
    %v5032 = vand.u32 %v655, 4294901760
    %v5033 = vsub.f32 %v655, %v5032
    %5034 = vmatpush1.msra.mxu0 %v5033
    %v5035 = vand.u32 %v658, 4294901760
    %v5036 = vsub.f32 %v658, %v5035
    %5037 = vmatprep.subr.mxu0 %v5036
    %v5038 = vand.u32 %v657, 4294901760
    %v5039 = vsub.f32 %v657, %v5038
    %5040 = vmatpush1.msra.mxu0 %v5039
    %v5041 = vand.u32 %v660, 4294901760
    %v5042 = vsub.f32 %v660, %v5041
    %5043 = vmatprep.subr.mxu0 %v5042
    %v5044 = vand.u32 %v659, 4294901760
    %v5045 = vsub.f32 %v659, %v5044
    %5046 = vmatpush1.msra.mxu0 %v5045
    %v5047 = vand.u32 %v662, 4294901760
    %v5048 = vsub.f32 %v662, %v5047
    %5049 = vmatprep.subr.mxu0 %v5048
    %v5050 = vand.u32 %v661, 4294901760
    %v5051 = vsub.f32 %v661, %v5050
    %5052 = vmatpush1.msra.mxu0 %v5051
    %v5053 = vand.u32 %v664, 4294901760
    %v5054 = vsub.f32 %v664, %v5053
    %5055 = vmatprep.subr.mxu0 %v5054
    %v5056 = vand.u32 %v663, 4294901760
    %v5057 = vsub.f32 %v663, %v5056
    %5058 = vmatpush1.msra.mxu0 %v5057
    %5059 = vmatprep.subr.mxu0 0.0
    %5060 = vmatpush1.msra.mxu0 0.0
    %5061 = vmatprep.subr.mxu0 0.0
    %5062 = vmatpush1.msra.mxu0 0.0
    %5063 = vmatprep.subr.mxu0 0.0
    %5064 = vmatpush1.msra.mxu0 0.0
    %5065 = vmatprep.subr.mxu0 0.0
    %5066 = vmatpush1.msra.mxu0 0.0
    %5067 = vmatprep.subr.mxu0 0.0
    %5068 = vmatpush1.msra.mxu0 0.0
    %5069 = vmatprep.subr.mxu0 0.0
    %5070 = vmatpush1.msra.mxu0 0.0
    %5071 = vmatprep.subr.mxu0 0.0
    %5072 = vmatpush1.msra.mxu0 0.0
    %5073 = vmatprep.subr.mxu0 0.0
    %5074 = vmatpush1.msra.mxu0 0.0
    %5075 = vmatprep.subr.mxu0 0.0
    %5076 = vmatpush1.msra.mxu0 0.0
    %5077 = vmatprep.subr.mxu0 0.0
    %5078 = vmatpush1.msra.mxu0 0.0
    %5079 = vmatprep.subr.mxu0 0.0
    %5080 = vmatpush1.msra.mxu0 0.0
    %5081 = vmatprep.subr.mxu0 0.0
    %5082 = vmatpush1.msra.mxu0 0.0
    %5083 = vmatprep.subr.mxu0 0.0
    %5084 = vmatpush1.msra.mxu0 0.0
    %5085 = vmatprep.subr.mxu0 0.0
    %5086 = vmatpush1.msra.mxu0 0.0
    %5087 = vmatprep.subr.mxu0 0.0
    %5088 = vmatpush1.msra.mxu0 0.0
    %5089 = vmatprep.subr.mxu0 0.0
    %5090 = vmatpush1.msra.mxu0 0.0
    %5091 = vmatprep.subr.mxu0 0.0
    %5092 = vmatpush1.msra.mxu0 0.0
    %5093 = vmatprep.subr.mxu0 0.0
    %5094 = vmatpush1.msra.mxu0 0.0
    %5095 = vmatprep.subr.mxu0 0.0
    %5096 = vmatpush1.msra.mxu0 0.0
    %5097 = vmatprep.subr.mxu0 0.0
    %5098 = vmatpush1.msra.mxu0 0.0
    %5099 = vmatprep.subr.mxu0 0.0
    %5100 = vmatpush1.msra.mxu0 0.0
    %5101 = vmatprep.subr.mxu0 0.0
    %5102 = vmatpush1.msra.mxu0 0.0
    %5103 = vmatprep.subr.mxu0 0.0
    %5104 = vmatpush1.msra.mxu0 0.0
    %5105 = vmatprep.subr.mxu0 0.0
    %5106 = vmatpush1.msra.mxu0 0.0
    %5107 = vmatprep.mubr.f32.mxu0 0.0
    %v5108 = vand.u32 %v4765, 4294901760
    %v5109 = vsub.f32 %v4765, %v5108
    %5110 = vmatmul.mubr.f32.gmra.mrb[0].mxu0 %v5109
    %v5111 = vpop.f32.mrb[0].mxu0
    %v5112 = vadd.f32 %v5007, %v5111
    %v5113 = vpop.f32.mrb[0].mxu0
    %v5114 = vadd.f32 %v5009, %v5113
    %5115 = vdwg.mxu0
    %v5116 = vand.u32 %v650, 4294901760
    %5117 = vmatprep.subr.mxu0 %v5116
    %v5118 = vand.u32 %v649, 4294901760
    %5119 = vmatpush1.msra.mxu0 %v5118
    %v5120 = vand.u32 %v652, 4294901760
    %5121 = vmatprep.subr.mxu0 %v5120
    %v5122 = vand.u32 %v651, 4294901760
    %5123 = vmatpush1.msra.mxu0 %v5122
    %v5124 = vand.u32 %v654, 4294901760
    %5125 = vmatprep.subr.mxu0 %v5124
    %v5126 = vand.u32 %v653, 4294901760
    %5127 = vmatpush1.msra.mxu0 %v5126
    %v5128 = vand.u32 %v656, 4294901760
    %5129 = vmatprep.subr.mxu0 %v5128
    %v5130 = vand.u32 %v655, 4294901760
    %5131 = vmatpush1.msra.mxu0 %v5130
    %v5132 = vand.u32 %v658, 4294901760
    %5133 = vmatprep.subr.mxu0 %v5132
    %v5134 = vand.u32 %v657, 4294901760
    %5135 = vmatpush1.msra.mxu0 %v5134
    %v5136 = vand.u32 %v660, 4294901760
    %5137 = vmatprep.subr.mxu0 %v5136
    %v5138 = vand.u32 %v659, 4294901760
    %5139 = vmatpush1.msra.mxu0 %v5138
    %v5140 = vand.u32 %v662, 4294901760
    %5141 = vmatprep.subr.mxu0 %v5140
    %v5142 = vand.u32 %v661, 4294901760
    %5143 = vmatpush1.msra.mxu0 %v5142
    %v5144 = vand.u32 %v664, 4294901760
    %5145 = vmatprep.subr.mxu0 %v5144
    %v5146 = vand.u32 %v663, 4294901760
    %5147 = vmatpush1.msra.mxu0 %v5146
    %5148 = vmatprep.subr.mxu0 0.0
    %5149 = vmatpush1.msra.mxu0 0.0
    %5150 = vmatprep.subr.mxu0 0.0
    %5151 = vmatpush1.msra.mxu0 0.0
    %5152 = vmatprep.subr.mxu0 0.0
    %5153 = vmatpush1.msra.mxu0 0.0
    %5154 = vmatprep.subr.mxu0 0.0
    %5155 = vmatpush1.msra.mxu0 0.0
    %5156 = vmatprep.subr.mxu0 0.0
    %5157 = vmatpush1.msra.mxu0 0.0
    %5158 = vmatprep.subr.mxu0 0.0
    %5159 = vmatpush1.msra.mxu0 0.0
    %5160 = vmatprep.subr.mxu0 0.0
    %5161 = vmatpush1.msra.mxu0 0.0
    %5162 = vmatprep.subr.mxu0 0.0
    %5163 = vmatpush1.msra.mxu0 0.0
    %5164 = vmatprep.subr.mxu0 0.0
    %5165 = vmatpush1.msra.mxu0 0.0
    %5166 = vmatprep.subr.mxu0 0.0
    %5167 = vmatpush1.msra.mxu0 0.0
    %5168 = vmatprep.subr.mxu0 0.0
    %5169 = vmatpush1.msra.mxu0 0.0
    %5170 = vmatprep.subr.mxu0 0.0
    %5171 = vmatpush1.msra.mxu0 0.0
    %5172 = vmatprep.subr.mxu0 0.0
    %5173 = vmatpush1.msra.mxu0 0.0
    %5174 = vmatprep.subr.mxu0 0.0
    %5175 = vmatpush1.msra.mxu0 0.0
    %5176 = vmatprep.subr.mxu0 0.0
    %5177 = vmatpush1.msra.mxu0 0.0
    %5178 = vmatprep.subr.mxu0 0.0
    %5179 = vmatpush1.msra.mxu0 0.0
    %5180 = vmatprep.subr.mxu0 0.0
    %5181 = vmatpush1.msra.mxu0 0.0
    %5182 = vmatprep.subr.mxu0 0.0
    %5183 = vmatpush1.msra.mxu0 0.0
    %5184 = vmatprep.subr.mxu0 0.0
    %5185 = vmatpush1.msra.mxu0 0.0
    %5186 = vmatprep.subr.mxu0 0.0
    %5187 = vmatpush1.msra.mxu0 0.0
    %5188 = vmatprep.subr.mxu0 0.0
    %5189 = vmatpush1.msra.mxu0 0.0
    %5190 = vmatprep.subr.mxu0 0.0
    %5191 = vmatpush1.msra.mxu0 0.0
    %5192 = vmatprep.subr.mxu0 0.0
    %5193 = vmatpush1.msra.mxu0 0.0
    %5194 = vmatprep.subr.mxu0 0.0
    %5195 = vmatpush1.msra.mxu0 0.0
    %5196 = vmatprep.mubr.f32.mxu0 0.0
    %v5197 = vand.u32 %v4765, 4294901760
    %v5198 = vsub.f32 %v4765, %v5197
    %v5199 = vand.u32 %v5198, 4294901760
    %5200 = vmatmul.mubr.f32.gmra.mrb[0].mxu0 %v5199
    %v5201 = vpop.f32.mrb[0].mxu0
    %v5202 = vadd.f32 %v5112, %v5201
    %v5203 = vpop.f32.mrb[0].mxu0
    %v5204 = vadd.f32 %v5114, %v5203
    %5205 = vdwg.mxu0
    %v5206 = vand.u32 %v650, 4294901760
    %v5207 = vsub.f32 %v650, %v5206
    %v5208 = vand.u32 %v5207, 4294901760
    %5209 = vmatprep.subr.mxu0 %v5208
    %v5210 = vand.u32 %v649, 4294901760
    %v5211 = vsub.f32 %v649, %v5210
    %v5212 = vand.u32 %v5211, 4294901760
    %5213 = vmatpush1.msra.mxu0 %v5212
    %v5214 = vand.u32 %v652, 4294901760
    %v5215 = vsub.f32 %v652, %v5214
    %v5216 = vand.u32 %v5215, 4294901760
    %5217 = vmatprep.subr.mxu0 %v5216
    %v5218 = vand.u32 %v651, 4294901760
    %v5219 = vsub.f32 %v651, %v5218
    %v5220 = vand.u32 %v5219, 4294901760
    %5221 = vmatpush1.msra.mxu0 %v5220
    %v5222 = vand.u32 %v654, 4294901760
    %v5223 = vsub.f32 %v654, %v5222
    %v5224 = vand.u32 %v5223, 4294901760
    %5225 = vmatprep.subr.mxu0 %v5224
    %v5226 = vand.u32 %v653, 4294901760
    %v5227 = vsub.f32 %v653, %v5226
    %v5228 = vand.u32 %v5227, 4294901760
    %5229 = vmatpush1.msra.mxu0 %v5228
    %v5230 = vand.u32 %v656, 4294901760
    %v5231 = vsub.f32 %v656, %v5230
    %v5232 = vand.u32 %v5231, 4294901760
    %5233 = vmatprep.subr.mxu0 %v5232
    %v5234 = vand.u32 %v655, 4294901760
    %v5235 = vsub.f32 %v655, %v5234
    %v5236 = vand.u32 %v5235, 4294901760
    %5237 = vmatpush1.msra.mxu0 %v5236
    %v5238 = vand.u32 %v658, 4294901760
    %v5239 = vsub.f32 %v658, %v5238
    %v5240 = vand.u32 %v5239, 4294901760
    %5241 = vmatprep.subr.mxu0 %v5240
    %v5242 = vand.u32 %v657, 4294901760
    %v5243 = vsub.f32 %v657, %v5242
    %v5244 = vand.u32 %v5243, 4294901760
    %5245 = vmatpush1.msra.mxu0 %v5244
    %v5246 = vand.u32 %v660, 4294901760
    %v5247 = vsub.f32 %v660, %v5246
    %v5248 = vand.u32 %v5247, 4294901760
    %5249 = vmatprep.subr.mxu0 %v5248
    %v5250 = vand.u32 %v659, 4294901760
    %v5251 = vsub.f32 %v659, %v5250
    %v5252 = vand.u32 %v5251, 4294901760
    %5253 = vmatpush1.msra.mxu0 %v5252
    %v5254 = vand.u32 %v662, 4294901760
    %v5255 = vsub.f32 %v662, %v5254
    %v5256 = vand.u32 %v5255, 4294901760
    %5257 = vmatprep.subr.mxu0 %v5256
    %v5258 = vand.u32 %v661, 4294901760
    %v5259 = vsub.f32 %v661, %v5258
    %v5260 = vand.u32 %v5259, 4294901760
    %5261 = vmatpush1.msra.mxu0 %v5260
    %v5262 = vand.u32 %v664, 4294901760
    %v5263 = vsub.f32 %v664, %v5262
    %v5264 = vand.u32 %v5263, 4294901760
    %5265 = vmatprep.subr.mxu0 %v5264
    %v5266 = vand.u32 %v663, 4294901760
    %v5267 = vsub.f32 %v663, %v5266
    %v5268 = vand.u32 %v5267, 4294901760
    %5269 = vmatpush1.msra.mxu0 %v5268
    %5270 = vmatprep.subr.mxu0 0.0
    %5271 = vmatpush1.msra.mxu0 0.0
    %5272 = vmatprep.subr.mxu0 0.0
    %5273 = vmatpush1.msra.mxu0 0.0
    %5274 = vmatprep.subr.mxu0 0.0
    %5275 = vmatpush1.msra.mxu0 0.0
    %5276 = vmatprep.subr.mxu0 0.0
    %5277 = vmatpush1.msra.mxu0 0.0
    %5278 = vmatprep.subr.mxu0 0.0
    %5279 = vmatpush1.msra.mxu0 0.0
    %5280 = vmatprep.subr.mxu0 0.0
    %5281 = vmatpush1.msra.mxu0 0.0
    %5282 = vmatprep.subr.mxu0 0.0
    %5283 = vmatpush1.msra.mxu0 0.0
    %5284 = vmatprep.subr.mxu0 0.0
    %5285 = vmatpush1.msra.mxu0 0.0
    %5286 = vmatprep.subr.mxu0 0.0
    %5287 = vmatpush1.msra.mxu0 0.0
    %5288 = vmatprep.subr.mxu0 0.0
    %5289 = vmatpush1.msra.mxu0 0.0
    %5290 = vmatprep.subr.mxu0 0.0
    %5291 = vmatpush1.msra.mxu0 0.0
    %5292 = vmatprep.subr.mxu0 0.0
    %5293 = vmatpush1.msra.mxu0 0.0
    %5294 = vmatprep.subr.mxu0 0.0
    %5295 = vmatpush1.msra.mxu0 0.0
    %5296 = vmatprep.subr.mxu0 0.0
    %5297 = vmatpush1.msra.mxu0 0.0
    %5298 = vmatprep.subr.mxu0 0.0
    %5299 = vmatpush1.msra.mxu0 0.0
    %5300 = vmatprep.subr.mxu0 0.0
    %5301 = vmatpush1.msra.mxu0 0.0
    %5302 = vmatprep.subr.mxu0 0.0
    %5303 = vmatpush1.msra.mxu0 0.0
    %5304 = vmatprep.subr.mxu0 0.0
    %5305 = vmatpush1.msra.mxu0 0.0
    %5306 = vmatprep.subr.mxu0 0.0
    %5307 = vmatpush1.msra.mxu0 0.0
    %5308 = vmatprep.subr.mxu0 0.0
    %5309 = vmatpush1.msra.mxu0 0.0
    %5310 = vmatprep.subr.mxu0 0.0
    %5311 = vmatpush1.msra.mxu0 0.0
    %5312 = vmatprep.subr.mxu0 0.0
    %5313 = vmatpush1.msra.mxu0 0.0
    %5314 = vmatprep.subr.mxu0 0.0
    %5315 = vmatpush1.msra.mxu0 0.0
    %5316 = vmatprep.subr.mxu0 0.0
    %5317 = vmatpush1.msra.mxu0 0.0
    %5318 = vmatprep.mubr.f32.mxu0 0.0
    %v5319 = vand.u32 %v4765, 4294901760
    %5320 = vmatmul.mubr.f32.gmra.mrb[0].mxu0 %v5319
    %v5321 = vpop.f32.mrb[0].mxu0
    %v5322 = vadd.f32 %v5202, %v5321
    %v5323 = vpop.f32.mrb[0].mxu0
    %v5324 = vadd.f32 %v5204, %v5323
    %5325 = vdwg.mxu0
    %v5326 = vand.u32 %v650, 4294901760
    %5327 = vmatprep.subr.mxu0 %v5326
    %v5328 = vand.u32 %v649, 4294901760
    %5329 = vmatpush1.msra.mxu0 %v5328
    %v5330 = vand.u32 %v652, 4294901760
    %5331 = vmatprep.subr.mxu0 %v5330
    %v5332 = vand.u32 %v651, 4294901760
    %5333 = vmatpush1.msra.mxu0 %v5332
    %v5334 = vand.u32 %v654, 4294901760
    %5335 = vmatprep.subr.mxu0 %v5334
    %v5336 = vand.u32 %v653, 4294901760
    %5337 = vmatpush1.msra.mxu0 %v5336
    %v5338 = vand.u32 %v656, 4294901760
    %5339 = vmatprep.subr.mxu0 %v5338
    %v5340 = vand.u32 %v655, 4294901760
    %5341 = vmatpush1.msra.mxu0 %v5340
    %v5342 = vand.u32 %v658, 4294901760
    %5343 = vmatprep.subr.mxu0 %v5342
    %v5344 = vand.u32 %v657, 4294901760
    %5345 = vmatpush1.msra.mxu0 %v5344
    %v5346 = vand.u32 %v660, 4294901760
    %5347 = vmatprep.subr.mxu0 %v5346
    %v5348 = vand.u32 %v659, 4294901760
    %5349 = vmatpush1.msra.mxu0 %v5348
    %v5350 = vand.u32 %v662, 4294901760
    %5351 = vmatprep.subr.mxu0 %v5350
    %v5352 = vand.u32 %v661, 4294901760
    %5353 = vmatpush1.msra.mxu0 %v5352
    %v5354 = vand.u32 %v664, 4294901760
    %5355 = vmatprep.subr.mxu0 %v5354
    %v5356 = vand.u32 %v663, 4294901760
    %5357 = vmatpush1.msra.mxu0 %v5356
    %5358 = vmatprep.subr.mxu0 0.0
    %5359 = vmatpush1.msra.mxu0 0.0
    %5360 = vmatprep.subr.mxu0 0.0
    %5361 = vmatpush1.msra.mxu0 0.0
    %5362 = vmatprep.subr.mxu0 0.0
    %5363 = vmatpush1.msra.mxu0 0.0
    %5364 = vmatprep.subr.mxu0 0.0
    %5365 = vmatpush1.msra.mxu0 0.0
    %5366 = vmatprep.subr.mxu0 0.0
    %5367 = vmatpush1.msra.mxu0 0.0
    %5368 = vmatprep.subr.mxu0 0.0
    %5369 = vmatpush1.msra.mxu0 0.0
    %5370 = vmatprep.subr.mxu0 0.0
    %5371 = vmatpush1.msra.mxu0 0.0
    %5372 = vmatprep.subr.mxu0 0.0
    %5373 = vmatpush1.msra.mxu0 0.0
    %5374 = vmatprep.subr.mxu0 0.0
    %5375 = vmatpush1.msra.mxu0 0.0
    %5376 = vmatprep.subr.mxu0 0.0
    %5377 = vmatpush1.msra.mxu0 0.0
    %5378 = vmatprep.subr.mxu0 0.0
    %5379 = vmatpush1.msra.mxu0 0.0
    %5380 = vmatprep.subr.mxu0 0.0
    %5381 = vmatpush1.msra.mxu0 0.0
    %5382 = vmatprep.subr.mxu0 0.0
    %5383 = vmatpush1.msra.mxu0 0.0
    %5384 = vmatprep.subr.mxu0 0.0
    %5385 = vmatpush1.msra.mxu0 0.0
    %5386 = vmatprep.subr.mxu0 0.0
    %5387 = vmatpush1.msra.mxu0 0.0
    %5388 = vmatprep.subr.mxu0 0.0
    %5389 = vmatpush1.msra.mxu0 0.0
    %5390 = vmatprep.subr.mxu0 0.0
    %5391 = vmatpush1.msra.mxu0 0.0
    %5392 = vmatprep.subr.mxu0 0.0
    %5393 = vmatpush1.msra.mxu0 0.0
    %5394 = vmatprep.subr.mxu0 0.0
    %5395 = vmatpush1.msra.mxu0 0.0
    %5396 = vmatprep.subr.mxu0 0.0
    %5397 = vmatpush1.msra.mxu0 0.0
    %5398 = vmatprep.subr.mxu0 0.0
    %5399 = vmatpush1.msra.mxu0 0.0
    %5400 = vmatprep.subr.mxu0 0.0
    %5401 = vmatpush1.msra.mxu0 0.0
    %5402 = vmatprep.subr.mxu0 0.0
    %5403 = vmatpush1.msra.mxu0 0.0
    %5404 = vmatprep.subr.mxu0 0.0
    %5405 = vmatpush1.msra.mxu0 0.0
    %5406 = vmatprep.mubr.f32.mxu0 0.0
    %v5407 = vand.u32 %v4765, 4294901760
    %5408 = vmatmul.mubr.f32.gmra.mrb[0].mxu0 %v5407
    %v5409 = vpop.f32.mrb[0].mxu0
    %v5410 = vadd.f32 %v5322, %v5409
    %v5411 = vpop.f32.mrb[0].mxu0
    %v5412 = vadd.f32 %v5324, %v5411
    %5413 = vdwg.mxu0
    %v5416 = vrot.slane %v5410, 2
    %v5417 = vrot.slane %v5412, 2
    %v5420 = vadd.f32 %v616, %v5416
    %v5421 = vadd.f32 %v618, %v5417
    %v5422 = vxor.u32 %v5420, 2147483648
    %v5423 = vmul.f32 %v5422, 1.442695
    %v5424 = vpow.pop %v5423
    %v5425 = vadd.f32 %v5424, 1.0
    %v5426 = vrcp.pop %v5425
    %v5427 = vmul.f32 1.0, %v5426
    %5429 = vrot.lane.b32.xlu0 %v5421, 64
    %v5430 = vpop.permute.xlu0 %5429
    %v5432 = vmul.f32 %v5427, %v5430
    %v5433 = vadd.f32 %v5421, %v5432
    %v5434 = vtanh.pop %v5433
    %v5435 = vsub.f32 1.0, %v5427
    %5437 = vrot.lane.b32.xlu0 %v5434, 64
    %v5438 = vpop.permute.xlu0 %5437
    %v5440 = vmul.f32 %v5435, %v5438
    %v5441 = vrot.slane %v4760, 6
    %v5443 = vmul.f32 %v5427, %v5441
    %v5444 = vadd.f32 %v5440, %v5443
    %v5445 = vld [vmem:[#allocation5] sm:$0xff]
    %v5446 = vld [vmem:[#allocation5 + $0x8] sm:$0xff]
    %v5447 = vld [vmem:[#allocation5 + $0x10] sm:$0xff]
    %v5448 = vld [vmem:[#allocation5 + $0x18] sm:$0xff]
    %v5449 = vld [vmem:[#allocation5 + $0x20] sm:$0xff]
    %v5450 = vld [vmem:[#allocation5 + $0x28] sm:$0xff]
    %v5451 = vld [vmem:[#allocation5 + $0x30] sm:$0xff]
    %v5452 = vld [vmem:[#allocation5 + $0x38] sm:$0xff]
    %v5453 = vld [vmem:[%s5] sm:$0x1]
    %v5455 = vlaneseq
    %v5456 = vshrl.u32 %v5455, 7
    %v5457 = vsub.s32 0, %v5456
    %v5458 = vrot.slane %v5453, %v5457
    %v5461 = vrot.slane %v5444, 6
    %5462 = vrot.lane.b32.xlu0 %v5461, 64
    %v5463 = vpop.permute.xlu0 %5462
    %v5464 = vsel %vm665, %v5463, 0
    %5466 = vmatprep.subr.mxu0 0.0
    %v5467 = vand.u32 %v5445, 4294901760
    %5468 = vmatpush1.msra.mxu0 %v5467
    %5469 = vmatprep.subr.mxu0 0.0
    %v5470 = vand.u32 %v5446, 4294901760
    %5471 = vmatpush1.msra.mxu0 %v5470
    %5472 = vmatprep.subr.mxu0 0.0
    %v5473 = vand.u32 %v5447, 4294901760
    %5474 = vmatpush1.msra.mxu0 %v5473
    %5475 = vmatprep.subr.mxu0 0.0
    %v5476 = vand.u32 %v5448, 4294901760
    %5477 = vmatpush1.msra.mxu0 %v5476
    %5478 = vmatprep.subr.mxu0 0.0
    %v5479 = vand.u32 %v5449, 4294901760
    %5480 = vmatpush1.msra.mxu0 %v5479
    %5481 = vmatprep.subr.mxu0 0.0
    %v5482 = vand.u32 %v5450, 4294901760
    %5483 = vmatpush1.msra.mxu0 %v5482
    %5484 = vmatprep.subr.mxu0 0.0
    %v5485 = vand.u32 %v5451, 4294901760
    %5486 = vmatpush1.msra.mxu0 %v5485
    %5487 = vmatprep.subr.mxu0 0.0
    %v5488 = vand.u32 %v5452, 4294901760
    %5489 = vmatpush1.msra.mxu0 %v5488
    %5490 = vmatprep.subr.mxu0 0.0
    %5491 = vmatpush1.msra.mxu0 0.0
    %5492 = vmatprep.subr.mxu0 0.0
    %5493 = vmatpush1.msra.mxu0 0.0
    %5494 = vmatprep.subr.mxu0 0.0
    %5495 = vmatpush1.msra.mxu0 0.0
    %5496 = vmatprep.subr.mxu0 0.0
    %5497 = vmatpush1.msra.mxu0 0.0
    %5498 = vmatprep.subr.mxu0 0.0
    %5499 = vmatpush1.msra.mxu0 0.0
    %5500 = vmatprep.subr.mxu0 0.0
    %5501 = vmatpush1.msra.mxu0 0.0
    %5502 = vmatprep.subr.mxu0 0.0
    %5503 = vmatpush1.msra.mxu0 0.0
    %5504 = vmatprep.subr.mxu0 0.0
    %5505 = vmatpush1.msra.mxu0 0.0
    %5506 = vmatprep.subr.mxu0 0.0
    %5507 = vmatpush1.msra.mxu0 0.0
    %5508 = vmatprep.subr.mxu0 0.0
    %5509 = vmatpush1.msra.mxu0 0.0
    %5510 = vmatprep.subr.mxu0 0.0
    %5511 = vmatpush1.msra.mxu0 0.0
    %5512 = vmatprep.subr.mxu0 0.0
    %5513 = vmatpush1.msra.mxu0 0.0
    %5514 = vmatprep.subr.mxu0 0.0
    %5515 = vmatpush1.msra.mxu0 0.0
    %5516 = vmatprep.subr.mxu0 0.0
    %5517 = vmatpush1.msra.mxu0 0.0
    %5518 = vmatprep.subr.mxu0 0.0
    %5519 = vmatpush1.msra.mxu0 0.0
    %5520 = vmatprep.subr.mxu0 0.0
    %5521 = vmatpush1.msra.mxu0 0.0
    %5522 = vmatprep.subr.mxu0 0.0
    %5523 = vmatpush1.msra.mxu0 0.0
    %5524 = vmatprep.subr.mxu0 0.0
    %5525 = vmatpush1.msra.mxu0 0.0
    %5526 = vmatprep.subr.mxu0 0.0
    %5527 = vmatpush1.msra.mxu0 0.0
    %5528 = vmatprep.subr.mxu0 0.0
    %5529 = vmatpush1.msra.mxu0 0.0
    %5530 = vmatprep.subr.mxu0 0.0
    %5531 = vmatpush1.msra.mxu0 0.0
    %5532 = vmatprep.subr.mxu0 0.0
    %5533 = vmatpush1.msra.mxu0 0.0
    %5534 = vmatprep.subr.mxu0 0.0
    %5535 = vmatpush1.msra.mxu0 0.0
    %5536 = vmatprep.subr.mxu0 0.0
    %5537 = vmatpush1.msra.mxu0 0.0
    %5538 = vmatprep.mubr.f32.mxu0 0.0
    %v5539 = vand.u32 %v5464, 4294901760
    %v5540 = vsub.f32 %v5464, %v5539
    %v5541 = vand.u32 %v5540, 4294901760
    %v5542 = vsub.f32 %v5540, %v5541
    %v5543 = vand.u32 %v5542, 4294901760
    %5544 = vmatmul.mubr.f32.gmra.mrb[0].mxu0 %v5543
    %v5545 = vpop.f32.mrb[0].mxu0
    %v5546 = vadd.f32 %v5458, %v5545
    %v5547 = vpop.f32.mrb[0].mxu0
    %5548 = vdwg.mxu0
    %5549 = vmatprep.subr.mxu0 0.0
    %v5550 = vand.u32 %v5445, 4294901760
    %v5551 = vsub.f32 %v5445, %v5550
    %v5552 = vand.u32 %v5551, 4294901760
    %v5553 = vsub.f32 %v5551, %v5552
    %v5554 = vand.u32 %v5553, 4294901760
    %5555 = vmatpush1.msra.mxu0 %v5554
    %5556 = vmatprep.subr.mxu0 0.0
    %v5557 = vand.u32 %v5446, 4294901760
    %v5558 = vsub.f32 %v5446, %v5557
    %v5559 = vand.u32 %v5558, 4294901760
    %v5560 = vsub.f32 %v5558, %v5559
    %v5561 = vand.u32 %v5560, 4294901760
    %5562 = vmatpush1.msra.mxu0 %v5561
    %5563 = vmatprep.subr.mxu0 0.0
    %v5564 = vand.u32 %v5447, 4294901760
    %v5565 = vsub.f32 %v5447, %v5564
    %v5566 = vand.u32 %v5565, 4294901760
    %v5567 = vsub.f32 %v5565, %v5566
    %v5568 = vand.u32 %v5567, 4294901760
    %5569 = vmatpush1.msra.mxu0 %v5568
    %5570 = vmatprep.subr.mxu0 0.0
    %v5571 = vand.u32 %v5448, 4294901760
    %v5572 = vsub.f32 %v5448, %v5571
    %v5573 = vand.u32 %v5572, 4294901760
    %v5574 = vsub.f32 %v5572, %v5573
    %v5575 = vand.u32 %v5574, 4294901760
    %5576 = vmatpush1.msra.mxu0 %v5575
    %5577 = vmatprep.subr.mxu0 0.0
    %v5578 = vand.u32 %v5449, 4294901760
    %v5579 = vsub.f32 %v5449, %v5578
    %v5580 = vand.u32 %v5579, 4294901760
    %v5581 = vsub.f32 %v5579, %v5580
    %v5582 = vand.u32 %v5581, 4294901760
    %5583 = vmatpush1.msra.mxu0 %v5582
    %5584 = vmatprep.subr.mxu0 0.0
    %v5585 = vand.u32 %v5450, 4294901760
    %v5586 = vsub.f32 %v5450, %v5585
    %v5587 = vand.u32 %v5586, 4294901760
    %v5588 = vsub.f32 %v5586, %v5587
    %v5589 = vand.u32 %v5588, 4294901760
    %5590 = vmatpush1.msra.mxu0 %v5589
    %5591 = vmatprep.subr.mxu0 0.0
    %v5592 = vand.u32 %v5451, 4294901760
    %v5593 = vsub.f32 %v5451, %v5592
    %v5594 = vand.u32 %v5593, 4294901760
    %v5595 = vsub.f32 %v5593, %v5594
    %v5596 = vand.u32 %v5595, 4294901760
    %5597 = vmatpush1.msra.mxu0 %v5596
    %5598 = vmatprep.subr.mxu0 0.0
    %v5599 = vand.u32 %v5452, 4294901760
    %v5600 = vsub.f32 %v5452, %v5599
    %v5601 = vand.u32 %v5600, 4294901760
    %v5602 = vsub.f32 %v5600, %v5601
    %v5603 = vand.u32 %v5602, 4294901760
    %5604 = vmatpush1.msra.mxu0 %v5603
    %5605 = vmatprep.subr.mxu0 0.0
    %5606 = vmatpush1.msra.mxu0 0.0
    %5607 = vmatprep.subr.mxu0 0.0
    %5608 = vmatpush1.msra.mxu0 0.0
    %5609 = vmatprep.subr.mxu0 0.0
    %5610 = vmatpush1.msra.mxu0 0.0
    %5611 = vmatprep.subr.mxu0 0.0
    %5612 = vmatpush1.msra.mxu0 0.0
    %5613 = vmatprep.subr.mxu0 0.0
    %5614 = vmatpush1.msra.mxu0 0.0
    %5615 = vmatprep.subr.mxu0 0.0
    %5616 = vmatpush1.msra.mxu0 0.0
    %5617 = vmatprep.subr.mxu0 0.0
    %5618 = vmatpush1.msra.mxu0 0.0
    %5619 = vmatprep.subr.mxu0 0.0
    %5620 = vmatpush1.msra.mxu0 0.0
    %5621 = vmatprep.subr.mxu0 0.0
    %5622 = vmatpush1.msra.mxu0 0.0
    %5623 = vmatprep.subr.mxu0 0.0
    %5624 = vmatpush1.msra.mxu0 0.0
    %5625 = vmatprep.subr.mxu0 0.0
    %5626 = vmatpush1.msra.mxu0 0.0
    %5627 = vmatprep.subr.mxu0 0.0
    %5628 = vmatpush1.msra.mxu0 0.0
    %5629 = vmatprep.subr.mxu0 0.0
    %5630 = vmatpush1.msra.mxu0 0.0
    %5631 = vmatprep.subr.mxu0 0.0
    %5632 = vmatpush1.msra.mxu0 0.0
    %5633 = vmatprep.subr.mxu0 0.0
    %5634 = vmatpush1.msra.mxu0 0.0
    %5635 = vmatprep.subr.mxu0 0.0
    %5636 = vmatpush1.msra.mxu0 0.0
    %5637 = vmatprep.subr.mxu0 0.0
    %5638 = vmatpush1.msra.mxu0 0.0
    %5639 = vmatprep.subr.mxu0 0.0
    %5640 = vmatpush1.msra.mxu0 0.0
    %5641 = vmatprep.subr.mxu0 0.0
    %5642 = vmatpush1.msra.mxu0 0.0
    %5643 = vmatprep.subr.mxu0 0.0
    %5644 = vmatpush1.msra.mxu0 0.0
    %5645 = vmatprep.subr.mxu0 0.0
    %5646 = vmatpush1.msra.mxu0 0.0
    %5647 = vmatprep.subr.mxu0 0.0
    %5648 = vmatpush1.msra.mxu0 0.0
    %5649 = vmatprep.subr.mxu0 0.0
    %5650 = vmatpush1.msra.mxu0 0.0
    %5651 = vmatprep.subr.mxu0 0.0
    %5652 = vmatpush1.msra.mxu0 0.0
    %5653 = vmatprep.mubr.f32.mxu0 0.0
    %v5654 = vand.u32 %v5464, 4294901760
    %5655 = vmatmul.mubr.f32.gmra.mrb[0].mxu0 %v5654
    %v5656 = vpop.f32.mrb[0].mxu0
    %v5657 = vadd.f32 %v5546, %v5656
    %v5658 = vpop.f32.mrb[0].mxu0
    %5659 = vdwg.mxu0
    %5660 = vmatprep.subr.mxu0 0.0
    %v5661 = vand.u32 %v5445, 4294901760
    %v5662 = vsub.f32 %v5445, %v5661
    %5663 = vmatpush1.msra.mxu0 %v5662
    %5664 = vmatprep.subr.mxu0 0.0
    %v5665 = vand.u32 %v5446, 4294901760
    %v5666 = vsub.f32 %v5446, %v5665
    %5667 = vmatpush1.msra.mxu0 %v5666
    %5668 = vmatprep.subr.mxu0 0.0
    %v5669 = vand.u32 %v5447, 4294901760
    %v5670 = vsub.f32 %v5447, %v5669
    %5671 = vmatpush1.msra.mxu0 %v5670
    %5672 = vmatprep.subr.mxu0 0.0
    %v5673 = vand.u32 %v5448, 4294901760
    %v5674 = vsub.f32 %v5448, %v5673
    %5675 = vmatpush1.msra.mxu0 %v5674
    %5676 = vmatprep.subr.mxu0 0.0
    %v5677 = vand.u32 %v5449, 4294901760
    %v5678 = vsub.f32 %v5449, %v5677
    %5679 = vmatpush1.msra.mxu0 %v5678
    %5680 = vmatprep.subr.mxu0 0.0
    %v5681 = vand.u32 %v5450, 4294901760
    %v5682 = vsub.f32 %v5450, %v5681
    %5683 = vmatpush1.msra.mxu0 %v5682
    %5684 = vmatprep.subr.mxu0 0.0
    %v5685 = vand.u32 %v5451, 4294901760
    %v5686 = vsub.f32 %v5451, %v5685
    %5687 = vmatpush1.msra.mxu0 %v5686
    %5688 = vmatprep.subr.mxu0 0.0
    %v5689 = vand.u32 %v5452, 4294901760
    %v5690 = vsub.f32 %v5452, %v5689
    %5691 = vmatpush1.msra.mxu0 %v5690
    %5692 = vmatprep.subr.mxu0 0.0
    %5693 = vmatpush1.msra.mxu0 0.0
    %5694 = vmatprep.subr.mxu0 0.0
    %5695 = vmatpush1.msra.mxu0 0.0
    %5696 = vmatprep.subr.mxu0 0.0
    %5697 = vmatpush1.msra.mxu0 0.0
    %5698 = vmatprep.subr.mxu0 0.0
    %5699 = vmatpush1.msra.mxu0 0.0
    %5700 = vmatprep.subr.mxu0 0.0
    %5701 = vmatpush1.msra.mxu0 0.0
    %5702 = vmatprep.subr.mxu0 0.0
    %5703 = vmatpush1.msra.mxu0 0.0
    %5704 = vmatprep.subr.mxu0 0.0
    %5705 = vmatpush1.msra.mxu0 0.0
    %5706 = vmatprep.subr.mxu0 0.0
    %5707 = vmatpush1.msra.mxu0 0.0
    %5708 = vmatprep.subr.mxu0 0.0
    %5709 = vmatpush1.msra.mxu0 0.0
    %5710 = vmatprep.subr.mxu0 0.0
    %5711 = vmatpush1.msra.mxu0 0.0
    %5712 = vmatprep.subr.mxu0 0.0
    %5713 = vmatpush1.msra.mxu0 0.0
    %5714 = vmatprep.subr.mxu0 0.0
    %5715 = vmatpush1.msra.mxu0 0.0
    %5716 = vmatprep.subr.mxu0 0.0
    %5717 = vmatpush1.msra.mxu0 0.0
    %5718 = vmatprep.subr.mxu0 0.0
    %5719 = vmatpush1.msra.mxu0 0.0
    %5720 = vmatprep.subr.mxu0 0.0
    %5721 = vmatpush1.msra.mxu0 0.0
    %5722 = vmatprep.subr.mxu0 0.0
    %5723 = vmatpush1.msra.mxu0 0.0
    %5724 = vmatprep.subr.mxu0 0.0
    %5725 = vmatpush1.msra.mxu0 0.0
    %5726 = vmatprep.subr.mxu0 0.0
    %5727 = vmatpush1.msra.mxu0 0.0
    %5728 = vmatprep.subr.mxu0 0.0
    %5729 = vmatpush1.msra.mxu0 0.0
    %5730 = vmatprep.subr.mxu0 0.0
    %5731 = vmatpush1.msra.mxu0 0.0
    %5732 = vmatprep.subr.mxu0 0.0
    %5733 = vmatpush1.msra.mxu0 0.0
    %5734 = vmatprep.subr.mxu0 0.0
    %5735 = vmatpush1.msra.mxu0 0.0
    %5736 = vmatprep.subr.mxu0 0.0
    %5737 = vmatpush1.msra.mxu0 0.0
    %5738 = vmatprep.subr.mxu0 0.0
    %5739 = vmatpush1.msra.mxu0 0.0
    %5740 = vmatprep.mubr.f32.mxu0 0.0
    %v5741 = vand.u32 %v5464, 4294901760
    %v5742 = vsub.f32 %v5464, %v5741
    %5743 = vmatmul.mubr.f32.gmra.mrb[0].mxu0 %v5742
    %v5744 = vpop.f32.mrb[0].mxu0
    %v5745 = vadd.f32 %v5657, %v5744
    %v5746 = vpop.f32.mrb[0].mxu0
    %5747 = vdwg.mxu0
    %5748 = vmatprep.subr.mxu0 0.0
    %v5749 = vand.u32 %v5445, 4294901760
    %5750 = vmatpush1.msra.mxu0 %v5749
    %5751 = vmatprep.subr.mxu0 0.0
    %v5752 = vand.u32 %v5446, 4294901760
    %5753 = vmatpush1.msra.mxu0 %v5752
    %5754 = vmatprep.subr.mxu0 0.0
    %v5755 = vand.u32 %v5447, 4294901760
    %5756 = vmatpush1.msra.mxu0 %v5755
    %5757 = vmatprep.subr.mxu0 0.0
    %v5758 = vand.u32 %v5448, 4294901760
    %5759 = vmatpush1.msra.mxu0 %v5758
    %5760 = vmatprep.subr.mxu0 0.0
    %v5761 = vand.u32 %v5449, 4294901760
    %5762 = vmatpush1.msra.mxu0 %v5761
    %5763 = vmatprep.subr.mxu0 0.0
    %v5764 = vand.u32 %v5450, 4294901760
    %5765 = vmatpush1.msra.mxu0 %v5764
    %5766 = vmatprep.subr.mxu0 0.0
    %v5767 = vand.u32 %v5451, 4294901760
    %5768 = vmatpush1.msra.mxu0 %v5767
    %5769 = vmatprep.subr.mxu0 0.0
    %v5770 = vand.u32 %v5452, 4294901760
    %5771 = vmatpush1.msra.mxu0 %v5770
    %5772 = vmatprep.subr.mxu0 0.0
    %5773 = vmatpush1.msra.mxu0 0.0
    %5774 = vmatprep.subr.mxu0 0.0
    %5775 = vmatpush1.msra.mxu0 0.0
    %5776 = vmatprep.subr.mxu0 0.0
    %5777 = vmatpush1.msra.mxu0 0.0
    %5778 = vmatprep.subr.mxu0 0.0
    %5779 = vmatpush1.msra.mxu0 0.0
    %5780 = vmatprep.subr.mxu0 0.0
    %5781 = vmatpush1.msra.mxu0 0.0
    %5782 = vmatprep.subr.mxu0 0.0
    %5783 = vmatpush1.msra.mxu0 0.0
    %5784 = vmatprep.subr.mxu0 0.0
    %5785 = vmatpush1.msra.mxu0 0.0
    %5786 = vmatprep.subr.mxu0 0.0
    %5787 = vmatpush1.msra.mxu0 0.0
    %5788 = vmatprep.subr.mxu0 0.0
    %5789 = vmatpush1.msra.mxu0 0.0
    %5790 = vmatprep.subr.mxu0 0.0
    %5791 = vmatpush1.msra.mxu0 0.0
    %5792 = vmatprep.subr.mxu0 0.0
    %5793 = vmatpush1.msra.mxu0 0.0
    %5794 = vmatprep.subr.mxu0 0.0
    %5795 = vmatpush1.msra.mxu0 0.0
    %5796 = vmatprep.subr.mxu0 0.0
    %5797 = vmatpush1.msra.mxu0 0.0
    %5798 = vmatprep.subr.mxu0 0.0
    %5799 = vmatpush1.msra.mxu0 0.0
    %5800 = vmatprep.subr.mxu0 0.0
    %5801 = vmatpush1.msra.mxu0 0.0
    %5802 = vmatprep.subr.mxu0 0.0
    %5803 = vmatpush1.msra.mxu0 0.0
    %5804 = vmatprep.subr.mxu0 0.0
    %5805 = vmatpush1.msra.mxu0 0.0
    %5806 = vmatprep.subr.mxu0 0.0
    %5807 = vmatpush1.msra.mxu0 0.0
    %5808 = vmatprep.subr.mxu0 0.0
    %5809 = vmatpush1.msra.mxu0 0.0
    %5810 = vmatprep.subr.mxu0 0.0
    %5811 = vmatpush1.msra.mxu0 0.0
    %5812 = vmatprep.subr.mxu0 0.0
    %5813 = vmatpush1.msra.mxu0 0.0
    %5814 = vmatprep.subr.mxu0 0.0
    %5815 = vmatpush1.msra.mxu0 0.0
    %5816 = vmatprep.subr.mxu0 0.0
    %5817 = vmatpush1.msra.mxu0 0.0
    %5818 = vmatprep.subr.mxu0 0.0
    %5819 = vmatpush1.msra.mxu0 0.0
    %5820 = vmatprep.mubr.f32.mxu0 0.0
    %v5821 = vand.u32 %v5464, 4294901760
    %v5822 = vsub.f32 %v5464, %v5821
    %v5823 = vand.u32 %v5822, 4294901760
    %5824 = vmatmul.mubr.f32.gmra.mrb[0].mxu0 %v5823
    %v5825 = vpop.f32.mrb[0].mxu0
    %v5826 = vadd.f32 %v5745, %v5825
    %v5827 = vpop.f32.mrb[0].mxu0
    %5828 = vdwg.mxu0
    %5829 = vmatprep.subr.mxu0 0.0
    %v5830 = vand.u32 %v5445, 4294901760
    %v5831 = vsub.f32 %v5445, %v5830
    %v5832 = vand.u32 %v5831, 4294901760
    %5833 = vmatpush1.msra.mxu0 %v5832
    %5834 = vmatprep.subr.mxu0 0.0
    %v5835 = vand.u32 %v5446, 4294901760
    %v5836 = vsub.f32 %v5446, %v5835
    %v5837 = vand.u32 %v5836, 4294901760
    %5838 = vmatpush1.msra.mxu0 %v5837
    %5839 = vmatprep.subr.mxu0 0.0
    %v5840 = vand.u32 %v5447, 4294901760
    %v5841 = vsub.f32 %v5447, %v5840
    %v5842 = vand.u32 %v5841, 4294901760
    %5843 = vmatpush1.msra.mxu0 %v5842
    %5844 = vmatprep.subr.mxu0 0.0
    %v5845 = vand.u32 %v5448, 4294901760
    %v5846 = vsub.f32 %v5448, %v5845
    %v5847 = vand.u32 %v5846, 4294901760
    %5848 = vmatpush1.msra.mxu0 %v5847
    %5849 = vmatprep.subr.mxu0 0.0
    %v5850 = vand.u32 %v5449, 4294901760
    %v5851 = vsub.f32 %v5449, %v5850
    %v5852 = vand.u32 %v5851, 4294901760
    %5853 = vmatpush1.msra.mxu0 %v5852
    %5854 = vmatprep.subr.mxu0 0.0
    %v5855 = vand.u32 %v5450, 4294901760
    %v5856 = vsub.f32 %v5450, %v5855
    %v5857 = vand.u32 %v5856, 4294901760
    %5858 = vmatpush1.msra.mxu0 %v5857
    %5859 = vmatprep.subr.mxu0 0.0
    %v5860 = vand.u32 %v5451, 4294901760
    %v5861 = vsub.f32 %v5451, %v5860
    %v5862 = vand.u32 %v5861, 4294901760
    %5863 = vmatpush1.msra.mxu0 %v5862
    %5864 = vmatprep.subr.mxu0 0.0
    %v5865 = vand.u32 %v5452, 4294901760
    %v5866 = vsub.f32 %v5452, %v5865
    %v5867 = vand.u32 %v5866, 4294901760
    %5868 = vmatpush1.msra.mxu0 %v5867
    %5869 = vmatprep.subr.mxu0 0.0
    %5870 = vmatpush1.msra.mxu0 0.0
    %5871 = vmatprep.subr.mxu0 0.0
    %5872 = vmatpush1.msra.mxu0 0.0
    %5873 = vmatprep.subr.mxu0 0.0
    %5874 = vmatpush1.msra.mxu0 0.0
    %5875 = vmatprep.subr.mxu0 0.0
    %5876 = vmatpush1.msra.mxu0 0.0
    %5877 = vmatprep.subr.mxu0 0.0
    %5878 = vmatpush1.msra.mxu0 0.0
    %5879 = vmatprep.subr.mxu0 0.0
    %5880 = vmatpush1.msra.mxu0 0.0
    %5881 = vmatprep.subr.mxu0 0.0
    %5882 = vmatpush1.msra.mxu0 0.0
    %5883 = vmatprep.subr.mxu0 0.0
    %5884 = vmatpush1.msra.mxu0 0.0
    %5885 = vmatprep.subr.mxu0 0.0
    %5886 = vmatpush1.msra.mxu0 0.0
    %5887 = vmatprep.subr.mxu0 0.0
    %5888 = vmatpush1.msra.mxu0 0.0
    %5889 = vmatprep.subr.mxu0 0.0
    %5890 = vmatpush1.msra.mxu0 0.0
    %5891 = vmatprep.subr.mxu0 0.0
    %5892 = vmatpush1.msra.mxu0 0.0
    %5893 = vmatprep.subr.mxu0 0.0
    %5894 = vmatpush1.msra.mxu0 0.0
    %5895 = vmatprep.subr.mxu0 0.0
    %5896 = vmatpush1.msra.mxu0 0.0
    %5897 = vmatprep.subr.mxu0 0.0
    %5898 = vmatpush1.msra.mxu0 0.0
    %5899 = vmatprep.subr.mxu0 0.0
    %5900 = vmatpush1.msra.mxu0 0.0
    %5901 = vmatprep.subr.mxu0 0.0
    %5902 = vmatpush1.msra.mxu0 0.0
    %5903 = vmatprep.subr.mxu0 0.0
    %5904 = vmatpush1.msra.mxu0 0.0
    %5905 = vmatprep.subr.mxu0 0.0
    %5906 = vmatpush1.msra.mxu0 0.0
    %5907 = vmatprep.subr.mxu0 0.0
    %5908 = vmatpush1.msra.mxu0 0.0
    %5909 = vmatprep.subr.mxu0 0.0
    %5910 = vmatpush1.msra.mxu0 0.0
    %5911 = vmatprep.subr.mxu0 0.0
    %5912 = vmatpush1.msra.mxu0 0.0
    %5913 = vmatprep.subr.mxu0 0.0
    %5914 = vmatpush1.msra.mxu0 0.0
    %5915 = vmatprep.subr.mxu0 0.0
    %5916 = vmatpush1.msra.mxu0 0.0
    %5917 = vmatprep.mubr.f32.mxu0 0.0
    %v5918 = vand.u32 %v5464, 4294901760
    %5919 = vmatmul.mubr.f32.gmra.mrb[0].mxu0 %v5918
    %v5920 = vpop.f32.mrb[0].mxu0
    %v5921 = vadd.f32 %v5826, %v5920
    %v5922 = vpop.f32.mrb[0].mxu0
    %5923 = vdwg.mxu0
    %5924 = vmatprep.subr.mxu0 0.0
    %v5925 = vand.u32 %v5445, 4294901760
    %5926 = vmatpush1.msra.mxu0 %v5925
    %5927 = vmatprep.subr.mxu0 0.0
    %v5928 = vand.u32 %v5446, 4294901760
    %5929 = vmatpush1.msra.mxu0 %v5928
    %5930 = vmatprep.subr.mxu0 0.0
    %v5931 = vand.u32 %v5447, 4294901760
    %5932 = vmatpush1.msra.mxu0 %v5931
    %5933 = vmatprep.subr.mxu0 0.0
    %v5934 = vand.u32 %v5448, 4294901760
    %5935 = vmatpush1.msra.mxu0 %v5934
    %5936 = vmatprep.subr.mxu0 0.0
    %v5937 = vand.u32 %v5449, 4294901760
    %5938 = vmatpush1.msra.mxu0 %v5937
    %5939 = vmatprep.subr.mxu0 0.0
    %v5940 = vand.u32 %v5450, 4294901760
    %5941 = vmatpush1.msra.mxu0 %v5940
    %5942 = vmatprep.subr.mxu0 0.0
    %v5943 = vand.u32 %v5451, 4294901760
    %5944 = vmatpush1.msra.mxu0 %v5943
    %5945 = vmatprep.subr.mxu0 0.0
    %v5946 = vand.u32 %v5452, 4294901760
    %5947 = vmatpush1.msra.mxu0 %v5946
    %5948 = vmatprep.subr.mxu0 0.0
    %5949 = vmatpush1.msra.mxu0 0.0
    %5950 = vmatprep.subr.mxu0 0.0
    %5951 = vmatpush1.msra.mxu0 0.0
    %5952 = vmatprep.subr.mxu0 0.0
    %5953 = vmatpush1.msra.mxu0 0.0
    %5954 = vmatprep.subr.mxu0 0.0
    %5955 = vmatpush1.msra.mxu0 0.0
    %5956 = vmatprep.subr.mxu0 0.0
    %5957 = vmatpush1.msra.mxu0 0.0
    %5958 = vmatprep.subr.mxu0 0.0
    %5959 = vmatpush1.msra.mxu0 0.0
    %5960 = vmatprep.subr.mxu0 0.0
    %5961 = vmatpush1.msra.mxu0 0.0
    %5962 = vmatprep.subr.mxu0 0.0
    %5963 = vmatpush1.msra.mxu0 0.0
    %5964 = vmatprep.subr.mxu0 0.0
    %5965 = vmatpush1.msra.mxu0 0.0
    %5966 = vmatprep.subr.mxu0 0.0
    %5967 = vmatpush1.msra.mxu0 0.0
    %5968 = vmatprep.subr.mxu0 0.0
    %5969 = vmatpush1.msra.mxu0 0.0
    %5970 = vmatprep.subr.mxu0 0.0
    %5971 = vmatpush1.msra.mxu0 0.0
    %5972 = vmatprep.subr.mxu0 0.0
    %5973 = vmatpush1.msra.mxu0 0.0
    %5974 = vmatprep.subr.mxu0 0.0
    %5975 = vmatpush1.msra.mxu0 0.0
    %5976 = vmatprep.subr.mxu0 0.0
    %5977 = vmatpush1.msra.mxu0 0.0
    %5978 = vmatprep.subr.mxu0 0.0
    %5979 = vmatpush1.msra.mxu0 0.0
    %5980 = vmatprep.subr.mxu0 0.0
    %5981 = vmatpush1.msra.mxu0 0.0
    %5982 = vmatprep.subr.mxu0 0.0
    %5983 = vmatpush1.msra.mxu0 0.0
    %5984 = vmatprep.subr.mxu0 0.0
    %5985 = vmatpush1.msra.mxu0 0.0
    %5986 = vmatprep.subr.mxu0 0.0
    %5987 = vmatpush1.msra.mxu0 0.0
    %5988 = vmatprep.subr.mxu0 0.0
    %5989 = vmatpush1.msra.mxu0 0.0
    %5990 = vmatprep.subr.mxu0 0.0
    %5991 = vmatpush1.msra.mxu0 0.0
    %5992 = vmatprep.subr.mxu0 0.0
    %5993 = vmatpush1.msra.mxu0 0.0
    %5994 = vmatprep.subr.mxu0 0.0
    %5995 = vmatpush1.msra.mxu0 0.0
    %5996 = vmatprep.mubr.f32.mxu0 0.0
    %v5997 = vand.u32 %v5464, 4294901760
    %5998 = vmatmul.mubr.f32.gmra.mrb[0].mxu0 %v5997
    %v5999 = vpop.f32.mrb[0].mxu0
    %v6000 = vadd.f32 %v5921, %v5999
    %v6001 = vpop.f32.mrb[0].mxu0
    %6002 = vdwg.mxu0
    %v6003 = vxor.u32 %v6000, 2147483648
    %v6004 = vmul.f32 %v6003, 1.442695
    %v6005 = vpow.pop %v6004
    %v6006 = vadd.f32 %v6005, 1.0
    %v6007 = vrcp.pop %v6006
    %v6008 = vmul.f32 1.0, %v6007
    %6010 = vrot.lane.b32.xlu0 %v6000, 32
    %v6011 = vpop.permute.xlu0 %6010
    %v6013 = vmul.f32 %v6008, %v6011
    %6015 = vrot.lane.b32.xlu0 %v6013, 64
    %v6016 = vpop.permute.xlu0 %6015
    %v6018 = vadd.f32 %v6000, %v6016
    %v6019 = vtanh.pop %v6018
    %v6020 = vsub.f32 1.0, %v6008
    %6022 = vrot.lane.b32.xlu0 %v6019, 96
    %v6023 = vpop.permute.xlu0 %6022
    %v6025 = vmul.f32 %v6020, %v6023
    %v6027 = vmul.f32 %v6008, %v5463
    %v6028 = vadd.f32 %v6025, %v6027
    %6030 = vrot.lane.b32.xlu0 %v6028, 96
    %v6031 = vpop.permute.xlu0 %6030
    %vm6033 = vcmask 254976
    %v6034 = vsel %vm6033, %v6031, 0.0
    %6035 = vadd.xlane.f32.xlu0 %v6034
    %v6036 = vpop.xlane.xlu0 %6035
    %v6037 = vrcp.pop 32.0
    %v6038 = vmul.f32 %v6036, %v6037
    %v6039 = vsub.f32 %v6028, %v6038
    %v6040 = vmul.f32 %v6039, %v6039
    %6042 = vrot.lane.b32.xlu0 %v6040, 96
    %v6043 = vpop.permute.xlu0 %6042
    %v6045 = vsel %vm6033, %v6043, 0.0
    %6046 = vadd.xlane.f32.xlu0 %v6045
    %v6047 = vpop.xlane.xlu0 %6046
    %v6048 = vmul.f32 %v6047, %v6037
    %v6049 = vadd.f32 %v6048, 1e-05
    %v6050 = vrsqrt.pop %v6049
    %v6051 = vmul.f32 %v6039, %v6050
    %v6052 = vld [vmem:[%s6] sm:$0x1]
    %v6054 = vlaneseq
    %v6055 = vshrl.u32 %v6054, 7
    %v6056 = vsub.s32 0, %v6055
    %v6057 = vrot.slane %v6052, %v6056
    %6058 = vrot.lane.b32.xlu0 %v6057, 32
    %v6059 = vpop.permute.xlu0 %6058
    %v6061 = vmul.f32 %v6051, %v6059
    %v6062 = vld [vmem:[%s7] sm:$0x1]
    %v6064 = vlaneseq
    %v6065 = vshrl.u32 %v6064, 7
    %v6066 = vsub.s32 0, %v6065
    %v6067 = vrot.slane %v6062, %v6066
    %6068 = vrot.lane.b32.xlu0 %v6067, 32
    %v6069 = vpop.permute.xlu0 %6068
    %v6071 = vadd.f32 %v6061, %v6069
    %s6072 = sld [smem:[#allocation7]]
    %s6073 = sld [smem:[#allocation7 + $0x1]]
    %s6074 = sld [smem:[#allocation7 + $0x2]]
    %v6075 = vld [vmem:[%s8] sm:$0x1]
    %v6077 = vlaneseq
    %v6078 = vshrl.u32 %v6077, 7
    %v6079 = vsub.s32 0, %v6078
    %v6080 = vrot.slane %v6075, %v6079
    %6081 = vrot.lane.b32.xlu0 %v6080, 32
    %v6082 = vpop.permute.xlu0 %6081
    %v6084 = vmul.f32 %v6071, %v6082
    %6086 = vrot.lane.b32.xlu0 %v6084, 96
    %v6087 = vpop.permute.xlu0 %6086
    %v6089 = vsel %vm6033, %v6087, 0.0
    %6090 = vadd.xlane.f32.xlu0 %v6089
    %v6091 = vpop.xlane.xlu0 %6090
    %v6092 = vstv %s6072
    %v6093 = vadd.f32 %v6091, %v6092
    %v6094 = vstv %s6073
    %v6095 = vmul.f32 %v6093, %v6094
    %v6096 = vstv %s6074
    %v6097 = vadd.f32 %v6095, %v6096
    %vm6098 = vcmask 1024
    %6099 = vst.msk [vmem:[%s10] sm:$0x3] %vm6098, %v6097
    // Predicated region
    $region54: #{residual_model_linear_forward.1} parent=1 // pred_check
      _
    $region55: #{residual_model_linear_forward.1} parent=1 // pred_check_branch
      %6101 = sbr.rel (0) target = $region57
    $region56: #{residual_model_linear_forward.1} parent=1 // pred_region
      _
    $region57: #{residual_model_linear_forward.1} parent=1 // pred_fallthru
      _
    // Predicated region
    $region58: #{residual_model_linear_forward.1} parent=1 // pred_check
      _
    $region59: #{residual_model_linear_forward.1} parent=1 // pred_check_branch
      %6103 = sbr.rel (0) target = $region61
    $region60: #{residual_model_linear_forward.1} parent=1 // pred_region
      _
    $region61: #{residual_model_linear_forward.1} parent=1 // pred_fallthru
      _
    %6104 = vsyncpa [#allocation3], 1
    %6105 = vsyncpa [#allocation6], 1
    %6106 = vsyncpa [#allocation4], 1

</llo_original>
